<compile_context>
chip_gen: v6e
topology: v6e:2x2x1
jax: 0.10.0
libtpu: 0.0.40
codegen_flags: <defaults>
</compile_context>

<pallas_src>
from functools import partial

import jax
import jax.numpy as jnp
from jax.experimental import pallas as pl
from jax.experimental.pallas import tpu as pltpu


def _round_up(n, m):
    return ((n + m - 1) // m) * m


def _vmem_limit_bytes():
    """Per-generation VMEM limit with headroom for compiler scratch."""
    cap = 128 * 1024 * 1024
    try:
        cap = int(pltpu.get_tpu_info().vmem_capacity_bytes)
    except Exception:
        pass
    return max(32 * 1024 * 1024, min(int(cap * 0.85), 110 * 1024 * 1024))


def _pick_row_tile(H, W, K, Cmid_p, batch):
    """Largest divisor of H whose per-step scratch+temps fit ~8 MiB."""
    budget = 8 * 1024 * 1024
    divs = [d for d in range(1, H + 1) if H % d == 0]
    fits = [d for d in divs
            if d * W * K * 2 + 3 * d * W * Cmid_p * 4 <= budget]
    if not fits:
        fits = [1]
    best = max(fits)
    if batch == 1:
        # Prefer >=2 row tiles (pipelining / 2nd TC on v7x) if the MXU M dim
        # (TH*W) stays reasonable.
        two_tile = [d for d in fits if H // d >= 2 and d * W >= 128]
        if two_tile:
            best = max(two_tile)
    return best


def scale_prediction_kernel(xpad_ref, w1_ref, bias_ref, w2_ref, b2_ref,
                            out_ref, xcol_ref):
    """One (batch, row-tile) per grid step.

    xpad_ref : (1, H+2, W+2, Ct)   halo+channel padded NHWC input (bf16)
    w1_ref   : (K, Cmid_p)         3x3 conv weights, im2col layout, BN scale
                                   pre-folded (bf16)
    bias_ref : (1, Cmid_p)         folded BN bias (f32)
    w2_ref   : (Cmid_p, Cout_p)    1x1 conv weights (bf16)
    b2_ref   : (1, Cout_p)         1x1 conv bias (f32)
    out_ref  : (1, TH, W, Cout_p)  output row tile (f32)
    xcol_ref : (TH, W, K)          VMEM im2col scratch (bf16)
    """
    TH = out_ref.shape[1]
    W = out_ref.shape[2]
    Cout_p = out_ref.shape[3]
    Ct = xpad_ref.shape[3]
    K = xcol_ref.shape[2]

    h0 = pl.multiple_of(pl.program_id(1) * TH, TH)

    # im2col in the scratch's natural (TH, W, K) layout: taps are stored as-is
    # (no per-tap reshape), (TH, W) is collapsed once at the matmul below.
    for dy in range(3):
        for dx in range(3):
            t = dy * 3 + dx
            xcol_ref[:, :, t * Ct:(t + 1) * Ct] = (
                xpad_ref[0, pl.ds(h0 + dy, TH), dx:dx + W, :])
    if K > 9 * Ct:
        # Zero the K-padding tail (only exists when Cin < 128) so stale VMEM
        # cannot introduce NaN/Inf through the zero weight rows.
        xcol_ref[:, :, 9 * Ct:] = jnp.zeros((TH, W, K - 9 * Ct),
                                            xcol_ref.dtype)

    # 3x3 conv as a single MXU matmul (K-dim = 9*Cin), f32 accumulation.
    acc = jnp.dot(xcol_ref[...].reshape(TH * W, K), w1_ref[...],
                  preferred_element_type=jnp.float32)

    # BN scale already folded into w1 in the wrapper; only bias add remains.
    y = acc + bias_ref[...]
    y = jnp.maximum(y, 0.1 * y)            # LeakyReLU(0.1), f32 on the VPU.

    # 1x1 conv == dense matmul over channels.
    z = jnp.dot(y.astype(w2_ref.dtype), w2_ref[...],
                preferred_element_type=jnp.float32)
    z = z + b2_ref[...]

    out_ref[0, ...] = z.reshape(TH, W, Cout_p).astype(out_ref.dtype)


def scale_prediction_forward(x_nchw, params, n_classes):
    (w1, b1, gamma, beta, run_mean, run_var, w2, b2) = params
    eps = 1e-5

    B, Cin, H, W = x_nchw.shape
    Cmid = w1.shape[0]                       # 2 * in_channels
    Cout = w2.shape[0]                       # (n_classes + 5) * 3
    npred = n_classes + 5

    # Channel / K padding (lane-dense, multiples of 128).  For Cin < 128 pad
    # 9*Cin once instead of per-tap to avoid a Cin_p/Cin traffic blow-up.
    if Cin >= 128:
        Ct = _round_up(Cin, 128)             # per-tap channel stride
        K = 9 * Ct
    else:
        Ct = Cin
        K = _round_up(9 * Cin, 128)
    Cmid_p = _round_up(Cmid, 128)
    Cout_p = _round_up(Cout, 128)

    TH = _pick_row_tile(H, W, K, Cmid_p, B)

    # Fold BN (inference stats).  Scale goes INTO the conv1 weights (in f32,
    # before the bf16 cast); only the bias survives into the kernel.
    s = gamma / jnp.sqrt(run_var + eps)
    bias = jnp.pad((b1 - run_mean) * s + beta,
                   (0, Cmid_p - Cmid)).reshape(1, Cmid_p).astype(jnp.float32)

    # NCHW -> NHWC; one pad pass provides both the 3x3 halo and (if Cin>=128)
    # the channel padding; cast to bf16 to halve HBM->VMEM traffic.
    x_nhwc = jnp.transpose(x_nchw, (0, 2, 3, 1))
    xpad = jnp.pad(x_nhwc,
                   ((0, 0), (1, 1), (1, 1), (0, Ct - Cin))).astype(jnp.bfloat16)

    # Conv1 weights: (O,I,3,3) -> HWIO, scale-fold in f32, pad, im2col layout.
    w1_hwio = jnp.transpose(w1, (2, 3, 1, 0)).astype(jnp.float32)
    w1_hwio = w1_hwio * s[None, None, None, :]
    w1_hwio = jnp.pad(w1_hwio,
                      ((0, 0), (0, 0), (0, Ct - Cin), (0, Cmid_p - Cmid)))
    w1_col = w1_hwio.reshape(9 * Ct, Cmid_p)
    w1_col = jnp.pad(w1_col, ((0, K - 9 * Ct), (0, 0))).astype(jnp.bfloat16)

    # Conv2 (1x1) weights / bias.
    w2_io = jnp.transpose(w2.reshape(Cout, Cmid), (1, 0))
    w2_io = jnp.pad(w2_io,
                    ((0, Cmid_p - Cmid), (0, Cout_p - Cout))).astype(jnp.bfloat16)
    b2_p = jnp.pad(b2, (0, Cout_p - Cout)).reshape(1, Cout_p).astype(jnp.float32)

    # Advisory cost estimate so XLA overlaps the surrounding pad/permute ops.
    flops = 2 * B * H * W * (9 * Cin * Cmid + Cmid * Cout)
    bytes_accessed = (B * (H + 2) * (W + 2) * Ct * 2          # bf16 input
                      + K * Cmid_p * 2 + Cmid_p * Cout_p * 2  # bf16 weights
                      + (Cmid_p + Cout_p) * 4                 # f32 biases
                      + B * H * W * Cout_p * 4)               # f32 output
    cost = pl.CostEstimate(flops=flops, transcendentals=0,
                           bytes_accessed=bytes_accessed)

    grid = (B, H // TH)
    out_nhwc = pl.pallas_call(
        scale_prediction_kernel,
        out_shape=jax.ShapeDtypeStruct((B, H, W, Cout_p), jnp.float32),
        grid_spec=pltpu.PrefetchScalarGridSpec(
            num_scalar_prefetch=0,
            grid=grid,
            in_specs=[
                # Whole (padded) image of one batch element; constant over the
                # row axis so it is fetched once per batch element.
                pl.BlockSpec((1, H + 2, W + 2, Ct), lambda b, r: (b, 0, 0, 0)),
                # Grid-invariant operands: single-buffered (no double-buffer
                # duplication of the big conv1 weights in VMEM).
                pl.BlockSpec((K, Cmid_p), lambda b, r: (0, 0),
                             pipeline_mode=pl.Buffered(1)),
                pl.BlockSpec((1, Cmid_p), lambda b, r: (0, 0),
                             pipeline_mode=pl.Buffered(1)),
                pl.BlockSpec((Cmid_p, Cout_p), lambda b, r: (0, 0),
                             pipeline_mode=pl.Buffered(1)),
                pl.BlockSpec((1, Cout_p), lambda b, r: (0, 0),
                             pipeline_mode=pl.Buffered(1)),
            ],
            out_specs=pl.BlockSpec((1, TH, W, Cout_p),
                                   lambda b, r: (b, r, 0, 0)),
            scratch_shapes=[pltpu.VMEM((TH, W, K), jnp.bfloat16)],
        ),
        compiler_params=pltpu.CompilerParams(
            dimension_semantics=("parallel", "parallel"),
            vmem_limit_bytes=_vmem_limit_bytes()),
        cost_estimate=cost,
    )(xpad, w1_col, bias, w2_io, b2_p)

    # Slice off channel padding, then match PyTorch:
    # view(B, 3, nc+5, H, W).permute(0, 1, 3, 4, 2) == (B, 3, H, W, nc+5).
    out = out_nhwc[..., :Cout].reshape(B, H, W, 3, npred)
    return jnp.transpose(out, (0, 3, 1, 2, 4))


def ref_forward(x_nchw, params, n_classes):
    """Pure-JAX f32 reference of ScalePrediction.forward (inference-mode BN)."""
    (w1, b1, gamma, beta, run_mean, run_var, w2, b2) = params
    eps = 1e-5
    y = jax.lax.conv_general_dilated(
        x_nchw, w1, window_strides=(1, 1), padding=((1, 1), (1, 1)),
        dimension_numbers=("NCHW", "OIHW", "NCHW"))
    y = y + b1[None, :, None, None]
    y = (y - run_mean[None, :, None, None]) / jnp.sqrt(
        run_var + eps)[None, :, None, None]
    y = y * gamma[None, :, None, None] + beta[None, :, None, None]
    y = jnp.where(y > 0, y, 0.1 * y)
    z = jax.lax.conv_general_dilated(
        y, w2, window_strides=(1, 1), padding=((0, 0), (0, 0)),
        dimension_numbers=("NCHW", "OIHW", "NCHW"))
    z = z + b2[None, :, None, None]
    B, _, H, W = x_nchw.shape
    z = z.reshape(B, 3, n_classes + 5, H, W)
    return jnp.transpose(z, (0, 1, 3, 4, 2))


def init_params(key, in_channels, n_classes):
    Cmid = 2 * in_channels
    Cout = (n_classes + 5) * 3
    ks = jax.random.split(key, 8)
    w1 = 0.1 * jax.random.normal(ks[0], (Cmid, in_channels, 3, 3), jnp.float32)
    b1 = 0.1 * jax.random.normal(ks[1], (Cmid,), jnp.float32)
    gamma = jax.random.uniform(ks[2], (Cmid,), jnp.float32, 0.5, 1.5)
    beta = 0.1 * jax.random.normal(ks[3], (Cmid,), jnp.float32)
    run_mean = 0.1 * jax.random.normal(ks[4], (Cmid,), jnp.float32)
    run_var = jax.random.uniform(ks[5], (Cmid,), jnp.float32, 0.5, 1.5)
    w2 = 0.1 * jax.random.normal(ks[6], (Cout, Cmid, 1, 1), jnp.float32)
    b2 = 0.1 * jax.random.normal(ks[7], (Cout,), jnp.float32)
    return (w1, b1, gamma, beta, run_mean, run_var, w2, b2)


if __name__ == "__main__":
    B, Cin, H, W = 2, 4, 16, 16
    n_classes = 2

    key = jax.random.PRNGKey(0)
    k_x, k_p = jax.random.split(key)
    x = jax.random.normal(k_x, (B, Cin, H, W), jnp.float32)
    params = init_params(k_p, Cin, n_classes)

    fwd = jax.jit(partial(scale_prediction_forward, n_classes=n_classes))
    out = jax.block_until_ready(fwd(x, params))

    assert out.shape == (B, 3, H, W, n_classes + 5), out.shape

    # bf16 MXU operands -> loosened tolerance vs. the f32 reference.
    ref = ref_forward(x, params, n_classes)
    max_err = float(jnp.max(jnp.abs(out - ref)))
    assert jnp.allclose(out, ref, atol=2e-2, rtol=2e-2), max_err

    print("KERNEL_OK")
</pallas_src>

<mosaic_0001>
module attributes {stable_mosaic.version = 11 : i64} {
  func.func @scale_prediction_kernel(%arg0: i32, %arg1: i32, %arg2: memref<1x18x18x4xbf16, #tpu.memory_space<vmem>>, %arg3: memref<128x128xbf16, #tpu.memory_space<vmem>>, %arg4: memref<1x128xf32, #tpu.memory_space<vmem>>, %arg5: memref<128x128xbf16, #tpu.memory_space<vmem>>, %arg6: memref<1x128xf32, #tpu.memory_space<vmem>>, %arg7: memref<1x16x16x128xf32, #tpu.memory_space<vmem>>, %arg8: memref<16x16x128xbf16, #tpu.memory_space<vmem>>) attributes {dimension_semantics = [#tpu.dimension_semantics<parallel>, #tpu.dimension_semantics<parallel>], iteration_bounds = array<i64: 2, 1>, scalar_prefetch = 0 : i64, scratch_operands = 1 : i64, tpu.core_type = #tpu.core_type<tc>, window_params = [{transform_indices = @transform_0, window_bounds = array<i64: 1, 18, 18, 4>}, {pipeline_mode = #tpu.pipeline_mode<synchronous>, transform_indices = @transform_1, window_bounds = array<i64: 128, 128>}, {pipeline_mode = #tpu.pipeline_mode<synchronous>, transform_indices = @transform_2, window_bounds = array<i64: 1, 128>}, {pipeline_mode = #tpu.pipeline_mode<synchronous>, transform_indices = @transform_3, window_bounds = array<i64: 128, 128>}, {pipeline_mode = #tpu.pipeline_mode<synchronous>, transform_indices = @transform_4, window_bounds = array<i64: 1, 128>}, {transform_indices = @transform_5, window_bounds = array<i64: 1, 16, 16, 128>}]} {
    %c16_i32 = arith.constant 16 : i32
    %0 = arith.muli %arg1, %c16_i32 : i32
    %1 = tpu.assume_multiple %0, 16 : i32
    %c0_i32 = arith.constant 0 : i32
    %2 = arith.addi %1, %c0_i32 : i32
    %c0 = arith.constant 0 : index
    %3 = arith.index_cast %2 : i32 to index
    %c0_0 = arith.constant 0 : index
    %c0_1 = arith.constant 0 : index
    %4 = vector.load %arg2[%c0, %3, %c0_0, %c0_1] : memref<1x18x18x4xbf16, #tpu.memory_space<vmem>>, vector<1x16x16x4xbf16>
    %5 = vector.shape_cast %4 : vector<1x16x16x4xbf16> to vector<16x16x4xbf16>
    %c0_2 = arith.constant 0 : index
    %c0_3 = arith.constant 0 : index
    %c0_4 = arith.constant 0 : index
    %6 = vector.load %arg8[%c0_2, %c0_3, %c0_4] : memref<16x16x128xbf16, #tpu.memory_space<vmem>>, vector<16x16x4xbf16>
    tpu.vector_store %arg8[%c0_2, %c0_3, %c0_4], %5 {strides = array<i32>} : memref<16x16x128xbf16, #tpu.memory_space<vmem>>, vector<16x16x4xbf16>,
    %c0_i32_5 = arith.constant 0 : i32
    %7 = arith.addi %1, %c0_i32_5 : i32
    %c0_6 = arith.constant 0 : index
    %8 = arith.index_cast %7 : i32 to index
    %c1 = arith.constant 1 : index
    %c0_7 = arith.constant 0 : index
    %9 = vector.load %arg2[%c0_6, %8, %c1, %c0_7] : memref<1x18x18x4xbf16, #tpu.memory_space<vmem>>, vector<1x16x16x4xbf16>
    %10 = vector.shape_cast %9 : vector<1x16x16x4xbf16> to vector<16x16x4xbf16>
    %c0_8 = arith.constant 0 : index
    %c0_9 = arith.constant 0 : index
    %c4 = arith.constant 4 : index
    %11 = vector.load %arg8[%c0_8, %c0_9, %c4] : memref<16x16x128xbf16, #tpu.memory_space<vmem>>, vector<16x16x4xbf16>
    tpu.vector_store %arg8[%c0_8, %c0_9, %c4], %10 {strides = array<i32>} : memref<16x16x128xbf16, #tpu.memory_space<vmem>>, vector<16x16x4xbf16>,
    %c0_i32_10 = arith.constant 0 : i32
    %12 = arith.addi %1, %c0_i32_10 : i32
    %c0_11 = arith.constant 0 : index
    %13 = arith.index_cast %12 : i32 to index
    %c2 = arith.constant 2 : index
    %c0_12 = arith.constant 0 : index
    %14 = vector.load %arg2[%c0_11, %13, %c2, %c0_12] : memref<1x18x18x4xbf16, #tpu.memory_space<vmem>>, vector<1x16x16x4xbf16>
    %15 = vector.shape_cast %14 : vector<1x16x16x4xbf16> to vector<16x16x4xbf16>
    %c0_13 = arith.constant 0 : index
    %c0_14 = arith.constant 0 : index
    %c8 = arith.constant 8 : index
    %16 = vector.load %arg8[%c0_13, %c0_14, %c8] : memref<16x16x128xbf16, #tpu.memory_space<vmem>>, vector<16x16x4xbf16>
    tpu.vector_store %arg8[%c0_13, %c0_14, %c8], %15 {strides = array<i32>} : memref<16x16x128xbf16, #tpu.memory_space<vmem>>, vector<16x16x4xbf16>,
    %c1_i32 = arith.constant 1 : i32
    %17 = arith.addi %1, %c1_i32 : i32
    %c0_15 = arith.constant 0 : index
    %18 = arith.index_cast %17 : i32 to index
    %c0_16 = arith.constant 0 : index
    %c0_17 = arith.constant 0 : index
    %19 = vector.load %arg2[%c0_15, %18, %c0_16, %c0_17] : memref<1x18x18x4xbf16, #tpu.memory_space<vmem>>, vector<1x16x16x4xbf16>
    %20 = vector.shape_cast %19 : vector<1x16x16x4xbf16> to vector<16x16x4xbf16>
    %c0_18 = arith.constant 0 : index
    %c0_19 = arith.constant 0 : index
    %c12 = arith.constant 12 : index
    %21 = vector.load %arg8[%c0_18, %c0_19, %c12] : memref<16x16x128xbf16, #tpu.memory_space<vmem>>, vector<16x16x4xbf16>
    tpu.vector_store %arg8[%c0_18, %c0_19, %c12], %20 {strides = array<i32>} : memref<16x16x128xbf16, #tpu.memory_space<vmem>>, vector<16x16x4xbf16>,
    %c1_i32_20 = arith.constant 1 : i32
    %22 = arith.addi %1, %c1_i32_20 : i32
    %c0_21 = arith.constant 0 : index
    %23 = arith.index_cast %22 : i32 to index
    %c1_22 = arith.constant 1 : index
    %c0_23 = arith.constant 0 : index
    %24 = vector.load %arg2[%c0_21, %23, %c1_22, %c0_23] : memref<1x18x18x4xbf16, #tpu.memory_space<vmem>>, vector<1x16x16x4xbf16>
    %25 = vector.shape_cast %24 : vector<1x16x16x4xbf16> to vector<16x16x4xbf16>
    %c0_24 = arith.constant 0 : index
    %c0_25 = arith.constant 0 : index
    %c16 = arith.constant 16 : index
    %26 = vector.load %arg8[%c0_24, %c0_25, %c16] : memref<16x16x128xbf16, #tpu.memory_space<vmem>>, vector<16x16x4xbf16>
    tpu.vector_store %arg8[%c0_24, %c0_25, %c16], %25 {strides = array<i32>} : memref<16x16x128xbf16, #tpu.memory_space<vmem>>, vector<16x16x4xbf16>,
    %c1_i32_26 = arith.constant 1 : i32
    %27 = arith.addi %1, %c1_i32_26 : i32
    %c0_27 = arith.constant 0 : index
    %28 = arith.index_cast %27 : i32 to index
    %c2_28 = arith.constant 2 : index
    %c0_29 = arith.constant 0 : index
    %29 = vector.load %arg2[%c0_27, %28, %c2_28, %c0_29] : memref<1x18x18x4xbf16, #tpu.memory_space<vmem>>, vector<1x16x16x4xbf16>
    %30 = vector.shape_cast %29 : vector<1x16x16x4xbf16> to vector<16x16x4xbf16>
    %c0_30 = arith.constant 0 : index
    %c0_31 = arith.constant 0 : index
    %c20 = arith.constant 20 : index
    %31 = vector.load %arg8[%c0_30, %c0_31, %c20] : memref<16x16x128xbf16, #tpu.memory_space<vmem>>, vector<16x16x4xbf16>
    tpu.vector_store %arg8[%c0_30, %c0_31, %c20], %30 {strides = array<i32>} : memref<16x16x128xbf16, #tpu.memory_space<vmem>>, vector<16x16x4xbf16>,
    %c2_i32 = arith.constant 2 : i32
    %32 = arith.addi %1, %c2_i32 : i32
    %c0_32 = arith.constant 0 : index
    %33 = arith.index_cast %32 : i32 to index
    %c0_33 = arith.constant 0 : index
    %c0_34 = arith.constant 0 : index
    %34 = vector.load %arg2[%c0_32, %33, %c0_33, %c0_34] : memref<1x18x18x4xbf16, #tpu.memory_space<vmem>>, vector<1x16x16x4xbf16>
    %35 = vector.shape_cast %34 : vector<1x16x16x4xbf16> to vector<16x16x4xbf16>
    %c0_35 = arith.constant 0 : index
    %c0_36 = arith.constant 0 : index
    %c24 = arith.constant 24 : index
    %36 = vector.load %arg8[%c0_35, %c0_36, %c24] : memref<16x16x128xbf16, #tpu.memory_space<vmem>>, vector<16x16x4xbf16>
    tpu.vector_store %arg8[%c0_35, %c0_36, %c24], %35 {strides = array<i32>} : memref<16x16x128xbf16, #tpu.memory_space<vmem>>, vector<16x16x4xbf16>,
    %c2_i32_37 = arith.constant 2 : i32
    %37 = arith.addi %1, %c2_i32_37 : i32
    %c0_38 = arith.constant 0 : index
    %38 = arith.index_cast %37 : i32 to index
    %c1_39 = arith.constant 1 : index
    %c0_40 = arith.constant 0 : index
    %39 = vector.load %arg2[%c0_38, %38, %c1_39, %c0_40] : memref<1x18x18x4xbf16, #tpu.memory_space<vmem>>, vector<1x16x16x4xbf16>
    %40 = vector.shape_cast %39 : vector<1x16x16x4xbf16> to vector<16x16x4xbf16>
    %c0_41 = arith.constant 0 : index
    %c0_42 = arith.constant 0 : index
    %c28 = arith.constant 28 : index
    %41 = vector.load %arg8[%c0_41, %c0_42, %c28] : memref<16x16x128xbf16, #tpu.memory_space<vmem>>, vector<16x16x4xbf16>
    tpu.vector_store %arg8[%c0_41, %c0_42, %c28], %40 {strides = array<i32>} : memref<16x16x128xbf16, #tpu.memory_space<vmem>>, vector<16x16x4xbf16>,
    %c2_i32_43 = arith.constant 2 : i32
    %42 = arith.addi %1, %c2_i32_43 : i32
    %c0_44 = arith.constant 0 : index
    %43 = arith.index_cast %42 : i32 to index
    %c2_45 = arith.constant 2 : index
    %c0_46 = arith.constant 0 : index
    %44 = vector.load %arg2[%c0_44, %43, %c2_45, %c0_46] : memref<1x18x18x4xbf16, #tpu.memory_space<vmem>>, vector<1x16x16x4xbf16>
    %45 = vector.shape_cast %44 : vector<1x16x16x4xbf16> to vector<16x16x4xbf16>
    %c0_47 = arith.constant 0 : index
    %c0_48 = arith.constant 0 : index
    %c32 = arith.constant 32 : index
    %46 = vector.load %arg8[%c0_47, %c0_48, %c32] : memref<16x16x128xbf16, #tpu.memory_space<vmem>>, vector<16x16x4xbf16>
    tpu.vector_store %arg8[%c0_47, %c0_48, %c32], %45 {strides = array<i32>} : memref<16x16x128xbf16, #tpu.memory_space<vmem>>, vector<16x16x4xbf16>,
    %cst = arith.constant 0.000000e+00 : bf16
    %47 = vector.broadcast %cst : bf16 to vector<16x16x92xbf16>
    %c0_49 = arith.constant 0 : index
    %c0_50 = arith.constant 0 : index
    %c36 = arith.constant 36 : index
    %48 = vector.load %arg8[%c0_49, %c0_50, %c36] : memref<16x16x128xbf16, #tpu.memory_space<vmem>>, vector<16x16x92xbf16>
    tpu.vector_store %arg8[%c0_49, %c0_50, %c36], %47 {strides = array<i32>} : memref<16x16x128xbf16, #tpu.memory_space<vmem>>, vector<16x16x92xbf16>,
    %c0_51 = arith.constant 0 : index
    %c0_52 = arith.constant 0 : index
    %c0_53 = arith.constant 0 : index
    %49 = vector.load %arg8[%c0_51, %c0_52, %c0_53] : memref<16x16x128xbf16, #tpu.memory_space<vmem>>, vector<16x16x128xbf16>
    %50 = vector.shape_cast %49 : vector<16x16x128xbf16> to vector<256x128xbf16>
    %c0_54 = arith.constant 0 : index
    %c0_55 = arith.constant 0 : index
    %51 = vector.load %arg3[%c0_54, %c0_55] : memref<128x128xbf16, #tpu.memory_space<vmem>>, vector<128x128xbf16>
    %cst_56 = arith.constant dense<0.000000e+00> : vector<256x128xf32>
    %52 = tpu.matmul %50, %51, %cst_56 {dimension_numbers = #tpu.dot_dimension_numbers<[1], [0], [0], [1], [0, 0, 1, 1], [], []>} : vector<256x128xbf16>, vector<128x128xbf16>, vector<256x128xf32> -> vector<256x128xf32>
    %c0_57 = arith.constant 0 : index
    %c0_58 = arith.constant 0 : index
    %53 = vector.load %arg4[%c0_57, %c0_58] : memref<1x128xf32, #tpu.memory_space<vmem>>, vector<1x128xf32>
    %54 = vector.broadcast %53 : vector<1x128xf32> to vector<256x128xf32>
    %55 = arith.addf %52, %54 : vector<256x128xf32>
    %cst_59 = arith.constant 1.000000e-01 : f32
    %56 = vector.broadcast %cst_59 : f32 to vector<256x128xf32>
    %57 = arith.mulf %56, %55 : vector<256x128xf32>
    %58 = arith.maximumf %55, %57 : vector<256x128xf32>
    %59 = arith.truncf %58 : vector<256x128xf32> to vector<256x128xbf16>
    %c0_60 = arith.constant 0 : index
    %c0_61 = arith.constant 0 : index
    %60 = vector.load %arg5[%c0_60, %c0_61] : memref<128x128xbf16, #tpu.memory_space<vmem>>, vector<128x128xbf16>
    %cst_62 = arith.constant dense<0.000000e+00> : vector<256x128xf32>
    %61 = tpu.matmul %59, %60, %cst_62 {dimension_numbers = #tpu.dot_dimension_numbers<[1], [0], [0], [1], [0, 0, 1, 1], [], []>} : vector<256x128xbf16>, vector<128x128xbf16>, vector<256x128xf32> -> vector<256x128xf32>
    %c0_63 = arith.constant 0 : index
    %c0_64 = arith.constant 0 : index
    %62 = vector.load %arg6[%c0_63, %c0_64] : memref<1x128xf32, #tpu.memory_space<vmem>>, vector<1x128xf32>
    %63 = vector.broadcast %62 : vector<1x128xf32> to vector<256x128xf32>
    %64 = arith.addf %61, %63 : vector<256x128xf32>
    %65 = vector.shape_cast %64 : vector<256x128xf32> to vector<16x16x128xf32>
    %c0_65 = arith.constant 0 : index
    %c0_66 = arith.constant 0 : index
    %c0_67 = arith.constant 0 : index
    %c0_68 = arith.constant 0 : index
    %66 = vector.load %arg7[%c0_65, %c0_66, %c0_67, %c0_68] : memref<1x16x16x128xf32, #tpu.memory_space<vmem>>, vector<1x16x16x128xf32>
    %67 = vector.shape_cast %66 : vector<1x16x16x128xf32> to vector<16x16x128xf32>
    %68 = vector.shape_cast %65 : vector<16x16x128xf32> to vector<1x16x16x128xf32>
    tpu.vector_store %arg7[%c0_65, %c0_66, %c0_67, %c0_68], %68 {strides = array<i32>} : memref<1x16x16x128xf32, #tpu.memory_space<vmem>>, vector<1x16x16x128xf32>,
    return
  }
  func.func @transform_0(%arg0: i32, %arg1: i32) -> (i32, i32, i32, i32) {
    %c0_i32 = arith.constant 0 : i32
    %c0_i32_0 = arith.constant 0 : i32
    %c0_i32_1 = arith.constant 0 : i32
    %c0_i32_2 = arith.constant 0 : i32
    return %arg0, %c0_i32, %c0_i32_0, %c0_i32_1 : i32, i32, i32, i32
  }
  func.func @transform_1(%arg0: i32, %arg1: i32) -> (i32, i32) {
    %c0_i32 = arith.constant 0 : i32
    %c0_i32_0 = arith.constant 0 : i32
    %c0_i32_1 = arith.constant 0 : i32
    return %c0_i32, %c0_i32_0 : i32, i32
  }
  func.func @transform_2(%arg0: i32, %arg1: i32) -> (i32, i32) {
    %c0_i32 = arith.constant 0 : i32
    %c0_i32_0 = arith.constant 0 : i32
    %c0_i32_1 = arith.constant 0 : i32
    return %c0_i32, %c0_i32_0 : i32, i32
  }
  func.func @transform_3(%arg0: i32, %arg1: i32) -> (i32, i32) {
    %c0_i32 = arith.constant 0 : i32
    %c0_i32_0 = arith.constant 0 : i32
    %c0_i32_1 = arith.constant 0 : i32
    return %c0_i32, %c0_i32_0 : i32, i32
  }
  func.func @transform_4(%arg0: i32, %arg1: i32) -> (i32, i32) {
    %c0_i32 = arith.constant 0 : i32
    %c0_i32_0 = arith.constant 0 : i32
    %c0_i32_1 = arith.constant 0 : i32
    return %c0_i32, %c0_i32_0 : i32, i32
  }
  func.func @transform_5(%arg0: i32, %arg1: i32) -> (i32, i32, i32, i32) {
    %c0_i32 = arith.constant 0 : i32
    %c0_i32_0 = arith.constant 0 : i32
    %c0_i32_1 = arith.constant 0 : i32
    return %arg0, %arg1, %c0_i32, %c0_i32_0 : i32, i32, i32, i32
  }
}

</mosaic_0001>

<llo_original>
// kernel: scale_prediction_forward.1
$region0: #{scale_prediction_forward.1}
  #allocation0 [shape = 'u32[]', space=smem, size = 0x4, offset = 0x4, fixed_abs, tag = 'smem constant byte address 0x4 - core index']
  #allocation1 [shape = 'u32[144,128]{1,0:T(1,128)}', space=vmem, size = 0x12000, scoped, tag = 'internal scratch']
  #allocation2 [shape = 'bf16[16,16,128]{2,1,0:T(8,128)(2,1)}', space=vmem, size = 0x10000, scoped, tag = 'scratch operand']
  %s0 = inlined_call_operand.vmem [shape: bf16[2,18,18,4], index: 0, kind: input, shape index: {}]
  %s1 = inlined_call_operand.vmem [shape: bf16[128,128], index: 1, kind: input, shape index: {}]
  %s2 = inlined_call_operand.vmem [shape: f32[1,128], index: 2, kind: input, shape index: {}]
  %s3 = inlined_call_operand.vmem [shape: bf16[128,128], index: 3, kind: input, shape index: {}]
  %s4 = inlined_call_operand.vmem [shape: f32[1,128], index: 4, kind: input, shape index: {}]
  %s5 = inlined_call_operand.vmem [shape: f32[2,16,16,128], index: 5, kind: output, shape index: {}]
  %s6 = sld [smem:[#allocation0]]
  $region53: #{scale_prediction_forward.1} parent=0
    _
  %s8 = ssub.s32 1, %s6
  %s9 = scalar_select 0, %s8, %s6
  loop: start=0, step=1, limit=4
  $region2: #{scale_prediction_forward.1} parent=0 // loop_pre_header
    _
  $region3: #{scale_prediction_forward.1} parent=0 // loop_header
    %s11 = sphi 0, %s15
    %p12 = scmp.ge.s32.totalorder %s11, 4
    %s18 = sphi 0, %s30
    %s19 = sphi 0, %s26
    %s20 = sphi 0, %s18
    %s21 = sphi 0, %s19
    %s22 = sphi 0, %s20
    %s23 = sphi 0, %s21
    %s33 = sphi 0, %s35
    %s36 = sphi 0, %s33
    %s37 = sphi 0, %s36
    %s53 = sphi 0, %s37
    %s57 = sphi 0, %s57
    %s59 = sphi 0, %s57
    %s60 = sphi 0, %s59
    %s74 = sphi 0, %s60
    %s78 = sphi 0, %s78
    %s80 = sphi 0, %s78
    %s81 = sphi 0, %s80
    %s95 = sphi 0, %s81
    %s99 = sphi 0, %s99
    %s101 = sphi 0, %s99
    %s102 = sphi 0, %s101
    %s116 = sphi 0, %s102
    %s120 = sphi 0, %s120
    %s122 = sphi 0, %s120
    %s123 = sphi 0, %s122
    %s137 = sphi 0, %s123
    %s145 = sphi 0, %s147
    %s148 = sphi 0, %s145
    %s149 = sphi 0, %s148
    %s165 = sphi 0, %s149
  $region4: #{scale_prediction_forward.1} parent=0 // loop_header_branch
    %14 = sbr.rel (%p12) target = $region8
  $region5: #{scale_prediction_forward.1} parent=0 // loop_body
    %s16 = ssub.s32 %s11, 1
    %s17 = ssub.s32 %s11, 2
    %s24 = sadd.s32 1, %s19
    %p25 = scmp.ge.s32.totalorder %s24, 1
    %s26 = scalar_select %p25, 0, %s24
    %s27 = sadd.s32 1, %s18
    %s28 = scalar_select %p25, %s27, %s18
    %p29 = scmp.ge.s32.totalorder %s28, 2
    %s30 = scalar_select %p29, 0, %s28
    %s31 = ssub.s32 %s18, %s30
    %p32 = scmp.eq.s32.totalorder %s31, 0
    %s34 = sadd.s32 %s33, 1
    %s35 = scalar_select %p32, %s33, %s34
    %p38 = pneg %p32
    %p39 = scmp.eq.s32.totalorder %s11, 1
    %p40 = por %p38, %p39
    %p41 = scmp.ne.s32.totalorder %s33, %s36
    %p42 = scmp.eq.s32.totalorder %s11, 0
    %p43 = por %p41, %p42
    %p44 = scmp.ne.s32.totalorder %s33, %s36
    %p45 = scmp.eq.s32.totalorder %s16, 1
    %p46 = por %p44, %p45
    %p47 = scmp.ne.s32.totalorder %s36, %s37
    %p48 = scmp.eq.s32.totalorder %s16, 0
    %p49 = por %p47, %p48
    %p50 = scmp.ne.s32.totalorder %s36, %s37
    %p51 = scmp.eq.s32.totalorder %s17, 1
    %p52 = por %p50, %p51
    %p54 = scmp.ne.s32.totalorder %s37, %s53
    %p55 = scmp.eq.s32.totalorder %s17, 0
    %p56 = por %p54, %p55
    %s58 = sadd.s32 %s57, 1
    %p61 = scmp.eq.s32.totalorder %s11, 1
    %p62 = scmp.ne.s32.totalorder %s57, %s59
    %p63 = scmp.eq.s32.totalorder %s11, 0
    %p64 = por %p62, %p63
    %p65 = scmp.ne.s32.totalorder %s57, %s59
    %p66 = scmp.eq.s32.totalorder %s16, 1
    %p67 = por %p65, %p66
    %p68 = scmp.ne.s32.totalorder %s59, %s60
    %p69 = scmp.eq.s32.totalorder %s16, 0
    %p70 = por %p68, %p69
    %p71 = scmp.ne.s32.totalorder %s59, %s60
    %p72 = scmp.eq.s32.totalorder %s17, 1
    %p73 = por %p71, %p72
    %p75 = scmp.ne.s32.totalorder %s60, %s74
    %p76 = scmp.eq.s32.totalorder %s17, 0
    %p77 = por %p75, %p76
    %s79 = sadd.s32 %s78, 1
    %p82 = scmp.eq.s32.totalorder %s11, 1
    %p83 = scmp.ne.s32.totalorder %s78, %s80
    %p84 = scmp.eq.s32.totalorder %s11, 0
    %p85 = por %p83, %p84
    %p86 = scmp.ne.s32.totalorder %s78, %s80
    %p87 = scmp.eq.s32.totalorder %s16, 1
    %p88 = por %p86, %p87
    %p89 = scmp.ne.s32.totalorder %s80, %s81
    %p90 = scmp.eq.s32.totalorder %s16, 0
    %p91 = por %p89, %p90
    %p92 = scmp.ne.s32.totalorder %s80, %s81
    %p93 = scmp.eq.s32.totalorder %s17, 1
    %p94 = por %p92, %p93
    %p96 = scmp.ne.s32.totalorder %s81, %s95
    %p97 = scmp.eq.s32.totalorder %s17, 0
    %p98 = por %p96, %p97
    %s100 = sadd.s32 %s99, 1
    %p103 = scmp.eq.s32.totalorder %s11, 1
    %p104 = scmp.ne.s32.totalorder %s99, %s101
    %p105 = scmp.eq.s32.totalorder %s11, 0
    %p106 = por %p104, %p105
    %p107 = scmp.ne.s32.totalorder %s99, %s101
    %p108 = scmp.eq.s32.totalorder %s16, 1
    %p109 = por %p107, %p108
    %p110 = scmp.ne.s32.totalorder %s101, %s102
    %p111 = scmp.eq.s32.totalorder %s16, 0
    %p112 = por %p110, %p111
    %p113 = scmp.ne.s32.totalorder %s101, %s102
    %p114 = scmp.eq.s32.totalorder %s17, 1
    %p115 = por %p113, %p114
    %p117 = scmp.ne.s32.totalorder %s102, %s116
    %p118 = scmp.eq.s32.totalorder %s17, 0
    %p119 = por %p117, %p118
    %s121 = sadd.s32 %s120, 1
    %p124 = scmp.eq.s32.totalorder %s11, 1
    %p125 = scmp.ne.s32.totalorder %s120, %s122
    %p126 = scmp.eq.s32.totalorder %s11, 0
    %p127 = por %p125, %p126
    %p128 = scmp.ne.s32.totalorder %s120, %s122
    %p129 = scmp.eq.s32.totalorder %s16, 1
    %p130 = por %p128, %p129
    %p131 = scmp.ne.s32.totalorder %s122, %s123
    %p132 = scmp.eq.s32.totalorder %s16, 0
    %p133 = por %p131, %p132
    %p134 = scmp.ne.s32.totalorder %s122, %s123
    %p135 = scmp.eq.s32.totalorder %s17, 1
    %p136 = por %p134, %p135
    %p138 = scmp.ne.s32.totalorder %s123, %s137
    %p139 = scmp.eq.s32.totalorder %s17, 0
    %p140 = por %p138, %p139
    %s141 = ssub.s32 %s18, %s30
    %s142 = ssub.s32 %s19, %s26
    %s143 = sor.u32 %s141, %s142
    %p144 = scmp.eq.s32.totalorder %s143, 0
    %s146 = sadd.s32 %s145, 1
    %s147 = scalar_select %p144, %s145, %s146
    %p150 = pneg %p144
    %p151 = scmp.eq.s32.totalorder %s11, 1
    %p152 = por %p150, %p151
    %p153 = scmp.ne.s32.totalorder %s145, %s148
    %p154 = scmp.eq.s32.totalorder %s11, 0
    %p155 = por %p153, %p154
    %p156 = scmp.ne.s32.totalorder %s145, %s148
    %p157 = scmp.eq.s32.totalorder %s16, 1
    %p158 = por %p156, %p157
    %p159 = scmp.ne.s32.totalorder %s148, %s149
    %p160 = scmp.eq.s32.totalorder %s16, 0
    %p161 = por %p159, %p160
    %p162 = scmp.ne.s32.totalorder %s148, %s149
    %p163 = scmp.eq.s32.totalorder %s17, 1
    %p164 = por %p162, %p163
    %p166 = scmp.ne.s32.totalorder %s149, %s165
    %p167 = scmp.eq.s32.totalorder %s17, 0
    %p168 = por %p166, %p167
    %p169 = scmp.le.s32.totalorder 1, %s11
    %p170 = scmp.lt.s32.totalorder %s11, 3
    %p171 = pnand %p169, %p170
    %p172 = pneg %p171
    // Predicated region
    $region9: #{scale_prediction_forward.1} parent=5 // pred_check
      _
    $region10: #{scale_prediction_forward.1} parent=5 // pred_check_branch
      %174 = sbr.rel (%p171) target = $region12
    $region11: #{scale_prediction_forward.1} parent=5 // pred_region
      %s175 = ssub.s32 %s11, 1
      // Predicated region
      $region13: #{scale_prediction_forward.1} parent=11 // pred_check
        %p176 = pneg %p70
      $region14: #{scale_prediction_forward.1} parent=11 // pred_check_branch
        %178 = sbr.rel (%p176) target = $region16
      $region15: #{scale_prediction_forward.1} parent=11 // pred_region
        _
      $region16: #{scale_prediction_forward.1} parent=11 // pred_fallthru
        _
      // Predicated region
      $region17: #{scale_prediction_forward.1} parent=11 // pred_check
        %p179 = pneg %p91
      $region18: #{scale_prediction_forward.1} parent=11 // pred_check_branch
        %181 = sbr.rel (%p179) target = $region20
      $region19: #{scale_prediction_forward.1} parent=11 // pred_region
        _
      $region20: #{scale_prediction_forward.1} parent=11 // pred_fallthru
        _
      // Predicated region
      $region21: #{scale_prediction_forward.1} parent=11 // pred_check
        %p182 = pneg %p112
      $region22: #{scale_prediction_forward.1} parent=11 // pred_check_branch
        %184 = sbr.rel (%p182) target = $region24
      $region23: #{scale_prediction_forward.1} parent=11 // pred_region
        _
      $region24: #{scale_prediction_forward.1} parent=11 // pred_fallthru
        _
      // Predicated region
      $region25: #{scale_prediction_forward.1} parent=11 // pred_check
        %p185 = pneg %p133
      $region26: #{scale_prediction_forward.1} parent=11 // pred_check_branch
        %187 = sbr.rel (%p185) target = $region28
      $region27: #{scale_prediction_forward.1} parent=11 // pred_region
        _
      $region28: #{scale_prediction_forward.1} parent=11 // pred_fallthru
        _
    $region12: #{scale_prediction_forward.1} parent=5 // pred_fallthru
      _
    %p188 = scmp.lt.s32.totalorder %s11, 2
    // Predicated region
    $region29: #{scale_prediction_forward.1} parent=5 // pred_check
      %p189 = pneg %p188
    $region30: #{scale_prediction_forward.1} parent=5 // pred_check_branch
      %191 = sbr.rel (%p189) target = $region32
    $region31: #{scale_prediction_forward.1} parent=5 // pred_region
      // Predicated region
      $region33: #{scale_prediction_forward.1} parent=31 // pred_check
        %p192 = pneg %p43
      $region34: #{scale_prediction_forward.1} parent=31 // pred_check_branch
        %194 = sbr.rel (%p192) target = $region36
      $region35: #{scale_prediction_forward.1} parent=31 // pred_region
        %p195 = scmp.lt.s32.totalorder %s18, 1
        %s196 = scalar_select %p195, %s18, 1
        %s197 = smul.addr %s196, 54
        %s198 = smul.addr %s197, 4
        %s199 = scalar_lea.vmem %s0, %s198
      $region36: #{scale_prediction_forward.1} parent=31 // pred_fallthru
        _
    $region32: #{scale_prediction_forward.1} parent=5 // pred_fallthru
      _
    %p200 = scmp.le.s32.totalorder 1, %s11
    %p201 = scmp.lt.s32.totalorder %s11, 3
    %p202 = pnand %p200, %p201
    %p203 = pneg %p202
    // Predicated region
    $region37: #{scale_prediction_forward.1} parent=5 // pred_check
      _
    $region38: #{scale_prediction_forward.1} parent=5 // pred_check_branch
      %205 = sbr.rel (%p202) target = $region40
    $region39: #{scale_prediction_forward.1} parent=5 // pred_region
      %s206 = ssub.s32 %s11, 1
      %p207 = scmp.lt.s32.totalorder %s20, 1
      %s208 = scalar_select %p207, %s20, 1
      %s209 = smul.addr %s208, 54
      %s210 = smul.addr %s209, 4
      %s211 = scalar_lea.vmem %s0, %s210
      %p212 = pneg %p49
      %p213 = pneg %p46
      %p214 = pneg %p70
      %p215 = pneg %p67
      %p216 = pneg %p91
      %p217 = pneg %p88
      %p218 = pneg %p112
      %p219 = pneg %p109
      %p220 = pneg %p133
      %p221 = pneg %p130
      %p222 = pneg %p161
      %p223 = pneg %p158
      %s224 = smul.u32 16, %s21
      %p225 = scmp.lt.s32.totalorder %s20, 1
      %s226 = scalar_select %p225, %s20, 1
      %p227 = scmp.lt.s32.totalorder %s224, 15
      %s228 = scalar_select %p227, %s224, 15
      %s229 = smul.addr %s228, 2
      %s230 = smul.addr %s226, 32
      %s231 = sadd.s32 %s229, %s230
      %s232 = smul.addr %s231, 8
      %s233 = scalar_lea.vmem %s5, %s232
      %p234 = scmp.lt.s32.totalorder %s20, 1
      %s235 = scalar_select %p234, %s20, 1
      %s236 = smul.addr %s235, 54
      %s237 = smul.addr %s236, 4
      %s238 = scalar_lea.vmem %s0, %s237
      %s239 = smul.u32 16, %s21
      %p240 = scmp.lt.s32.totalorder %s20, 1
      %s241 = scalar_select %p240, %s20, 1
      %p242 = scmp.lt.s32.totalorder %s239, 15
      %s243 = scalar_select %p242, %s239, 15
      %s244 = smul.addr %s243, 2
      %s245 = smul.addr %s241, 32
      %s246 = sadd.s32 %s244, %s245
      %s247 = smul.addr %s246, 8
      %s248 = scalar_lea.vmem %s5, %s247
      %s249 = smul.u32 16, %s21
      %s251 = smul.u32 %s21, 16
      %s252 = smul.u32 %s251, 3
      %s253 = smul.addr %s252, 4
      %s254 = scalar_lea.vmem %s238, %s253
      %v255 = vld [vmem:[%s254] sm:$0xf]
      %v256 = vld [vmem:[%s254 + $0x4] sm:$0xf]
      %v257 = vld [vmem:[%s254 + $0xc] sm:$0xf]
      %v258 = vld [vmem:[%s254 + $0x10] sm:$0xf]
      %v259 = vld [vmem:[%s254 + $0x18] sm:$0xf]
      %v260 = vld [vmem:[%s254 + $0x1c] sm:$0xf]
      %v261 = vld [vmem:[%s254 + $0x24] sm:$0xf]
      %v262 = vld [vmem:[%s254 + $0x28] sm:$0xf]
      %v263 = vld [vmem:[%s254 + $0x30] sm:$0xf]
      %v264 = vld [vmem:[%s254 + $0x34] sm:$0xf]
      %v265 = vld [vmem:[%s254 + $0x3c] sm:$0xf]
      %v266 = vld [vmem:[%s254 + $0x40] sm:$0xf]
      %v267 = vld [vmem:[%s254 + $0x48] sm:$0xf]
      %v268 = vld [vmem:[%s254 + $0x4c] sm:$0xf]
      %v269 = vld [vmem:[%s254 + $0x54] sm:$0xf]
      %v270 = vld [vmem:[%s254 + $0x58] sm:$0xf]
      %v271 = vld [vmem:[%s254 + $0x60] sm:$0xf]
      %v272 = vld [vmem:[%s254 + $0x64] sm:$0xf]
      %v273 = vld [vmem:[%s254 + $0x6c] sm:$0xf]
      %v274 = vld [vmem:[%s254 + $0x70] sm:$0xf]
      %v275 = vld [vmem:[%s254 + $0x78] sm:$0xf]
      %v276 = vld [vmem:[%s254 + $0x7c] sm:$0xf]
      %v277 = vld [vmem:[%s254 + $0x84] sm:$0xf]
      %v278 = vld [vmem:[%s254 + $0x88] sm:$0xf]
      %v279 = vld [vmem:[%s254 + $0x90] sm:$0xf]
      %v280 = vld [vmem:[%s254 + $0x94] sm:$0xf]
      %v281 = vld [vmem:[%s254 + $0x9c] sm:$0xf]
      %v282 = vld [vmem:[%s254 + $0xa0] sm:$0xf]
      %v283 = vld [vmem:[%s254 + $0xa8] sm:$0xf]
      %v284 = vld [vmem:[%s254 + $0xac] sm:$0xf]
      %v285 = vld [vmem:[%s254 + $0xb4] sm:$0xf]
      %v286 = vld [vmem:[%s254 + $0xb8] sm:$0xf]
      %vm287 = vcmask 27648
      %288 = vst.msk [vmem:[#allocation2] sm:$0xf] %vm287, %v255
      %289 = vst.msk [vmem:[#allocation2 + $0x4] sm:$0xf] %vm287, %v256
      %290 = vst.msk [vmem:[#allocation2 + $0x8] sm:$0xf] %vm287, %v257
      %291 = vst.msk [vmem:[#allocation2 + $0xc] sm:$0xf] %vm287, %v258
      %292 = vst.msk [vmem:[#allocation2 + $0x10] sm:$0xf] %vm287, %v259
      %293 = vst.msk [vmem:[#allocation2 + $0x14] sm:$0xf] %vm287, %v260
      %294 = vst.msk [vmem:[#allocation2 + $0x18] sm:$0xf] %vm287, %v261
      %295 = vst.msk [vmem:[#allocation2 + $0x1c] sm:$0xf] %vm287, %v262
      %296 = vst.msk [vmem:[#allocation2 + $0x20] sm:$0xf] %vm287, %v263
      %297 = vst.msk [vmem:[#allocation2 + $0x24] sm:$0xf] %vm287, %v264
      %298 = vst.msk [vmem:[#allocation2 + $0x28] sm:$0xf] %vm287, %v265
      %299 = vst.msk [vmem:[#allocation2 + $0x2c] sm:$0xf] %vm287, %v266
      %300 = vst.msk [vmem:[#allocation2 + $0x30] sm:$0xf] %vm287, %v267
      %301 = vst.msk [vmem:[#allocation2 + $0x34] sm:$0xf] %vm287, %v268
      %302 = vst.msk [vmem:[#allocation2 + $0x38] sm:$0xf] %vm287, %v269
      %303 = vst.msk [vmem:[#allocation2 + $0x3c] sm:$0xf] %vm287, %v270
      %304 = vst.msk [vmem:[#allocation2 + $0x40] sm:$0xf] %vm287, %v271
      %305 = vst.msk [vmem:[#allocation2 + $0x44] sm:$0xf] %vm287, %v272
      %306 = vst.msk [vmem:[#allocation2 + $0x48] sm:$0xf] %vm287, %v273
      %307 = vst.msk [vmem:[#allocation2 + $0x4c] sm:$0xf] %vm287, %v274
      %308 = vst.msk [vmem:[#allocation2 + $0x50] sm:$0xf] %vm287, %v275
      %309 = vst.msk [vmem:[#allocation2 + $0x54] sm:$0xf] %vm287, %v276
      %310 = vst.msk [vmem:[#allocation2 + $0x58] sm:$0xf] %vm287, %v277
      %311 = vst.msk [vmem:[#allocation2 + $0x5c] sm:$0xf] %vm287, %v278
      %312 = vst.msk [vmem:[#allocation2 + $0x60] sm:$0xf] %vm287, %v279
      %313 = vst.msk [vmem:[#allocation2 + $0x64] sm:$0xf] %vm287, %v280
      %314 = vst.msk [vmem:[#allocation2 + $0x68] sm:$0xf] %vm287, %v281
      %315 = vst.msk [vmem:[#allocation2 + $0x6c] sm:$0xf] %vm287, %v282
      %316 = vst.msk [vmem:[#allocation2 + $0x70] sm:$0xf] %vm287, %v283
      %317 = vst.msk [vmem:[#allocation2 + $0x74] sm:$0xf] %vm287, %v284
      %318 = vst.msk [vmem:[#allocation2 + $0x78] sm:$0xf] %vm287, %v285
      %319 = vst.msk [vmem:[#allocation2 + $0x7c] sm:$0xf] %vm287, %v286
      %v320 = vld [vmem:[%s254] sm:$0xf]
      %v321 = vld [vmem:[%s254 + $0x4] sm:$0xf]
      %v322 = vld [vmem:[%s254 + $0x8] sm:$0x1]
      %v323 = vld [vmem:[%s254 + $0xc] sm:$0xf]
      %v324 = vld [vmem:[%s254 + $0x10] sm:$0xf]
      %v325 = vld [vmem:[%s254 + $0x14] sm:$0x1]
      %v326 = vld [vmem:[%s254 + $0x18] sm:$0xf]
      %v327 = vld [vmem:[%s254 + $0x1c] sm:$0xf]
      %v328 = vld [vmem:[%s254 + $0x20] sm:$0x1]
      %v329 = vld [vmem:[%s254 + $0x24] sm:$0xf]
      %v330 = vld [vmem:[%s254 + $0x28] sm:$0xf]
      %v331 = vld [vmem:[%s254 + $0x2c] sm:$0x1]
      %v332 = vld [vmem:[%s254 + $0x30] sm:$0xf]
      %v333 = vld [vmem:[%s254 + $0x34] sm:$0xf]
      %v334 = vld [vmem:[%s254 + $0x38] sm:$0x1]
      %v335 = vld [vmem:[%s254 + $0x3c] sm:$0xf]
      %v336 = vld [vmem:[%s254 + $0x40] sm:$0xf]
      %v337 = vld [vmem:[%s254 + $0x44] sm:$0x1]
      %v338 = vld [vmem:[%s254 + $0x48] sm:$0xf]
      %v339 = vld [vmem:[%s254 + $0x4c] sm:$0xf]
      %v340 = vld [vmem:[%s254 + $0x50] sm:$0x1]
      %v341 = vld [vmem:[%s254 + $0x54] sm:$0xf]
      %v342 = vld [vmem:[%s254 + $0x58] sm:$0xf]
      %v343 = vld [vmem:[%s254 + $0x5c] sm:$0x1]
      %v344 = vld [vmem:[%s254 + $0x60] sm:$0xf]
      %v345 = vld [vmem:[%s254 + $0x64] sm:$0xf]
      %v346 = vld [vmem:[%s254 + $0x68] sm:$0x1]
      %v347 = vld [vmem:[%s254 + $0x6c] sm:$0xf]
      %v348 = vld [vmem:[%s254 + $0x70] sm:$0xf]
      %v349 = vld [vmem:[%s254 + $0x74] sm:$0x1]
      %v350 = vld [vmem:[%s254 + $0x78] sm:$0xf]
      %v351 = vld [vmem:[%s254 + $0x7c] sm:$0xf]
      %v352 = vld [vmem:[%s254 + $0x80] sm:$0x1]
      %v353 = vld [vmem:[%s254 + $0x84] sm:$0xf]
      %v354 = vld [vmem:[%s254 + $0x88] sm:$0xf]
      %v355 = vld [vmem:[%s254 + $0x8c] sm:$0x1]
      %v356 = vld [vmem:[%s254 + $0x90] sm:$0xf]
      %v357 = vld [vmem:[%s254 + $0x94] sm:$0xf]
      %v358 = vld [vmem:[%s254 + $0x98] sm:$0x1]
      %v359 = vld [vmem:[%s254 + $0x9c] sm:$0xf]
      %v360 = vld [vmem:[%s254 + $0xa0] sm:$0xf]
      %v361 = vld [vmem:[%s254 + $0xa4] sm:$0x1]
      %v362 = vld [vmem:[%s254 + $0xa8] sm:$0xf]
      %v363 = vld [vmem:[%s254 + $0xac] sm:$0xf]
      %v364 = vld [vmem:[%s254 + $0xb0] sm:$0x1]
      %v365 = vld [vmem:[%s254 + $0xb4] sm:$0xf]
      %v366 = vld [vmem:[%s254 + $0xb8] sm:$0xf]
      %v367 = vld [vmem:[%s254 + $0xbc] sm:$0x1]
      %vm368 = vsmask.f32 3328
      %vm369 = vsmask.f32 7440
      %vm370 = vmor %vm368, %vm369
      %v372 = vshrl.u32 %v320, 16
      %v374 = vrot.slane %v372, 4
      %v375 = vshll.u32 %v320, 16
      %v377 = vrot.slane %v375, 5
      %v378 = vor.u32 %v374, %v377
      %v379 = vrot.slane %v378, 4
      %v381 = vshll.u32 %v321, 16
      %v383 = vrot.slane %v381, 5
      %v384 = vsel %vm370, %v379, %v383
      %v385 = vshrl.u32 %v321, 16
      %v387 = vrot.slane %v385, 4
      %v388 = vor.u32 %v387, %v383
      %v389 = vrot.slane %v388, 4
      %v391 = vshll.u32 %v322, 16
      %v393 = vrot.slane %v391, 5
      %v394 = vsel %vm370, %v389, %v393
      %v396 = vshrl.u32 %v323, 16
      %v398 = vrot.slane %v396, 4
      %v399 = vshll.u32 %v323, 16
      %v401 = vrot.slane %v399, 5
      %v402 = vor.u32 %v398, %v401
      %v403 = vrot.slane %v402, 4
      %v405 = vshll.u32 %v324, 16
      %v407 = vrot.slane %v405, 5
      %v408 = vsel %vm370, %v403, %v407
      %v409 = vshrl.u32 %v324, 16
      %v411 = vrot.slane %v409, 4
      %v412 = vor.u32 %v411, %v407
      %v413 = vrot.slane %v412, 4
      %v415 = vshll.u32 %v325, 16
      %v417 = vrot.slane %v415, 5
      %v418 = vsel %vm370, %v413, %v417
      %v420 = vshrl.u32 %v326, 16
      %v422 = vrot.slane %v420, 4
      %v423 = vshll.u32 %v326, 16
      %v425 = vrot.slane %v423, 5
      %v426 = vor.u32 %v422, %v425
      %v427 = vrot.slane %v426, 4
      %v429 = vshll.u32 %v327, 16
      %v431 = vrot.slane %v429, 5
      %v432 = vsel %vm370, %v427, %v431
      %v433 = vshrl.u32 %v327, 16
      %v435 = vrot.slane %v433, 4
      %v436 = vor.u32 %v435, %v431
      %v437 = vrot.slane %v436, 4
      %v439 = vshll.u32 %v328, 16
      %v441 = vrot.slane %v439, 5
      %v442 = vsel %vm370, %v437, %v441
      %v444 = vshrl.u32 %v329, 16
      %v446 = vrot.slane %v444, 4
      %v447 = vshll.u32 %v329, 16
      %v449 = vrot.slane %v447, 5
      %v450 = vor.u32 %v446, %v449
      %v451 = vrot.slane %v450, 4
      %v453 = vshll.u32 %v330, 16
      %v455 = vrot.slane %v453, 5
      %v456 = vsel %vm370, %v451, %v455
      %v457 = vshrl.u32 %v330, 16
      %v459 = vrot.slane %v457, 4
      %v460 = vor.u32 %v459, %v455
      %v461 = vrot.slane %v460, 4
      %v463 = vshll.u32 %v331, 16
      %v465 = vrot.slane %v463, 5
      %v466 = vsel %vm370, %v461, %v465
      %v468 = vshrl.u32 %v332, 16
      %v470 = vrot.slane %v468, 4
      %v471 = vshll.u32 %v332, 16
      %v473 = vrot.slane %v471, 5
      %v474 = vor.u32 %v470, %v473
      %v475 = vrot.slane %v474, 4
      %v477 = vshll.u32 %v333, 16
      %v479 = vrot.slane %v477, 5
      %v480 = vsel %vm370, %v475, %v479
      %v481 = vshrl.u32 %v333, 16
      %v483 = vrot.slane %v481, 4
      %v484 = vor.u32 %v483, %v479
      %v485 = vrot.slane %v484, 4
      %v487 = vshll.u32 %v334, 16
      %v489 = vrot.slane %v487, 5
      %v490 = vsel %vm370, %v485, %v489
      %v492 = vshrl.u32 %v335, 16
      %v494 = vrot.slane %v492, 4
      %v495 = vshll.u32 %v335, 16
      %v497 = vrot.slane %v495, 5
      %v498 = vor.u32 %v494, %v497
      %v499 = vrot.slane %v498, 4
      %v501 = vshll.u32 %v336, 16
      %v503 = vrot.slane %v501, 5
      %v504 = vsel %vm370, %v499, %v503
      %v505 = vshrl.u32 %v336, 16
      %v507 = vrot.slane %v505, 4
      %v508 = vor.u32 %v507, %v503
      %v509 = vrot.slane %v508, 4
      %v511 = vshll.u32 %v337, 16
      %v513 = vrot.slane %v511, 5
      %v514 = vsel %vm370, %v509, %v513
      %v516 = vshrl.u32 %v338, 16
      %v518 = vrot.slane %v516, 4
      %v519 = vshll.u32 %v338, 16
      %v521 = vrot.slane %v519, 5
      %v522 = vor.u32 %v518, %v521
      %v523 = vrot.slane %v522, 4
      %v525 = vshll.u32 %v339, 16
      %v527 = vrot.slane %v525, 5
      %v528 = vsel %vm370, %v523, %v527
      %v529 = vshrl.u32 %v339, 16
      %v531 = vrot.slane %v529, 4
      %v532 = vor.u32 %v531, %v527
      %v533 = vrot.slane %v532, 4
      %v535 = vshll.u32 %v340, 16
      %v537 = vrot.slane %v535, 5
      %v538 = vsel %vm370, %v533, %v537
      %v540 = vshrl.u32 %v341, 16
      %v542 = vrot.slane %v540, 4
      %v543 = vshll.u32 %v341, 16
      %v545 = vrot.slane %v543, 5
      %v546 = vor.u32 %v542, %v545
      %v547 = vrot.slane %v546, 4
      %v549 = vshll.u32 %v342, 16
      %v551 = vrot.slane %v549, 5
      %v552 = vsel %vm370, %v547, %v551
      %v553 = vshrl.u32 %v342, 16
      %v555 = vrot.slane %v553, 4
      %v556 = vor.u32 %v555, %v551
      %v557 = vrot.slane %v556, 4
      %v559 = vshll.u32 %v343, 16
      %v561 = vrot.slane %v559, 5
      %v562 = vsel %vm370, %v557, %v561
      %v564 = vshrl.u32 %v344, 16
      %v566 = vrot.slane %v564, 4
      %v567 = vshll.u32 %v344, 16
      %v569 = vrot.slane %v567, 5
      %v570 = vor.u32 %v566, %v569
      %v571 = vrot.slane %v570, 4
      %v573 = vshll.u32 %v345, 16
      %v575 = vrot.slane %v573, 5
      %v576 = vsel %vm370, %v571, %v575
      %v577 = vshrl.u32 %v345, 16
      %v579 = vrot.slane %v577, 4
      %v580 = vor.u32 %v579, %v575
      %v581 = vrot.slane %v580, 4
      %v583 = vshll.u32 %v346, 16
      %v585 = vrot.slane %v583, 5
      %v586 = vsel %vm370, %v581, %v585
      %v588 = vshrl.u32 %v347, 16
      %v590 = vrot.slane %v588, 4
      %v591 = vshll.u32 %v347, 16
      %v593 = vrot.slane %v591, 5
      %v594 = vor.u32 %v590, %v593
      %v595 = vrot.slane %v594, 4
      %v597 = vshll.u32 %v348, 16
      %v599 = vrot.slane %v597, 5
      %v600 = vsel %vm370, %v595, %v599
      %v601 = vshrl.u32 %v348, 16
      %v603 = vrot.slane %v601, 4
      %v604 = vor.u32 %v603, %v599
      %v605 = vrot.slane %v604, 4
      %v607 = vshll.u32 %v349, 16
      %v609 = vrot.slane %v607, 5
      %v610 = vsel %vm370, %v605, %v609
      %v612 = vshrl.u32 %v350, 16
      %v614 = vrot.slane %v612, 4
      %v615 = vshll.u32 %v350, 16
      %v617 = vrot.slane %v615, 5
      %v618 = vor.u32 %v614, %v617
      %v619 = vrot.slane %v618, 4
      %v621 = vshll.u32 %v351, 16
      %v623 = vrot.slane %v621, 5
      %v624 = vsel %vm370, %v619, %v623
      %v625 = vshrl.u32 %v351, 16
      %v627 = vrot.slane %v625, 4
      %v628 = vor.u32 %v627, %v623
      %v629 = vrot.slane %v628, 4
      %v631 = vshll.u32 %v352, 16
      %v633 = vrot.slane %v631, 5
      %v634 = vsel %vm370, %v629, %v633
      %v636 = vshrl.u32 %v353, 16
      %v638 = vrot.slane %v636, 4
      %v639 = vshll.u32 %v353, 16
      %v641 = vrot.slane %v639, 5
      %v642 = vor.u32 %v638, %v641
      %v643 = vrot.slane %v642, 4
      %v645 = vshll.u32 %v354, 16
      %v647 = vrot.slane %v645, 5
      %v648 = vsel %vm370, %v643, %v647
      %v649 = vshrl.u32 %v354, 16
      %v651 = vrot.slane %v649, 4
      %v652 = vor.u32 %v651, %v647
      %v653 = vrot.slane %v652, 4
      %v655 = vshll.u32 %v355, 16
      %v657 = vrot.slane %v655, 5
      %v658 = vsel %vm370, %v653, %v657
      %v660 = vshrl.u32 %v356, 16
      %v662 = vrot.slane %v660, 4
      %v663 = vshll.u32 %v356, 16
      %v665 = vrot.slane %v663, 5
      %v666 = vor.u32 %v662, %v665
      %v667 = vrot.slane %v666, 4
      %v669 = vshll.u32 %v357, 16
      %v671 = vrot.slane %v669, 5
      %v672 = vsel %vm370, %v667, %v671
      %v673 = vshrl.u32 %v357, 16
      %v675 = vrot.slane %v673, 4
      %v676 = vor.u32 %v675, %v671
      %v677 = vrot.slane %v676, 4
      %v679 = vshll.u32 %v358, 16
      %v681 = vrot.slane %v679, 5
      %v682 = vsel %vm370, %v677, %v681
      %v684 = vshrl.u32 %v359, 16
      %v686 = vrot.slane %v684, 4
      %v687 = vshll.u32 %v359, 16
      %v689 = vrot.slane %v687, 5
      %v690 = vor.u32 %v686, %v689
      %v691 = vrot.slane %v690, 4
      %v693 = vshll.u32 %v360, 16
      %v695 = vrot.slane %v693, 5
      %v696 = vsel %vm370, %v691, %v695
      %v697 = vshrl.u32 %v360, 16
      %v699 = vrot.slane %v697, 4
      %v700 = vor.u32 %v699, %v695
      %v701 = vrot.slane %v700, 4
      %v703 = vshll.u32 %v361, 16
      %v705 = vrot.slane %v703, 5
      %v706 = vsel %vm370, %v701, %v705
      %v708 = vshrl.u32 %v362, 16
      %v710 = vrot.slane %v708, 4
      %v711 = vshll.u32 %v362, 16
      %v713 = vrot.slane %v711, 5
      %v714 = vor.u32 %v710, %v713
      %v715 = vrot.slane %v714, 4
      %v717 = vshll.u32 %v363, 16
      %v719 = vrot.slane %v717, 5
      %v720 = vsel %vm370, %v715, %v719
      %v721 = vshrl.u32 %v363, 16
      %v723 = vrot.slane %v721, 4
      %v724 = vor.u32 %v723, %v719
      %v725 = vrot.slane %v724, 4
      %v727 = vshll.u32 %v364, 16
      %v729 = vrot.slane %v727, 5
      %v730 = vsel %vm370, %v725, %v729
      %v732 = vshrl.u32 %v365, 16
      %v734 = vrot.slane %v732, 4
      %v735 = vshll.u32 %v365, 16
      %v737 = vrot.slane %v735, 5
      %v738 = vor.u32 %v734, %v737
      %v739 = vrot.slane %v738, 4
      %v741 = vshll.u32 %v366, 16
      %v743 = vrot.slane %v741, 5
      %v744 = vsel %vm370, %v739, %v743
      %v745 = vshrl.u32 %v366, 16
      %v747 = vrot.slane %v745, 4
      %v748 = vor.u32 %v747, %v743
      %v749 = vrot.slane %v748, 4
      %v751 = vshll.u32 %v367, 16
      %v753 = vrot.slane %v751, 5
      %v754 = vsel %vm370, %v749, %v753
      %755 = vrot.lane.b32.xlu0 %v384, 4
      %v756 = vpop.permute.xlu0 %755
      %757 = vrot.lane.b32.xlu0 %v394, 4
      %v758 = vpop.permute.xlu0 %757
      %759 = vrot.lane.b32.xlu0 %v408, 4
      %v760 = vpop.permute.xlu0 %759
      %761 = vrot.lane.b32.xlu0 %v418, 4
      %v762 = vpop.permute.xlu0 %761
      %763 = vrot.lane.b32.xlu0 %v432, 4
      %v764 = vpop.permute.xlu0 %763
      %765 = vrot.lane.b32.xlu0 %v442, 4
      %v766 = vpop.permute.xlu0 %765
      %767 = vrot.lane.b32.xlu0 %v456, 4
      %v768 = vpop.permute.xlu0 %767
      %769 = vrot.lane.b32.xlu0 %v466, 4
      %v770 = vpop.permute.xlu0 %769
      %771 = vrot.lane.b32.xlu0 %v480, 4
      %v772 = vpop.permute.xlu0 %771
      %773 = vrot.lane.b32.xlu0 %v490, 4
      %v774 = vpop.permute.xlu0 %773
      %775 = vrot.lane.b32.xlu0 %v504, 4
      %v776 = vpop.permute.xlu0 %775
      %777 = vrot.lane.b32.xlu0 %v514, 4
      %v778 = vpop.permute.xlu0 %777
      %779 = vrot.lane.b32.xlu0 %v528, 4
      %v780 = vpop.permute.xlu0 %779
      %781 = vrot.lane.b32.xlu0 %v538, 4
      %v782 = vpop.permute.xlu0 %781
      %783 = vrot.lane.b32.xlu0 %v552, 4
      %v784 = vpop.permute.xlu0 %783
      %785 = vrot.lane.b32.xlu0 %v562, 4
      %v786 = vpop.permute.xlu0 %785
      %787 = vrot.lane.b32.xlu0 %v576, 4
      %v788 = vpop.permute.xlu0 %787
      %789 = vrot.lane.b32.xlu0 %v586, 4
      %v790 = vpop.permute.xlu0 %789
      %791 = vrot.lane.b32.xlu0 %v600, 4
      %v792 = vpop.permute.xlu0 %791
      %793 = vrot.lane.b32.xlu0 %v610, 4
      %v794 = vpop.permute.xlu0 %793
      %795 = vrot.lane.b32.xlu0 %v624, 4
      %v796 = vpop.permute.xlu0 %795
      %797 = vrot.lane.b32.xlu0 %v634, 4
      %v798 = vpop.permute.xlu0 %797
      %799 = vrot.lane.b32.xlu0 %v648, 4
      %v800 = vpop.permute.xlu0 %799
      %801 = vrot.lane.b32.xlu0 %v658, 4
      %v802 = vpop.permute.xlu0 %801
      %803 = vrot.lane.b32.xlu0 %v672, 4
      %v804 = vpop.permute.xlu0 %803
      %805 = vrot.lane.b32.xlu0 %v682, 4
      %v806 = vpop.permute.xlu0 %805
      %807 = vrot.lane.b32.xlu0 %v696, 4
      %v808 = vpop.permute.xlu0 %807
      %809 = vrot.lane.b32.xlu0 %v706, 4
      %v810 = vpop.permute.xlu0 %809
      %811 = vrot.lane.b32.xlu0 %v720, 4
      %v812 = vpop.permute.xlu0 %811
      %813 = vrot.lane.b32.xlu0 %v730, 4
      %v814 = vpop.permute.xlu0 %813
      %815 = vrot.lane.b32.xlu0 %v744, 4
      %v816 = vpop.permute.xlu0 %815
      %817 = vrot.lane.b32.xlu0 %v754, 4
      %v818 = vpop.permute.xlu0 %817
      %vm851 = vcmask 60448
      %852 = vst.msk [vmem:[#allocation2] sm:$0xf] %vm851, %v756
      %853 = vst.msk [vmem:[#allocation2 + $0x4] sm:$0xf] %vm851, %v758
      %854 = vst.msk [vmem:[#allocation2 + $0x8] sm:$0xf] %vm851, %v760
      %855 = vst.msk [vmem:[#allocation2 + $0xc] sm:$0xf] %vm851, %v762
      %856 = vst.msk [vmem:[#allocation2 + $0x10] sm:$0xf] %vm851, %v764
      %857 = vst.msk [vmem:[#allocation2 + $0x14] sm:$0xf] %vm851, %v766
      %858 = vst.msk [vmem:[#allocation2 + $0x18] sm:$0xf] %vm851, %v768
      %859 = vst.msk [vmem:[#allocation2 + $0x1c] sm:$0xf] %vm851, %v770
      %860 = vst.msk [vmem:[#allocation2 + $0x20] sm:$0xf] %vm851, %v772
      %861 = vst.msk [vmem:[#allocation2 + $0x24] sm:$0xf] %vm851, %v774
      %862 = vst.msk [vmem:[#allocation2 + $0x28] sm:$0xf] %vm851, %v776
      %863 = vst.msk [vmem:[#allocation2 + $0x2c] sm:$0xf] %vm851, %v778
      %864 = vst.msk [vmem:[#allocation2 + $0x30] sm:$0xf] %vm851, %v780
      %865 = vst.msk [vmem:[#allocation2 + $0x34] sm:$0xf] %vm851, %v782
      %866 = vst.msk [vmem:[#allocation2 + $0x38] sm:$0xf] %vm851, %v784
      %867 = vst.msk [vmem:[#allocation2 + $0x3c] sm:$0xf] %vm851, %v786
      %868 = vst.msk [vmem:[#allocation2 + $0x40] sm:$0xf] %vm851, %v788
      %869 = vst.msk [vmem:[#allocation2 + $0x44] sm:$0xf] %vm851, %v790
      %870 = vst.msk [vmem:[#allocation2 + $0x48] sm:$0xf] %vm851, %v792
      %871 = vst.msk [vmem:[#allocation2 + $0x4c] sm:$0xf] %vm851, %v794
      %872 = vst.msk [vmem:[#allocation2 + $0x50] sm:$0xf] %vm851, %v796
      %873 = vst.msk [vmem:[#allocation2 + $0x54] sm:$0xf] %vm851, %v798
      %874 = vst.msk [vmem:[#allocation2 + $0x58] sm:$0xf] %vm851, %v800
      %875 = vst.msk [vmem:[#allocation2 + $0x5c] sm:$0xf] %vm851, %v802
      %876 = vst.msk [vmem:[#allocation2 + $0x60] sm:$0xf] %vm851, %v804
      %877 = vst.msk [vmem:[#allocation2 + $0x64] sm:$0xf] %vm851, %v806
      %878 = vst.msk [vmem:[#allocation2 + $0x68] sm:$0xf] %vm851, %v808
      %879 = vst.msk [vmem:[#allocation2 + $0x6c] sm:$0xf] %vm851, %v810
      %880 = vst.msk [vmem:[#allocation2 + $0x70] sm:$0xf] %vm851, %v812
      %881 = vst.msk [vmem:[#allocation2 + $0x74] sm:$0xf] %vm851, %v814
      %882 = vst.msk [vmem:[#allocation2 + $0x78] sm:$0xf] %vm851, %v816
      %883 = vst.msk [vmem:[#allocation2 + $0x7c] sm:$0xf] %vm851, %v818
      %v884 = vld [vmem:[%s254] sm:$0xe]
      %v885 = vld [vmem:[%s254 + $0x4] sm:$0xf]
      %v886 = vld [vmem:[%s254 + $0x8] sm:$0x1]
      %v887 = vld [vmem:[%s254 + $0xc] sm:$0xe]
      %v888 = vld [vmem:[%s254 + $0x10] sm:$0xf]
      %v889 = vld [vmem:[%s254 + $0x14] sm:$0x1]
      %v890 = vld [vmem:[%s254 + $0x18] sm:$0xe]
      %v891 = vld [vmem:[%s254 + $0x1c] sm:$0xf]
      %v892 = vld [vmem:[%s254 + $0x20] sm:$0x1]
      %v893 = vld [vmem:[%s254 + $0x24] sm:$0xe]
      %v894 = vld [vmem:[%s254 + $0x28] sm:$0xf]
      %v895 = vld [vmem:[%s254 + $0x2c] sm:$0x1]
      %v896 = vld [vmem:[%s254 + $0x30] sm:$0xe]
      %v897 = vld [vmem:[%s254 + $0x34] sm:$0xf]
      %v898 = vld [vmem:[%s254 + $0x38] sm:$0x1]
      %v899 = vld [vmem:[%s254 + $0x3c] sm:$0xe]
      %v900 = vld [vmem:[%s254 + $0x40] sm:$0xf]
      %v901 = vld [vmem:[%s254 + $0x44] sm:$0x1]
      %v902 = vld [vmem:[%s254 + $0x48] sm:$0xe]
      %v903 = vld [vmem:[%s254 + $0x4c] sm:$0xf]
      %v904 = vld [vmem:[%s254 + $0x50] sm:$0x1]
      %v905 = vld [vmem:[%s254 + $0x54] sm:$0xe]
      %v906 = vld [vmem:[%s254 + $0x58] sm:$0xf]
      %v907 = vld [vmem:[%s254 + $0x5c] sm:$0x1]
      %v908 = vld [vmem:[%s254 + $0x60] sm:$0xe]
      %v909 = vld [vmem:[%s254 + $0x64] sm:$0xf]
      %v910 = vld [vmem:[%s254 + $0x68] sm:$0x1]
      %v911 = vld [vmem:[%s254 + $0x6c] sm:$0xe]
      %v912 = vld [vmem:[%s254 + $0x70] sm:$0xf]
      %v913 = vld [vmem:[%s254 + $0x74] sm:$0x1]
      %v914 = vld [vmem:[%s254 + $0x78] sm:$0xe]
      %v915 = vld [vmem:[%s254 + $0x7c] sm:$0xf]
      %v916 = vld [vmem:[%s254 + $0x80] sm:$0x1]
      %v917 = vld [vmem:[%s254 + $0x84] sm:$0xe]
      %v918 = vld [vmem:[%s254 + $0x88] sm:$0xf]
      %v919 = vld [vmem:[%s254 + $0x8c] sm:$0x1]
      %v920 = vld [vmem:[%s254 + $0x90] sm:$0xe]
      %v921 = vld [vmem:[%s254 + $0x94] sm:$0xf]
      %v922 = vld [vmem:[%s254 + $0x98] sm:$0x1]
      %v923 = vld [vmem:[%s254 + $0x9c] sm:$0xe]
      %v924 = vld [vmem:[%s254 + $0xa0] sm:$0xf]
      %v925 = vld [vmem:[%s254 + $0xa4] sm:$0x1]
      %v926 = vld [vmem:[%s254 + $0xa8] sm:$0xe]
      %v927 = vld [vmem:[%s254 + $0xac] sm:$0xf]
      %v928 = vld [vmem:[%s254 + $0xb0] sm:$0x1]
      %v929 = vld [vmem:[%s254 + $0xb4] sm:$0xe]
      %v930 = vld [vmem:[%s254 + $0xb8] sm:$0xf]
      %v931 = vld [vmem:[%s254 + $0xbc] sm:$0x1]
      %vm980 = vcmask 1042432
      %vm981 = vcmask 1046532
      %vm982 = vmor %vm980, %vm981
      %v983 = vrot.slane %v884, 5
      %v984 = vrot.slane %v983, 4
      %v985 = vrot.slane %v885, 5
      %v986 = vsel %vm982, %v984, %v985
      %v987 = vrot.slane %v985, 4
      %v988 = vrot.slane %v886, 5
      %v989 = vsel %vm982, %v987, %v988
      %v990 = vrot.slane %v887, 5
      %v991 = vrot.slane %v990, 4
      %v992 = vrot.slane %v888, 5
      %v993 = vsel %vm982, %v991, %v992
      %v994 = vrot.slane %v992, 4
      %v995 = vrot.slane %v889, 5
      %v996 = vsel %vm982, %v994, %v995
      %v997 = vrot.slane %v890, 5
      %v998 = vrot.slane %v997, 4
      %v999 = vrot.slane %v891, 5
      %v1000 = vsel %vm982, %v998, %v999
      %v1001 = vrot.slane %v999, 4
      %v1002 = vrot.slane %v892, 5
      %v1003 = vsel %vm982, %v1001, %v1002
      %v1004 = vrot.slane %v893, 5
      %v1005 = vrot.slane %v1004, 4
      %v1006 = vrot.slane %v894, 5
      %v1007 = vsel %vm982, %v1005, %v1006
      %v1008 = vrot.slane %v1006, 4
      %v1009 = vrot.slane %v895, 5
      %v1010 = vsel %vm982, %v1008, %v1009
      %v1011 = vrot.slane %v896, 5
      %v1012 = vrot.slane %v1011, 4
      %v1013 = vrot.slane %v897, 5
      %v1014 = vsel %vm982, %v1012, %v1013
      %v1015 = vrot.slane %v1013, 4
      %v1016 = vrot.slane %v898, 5
      %v1017 = vsel %vm982, %v1015, %v1016
      %v1018 = vrot.slane %v899, 5
      %v1019 = vrot.slane %v1018, 4
      %v1020 = vrot.slane %v900, 5
      %v1021 = vsel %vm982, %v1019, %v1020
      %v1022 = vrot.slane %v1020, 4
      %v1023 = vrot.slane %v901, 5
      %v1024 = vsel %vm982, %v1022, %v1023
      %v1025 = vrot.slane %v902, 5
      %v1026 = vrot.slane %v1025, 4
      %v1027 = vrot.slane %v903, 5
      %v1028 = vsel %vm982, %v1026, %v1027
      %v1029 = vrot.slane %v1027, 4
      %v1030 = vrot.slane %v904, 5
      %v1031 = vsel %vm982, %v1029, %v1030
      %v1032 = vrot.slane %v905, 5
      %v1033 = vrot.slane %v1032, 4
      %v1034 = vrot.slane %v906, 5
      %v1035 = vsel %vm982, %v1033, %v1034
      %v1036 = vrot.slane %v1034, 4
      %v1037 = vrot.slane %v907, 5
      %v1038 = vsel %vm982, %v1036, %v1037
      %v1039 = vrot.slane %v908, 5
      %v1040 = vrot.slane %v1039, 4
      %v1041 = vrot.slane %v909, 5
      %v1042 = vsel %vm982, %v1040, %v1041
      %v1043 = vrot.slane %v1041, 4
      %v1044 = vrot.slane %v910, 5
      %v1045 = vsel %vm982, %v1043, %v1044
      %v1046 = vrot.slane %v911, 5
      %v1047 = vrot.slane %v1046, 4
      %v1048 = vrot.slane %v912, 5
      %v1049 = vsel %vm982, %v1047, %v1048
      %v1050 = vrot.slane %v1048, 4
      %v1051 = vrot.slane %v913, 5
      %v1052 = vsel %vm982, %v1050, %v1051
      %v1053 = vrot.slane %v914, 5
      %v1054 = vrot.slane %v1053, 4
      %v1055 = vrot.slane %v915, 5
      %v1056 = vsel %vm982, %v1054, %v1055
      %v1057 = vrot.slane %v1055, 4
      %v1058 = vrot.slane %v916, 5
      %v1059 = vsel %vm982, %v1057, %v1058
      %v1060 = vrot.slane %v917, 5
      %v1061 = vrot.slane %v1060, 4
      %v1062 = vrot.slane %v918, 5
      %v1063 = vsel %vm982, %v1061, %v1062
      %v1064 = vrot.slane %v1062, 4
      %v1065 = vrot.slane %v919, 5
      %v1066 = vsel %vm982, %v1064, %v1065
      %v1067 = vrot.slane %v920, 5
      %v1068 = vrot.slane %v1067, 4
      %v1069 = vrot.slane %v921, 5
      %v1070 = vsel %vm982, %v1068, %v1069
      %v1071 = vrot.slane %v1069, 4
      %v1072 = vrot.slane %v922, 5
      %v1073 = vsel %vm982, %v1071, %v1072
      %v1074 = vrot.slane %v923, 5
      %v1075 = vrot.slane %v1074, 4
      %v1076 = vrot.slane %v924, 5
      %v1077 = vsel %vm982, %v1075, %v1076
      %v1078 = vrot.slane %v1076, 4
      %v1079 = vrot.slane %v925, 5
      %v1080 = vsel %vm982, %v1078, %v1079
      %v1081 = vrot.slane %v926, 5
      %v1082 = vrot.slane %v1081, 4
      %v1083 = vrot.slane %v927, 5
      %v1084 = vsel %vm982, %v1082, %v1083
      %v1085 = vrot.slane %v1083, 4
      %v1086 = vrot.slane %v928, 5
      %v1087 = vsel %vm982, %v1085, %v1086
      %v1088 = vrot.slane %v929, 5
      %v1089 = vrot.slane %v1088, 4
      %v1090 = vrot.slane %v930, 5
      %v1091 = vsel %vm982, %v1089, %v1090
      %v1092 = vrot.slane %v1090, 4
      %v1093 = vrot.slane %v931, 5
      %v1094 = vsel %vm982, %v1092, %v1093
      %1095 = vrot.lane.b32.xlu0 %v986, 8
      %v1096 = vpop.permute.xlu0 %1095
      %1097 = vrot.lane.b32.xlu0 %v989, 8
      %v1098 = vpop.permute.xlu0 %1097
      %1099 = vrot.lane.b32.xlu0 %v993, 8
      %v1100 = vpop.permute.xlu0 %1099
      %1101 = vrot.lane.b32.xlu0 %v996, 8
      %v1102 = vpop.permute.xlu0 %1101
      %1103 = vrot.lane.b32.xlu0 %v1000, 8
      %v1104 = vpop.permute.xlu0 %1103
      %1105 = vrot.lane.b32.xlu0 %v1003, 8
      %v1106 = vpop.permute.xlu0 %1105
      %1107 = vrot.lane.b32.xlu0 %v1007, 8
      %v1108 = vpop.permute.xlu0 %1107
      %1109 = vrot.lane.b32.xlu0 %v1010, 8
      %v1110 = vpop.permute.xlu0 %1109
      %1111 = vrot.lane.b32.xlu0 %v1014, 8
      %v1112 = vpop.permute.xlu0 %1111
      %1113 = vrot.lane.b32.xlu0 %v1017, 8
      %v1114 = vpop.permute.xlu0 %1113
      %1115 = vrot.lane.b32.xlu0 %v1021, 8
      %v1116 = vpop.permute.xlu0 %1115
      %1117 = vrot.lane.b32.xlu0 %v1024, 8
      %v1118 = vpop.permute.xlu0 %1117
      %1119 = vrot.lane.b32.xlu0 %v1028, 8
      %v1120 = vpop.permute.xlu0 %1119
      %1121 = vrot.lane.b32.xlu0 %v1031, 8
      %v1122 = vpop.permute.xlu0 %1121
      %1123 = vrot.lane.b32.xlu0 %v1035, 8
      %v1124 = vpop.permute.xlu0 %1123
      %1125 = vrot.lane.b32.xlu0 %v1038, 8
      %v1126 = vpop.permute.xlu0 %1125
      %1127 = vrot.lane.b32.xlu0 %v1042, 8
      %v1128 = vpop.permute.xlu0 %1127
      %1129 = vrot.lane.b32.xlu0 %v1045, 8
      %v1130 = vpop.permute.xlu0 %1129
      %1131 = vrot.lane.b32.xlu0 %v1049, 8
      %v1132 = vpop.permute.xlu0 %1131
      %1133 = vrot.lane.b32.xlu0 %v1052, 8
      %v1134 = vpop.permute.xlu0 %1133
      %1135 = vrot.lane.b32.xlu0 %v1056, 8
      %v1136 = vpop.permute.xlu0 %1135
      %1137 = vrot.lane.b32.xlu0 %v1059, 8
      %v1138 = vpop.permute.xlu0 %1137
      %1139 = vrot.lane.b32.xlu0 %v1063, 8
      %v1140 = vpop.permute.xlu0 %1139
      %1141 = vrot.lane.b32.xlu0 %v1066, 8
      %v1142 = vpop.permute.xlu0 %1141
      %1143 = vrot.lane.b32.xlu0 %v1070, 8
      %v1144 = vpop.permute.xlu0 %1143
      %1145 = vrot.lane.b32.xlu0 %v1073, 8
      %v1146 = vpop.permute.xlu0 %1145
      %1147 = vrot.lane.b32.xlu0 %v1077, 8
      %v1148 = vpop.permute.xlu0 %1147
      %1149 = vrot.lane.b32.xlu0 %v1080, 8
      %v1150 = vpop.permute.xlu0 %1149
      %1151 = vrot.lane.b32.xlu0 %v1084, 8
      %v1152 = vpop.permute.xlu0 %1151
      %1153 = vrot.lane.b32.xlu0 %v1087, 8
      %v1154 = vpop.permute.xlu0 %1153
      %1155 = vrot.lane.b32.xlu0 %v1091, 8
      %v1156 = vpop.permute.xlu0 %1155
      %1157 = vrot.lane.b32.xlu0 %v1094, 8
      %v1158 = vpop.permute.xlu0 %1157
      %vm1191 = vcmask 93248
      %1192 = vst.msk [vmem:[#allocation2] sm:$0xf] %vm1191, %v1096
      %1193 = vst.msk [vmem:[#allocation2 + $0x4] sm:$0xf] %vm1191, %v1098
      %1194 = vst.msk [vmem:[#allocation2 + $0x8] sm:$0xf] %vm1191, %v1100
      %1195 = vst.msk [vmem:[#allocation2 + $0xc] sm:$0xf] %vm1191, %v1102
      %1196 = vst.msk [vmem:[#allocation2 + $0x10] sm:$0xf] %vm1191, %v1104
      %1197 = vst.msk [vmem:[#allocation2 + $0x14] sm:$0xf] %vm1191, %v1106
      %1198 = vst.msk [vmem:[#allocation2 + $0x18] sm:$0xf] %vm1191, %v1108
      %1199 = vst.msk [vmem:[#allocation2 + $0x1c] sm:$0xf] %vm1191, %v1110
      %1200 = vst.msk [vmem:[#allocation2 + $0x20] sm:$0xf] %vm1191, %v1112
      %1201 = vst.msk [vmem:[#allocation2 + $0x24] sm:$0xf] %vm1191, %v1114
      %1202 = vst.msk [vmem:[#allocation2 + $0x28] sm:$0xf] %vm1191, %v1116
      %1203 = vst.msk [vmem:[#allocation2 + $0x2c] sm:$0xf] %vm1191, %v1118
      %1204 = vst.msk [vmem:[#allocation2 + $0x30] sm:$0xf] %vm1191, %v1120
      %1205 = vst.msk [vmem:[#allocation2 + $0x34] sm:$0xf] %vm1191, %v1122
      %1206 = vst.msk [vmem:[#allocation2 + $0x38] sm:$0xf] %vm1191, %v1124
      %1207 = vst.msk [vmem:[#allocation2 + $0x3c] sm:$0xf] %vm1191, %v1126
      %1208 = vst.msk [vmem:[#allocation2 + $0x40] sm:$0xf] %vm1191, %v1128
      %1209 = vst.msk [vmem:[#allocation2 + $0x44] sm:$0xf] %vm1191, %v1130
      %1210 = vst.msk [vmem:[#allocation2 + $0x48] sm:$0xf] %vm1191, %v1132
      %1211 = vst.msk [vmem:[#allocation2 + $0x4c] sm:$0xf] %vm1191, %v1134
      %1212 = vst.msk [vmem:[#allocation2 + $0x50] sm:$0xf] %vm1191, %v1136
      %1213 = vst.msk [vmem:[#allocation2 + $0x54] sm:$0xf] %vm1191, %v1138
      %1214 = vst.msk [vmem:[#allocation2 + $0x58] sm:$0xf] %vm1191, %v1140
      %1215 = vst.msk [vmem:[#allocation2 + $0x5c] sm:$0xf] %vm1191, %v1142
      %1216 = vst.msk [vmem:[#allocation2 + $0x60] sm:$0xf] %vm1191, %v1144
      %1217 = vst.msk [vmem:[#allocation2 + $0x64] sm:$0xf] %vm1191, %v1146
      %1218 = vst.msk [vmem:[#allocation2 + $0x68] sm:$0xf] %vm1191, %v1148
      %1219 = vst.msk [vmem:[#allocation2 + $0x6c] sm:$0xf] %vm1191, %v1150
      %1220 = vst.msk [vmem:[#allocation2 + $0x70] sm:$0xf] %vm1191, %v1152
      %1221 = vst.msk [vmem:[#allocation2 + $0x74] sm:$0xf] %vm1191, %v1154
      %1222 = vst.msk [vmem:[#allocation2 + $0x78] sm:$0xf] %vm1191, %v1156
      %1223 = vst.msk [vmem:[#allocation2 + $0x7c] sm:$0xf] %vm1191, %v1158
      %s1224 = sadd.s32 %s251, 1
      %s1225 = smul.u32 %s1224, 3
      %s1226 = smul.addr %s1225, 4
      %s1227 = scalar_lea.vmem %s238, %s1226
      %v1228 = vld [vmem:[%s1227] sm:$0xf]
      %v1229 = vld [vmem:[%s1227 + $0x4] sm:$0xf]
      %v1230 = vld [vmem:[%s1227 + $0xc] sm:$0xf]
      %v1231 = vld [vmem:[%s1227 + $0x10] sm:$0xf]
      %v1232 = vld [vmem:[%s1227 + $0x18] sm:$0xf]
      %v1233 = vld [vmem:[%s1227 + $0x1c] sm:$0xf]
      %v1234 = vld [vmem:[%s1227 + $0x24] sm:$0xf]
      %v1235 = vld [vmem:[%s1227 + $0x28] sm:$0xf]
      %v1236 = vld [vmem:[%s1227 + $0x30] sm:$0xf]
      %v1237 = vld [vmem:[%s1227 + $0x34] sm:$0xf]
      %v1238 = vld [vmem:[%s1227 + $0x3c] sm:$0xf]
      %v1239 = vld [vmem:[%s1227 + $0x40] sm:$0xf]
      %v1240 = vld [vmem:[%s1227 + $0x48] sm:$0xf]
      %v1241 = vld [vmem:[%s1227 + $0x4c] sm:$0xf]
      %v1242 = vld [vmem:[%s1227 + $0x54] sm:$0xf]
      %v1243 = vld [vmem:[%s1227 + $0x58] sm:$0xf]
      %v1244 = vld [vmem:[%s1227 + $0x60] sm:$0xf]
      %v1245 = vld [vmem:[%s1227 + $0x64] sm:$0xf]
      %v1246 = vld [vmem:[%s1227 + $0x6c] sm:$0xf]
      %v1247 = vld [vmem:[%s1227 + $0x70] sm:$0xf]
      %v1248 = vld [vmem:[%s1227 + $0x78] sm:$0xf]
      %v1249 = vld [vmem:[%s1227 + $0x7c] sm:$0xf]
      %v1250 = vld [vmem:[%s1227 + $0x84] sm:$0xf]
      %v1251 = vld [vmem:[%s1227 + $0x88] sm:$0xf]
      %v1252 = vld [vmem:[%s1227 + $0x90] sm:$0xf]
      %v1253 = vld [vmem:[%s1227 + $0x94] sm:$0xf]
      %v1254 = vld [vmem:[%s1227 + $0x9c] sm:$0xf]
      %v1255 = vld [vmem:[%s1227 + $0xa0] sm:$0xf]
      %v1256 = vld [vmem:[%s1227 + $0xa8] sm:$0xf]
      %v1257 = vld [vmem:[%s1227 + $0xac] sm:$0xf]
      %v1258 = vld [vmem:[%s1227 + $0xb4] sm:$0xf]
      %v1259 = vld [vmem:[%s1227 + $0xb8] sm:$0xf]
      %1292 = vrot.lane.b32.xlu0 %v1228, 12
      %v1293 = vpop.permute.xlu0 %1292
      %1294 = vrot.lane.b32.xlu0 %v1229, 12
      %v1295 = vpop.permute.xlu0 %1294
      %1296 = vrot.lane.b32.xlu0 %v1230, 12
      %v1297 = vpop.permute.xlu0 %1296
      %1298 = vrot.lane.b32.xlu0 %v1231, 12
      %v1299 = vpop.permute.xlu0 %1298
      %1300 = vrot.lane.b32.xlu0 %v1232, 12
      %v1301 = vpop.permute.xlu0 %1300
      %1302 = vrot.lane.b32.xlu0 %v1233, 12
      %v1303 = vpop.permute.xlu0 %1302
      %1304 = vrot.lane.b32.xlu0 %v1234, 12
      %v1305 = vpop.permute.xlu0 %1304
      %1306 = vrot.lane.b32.xlu0 %v1235, 12
      %v1307 = vpop.permute.xlu0 %1306
      %1308 = vrot.lane.b32.xlu0 %v1236, 12
      %v1309 = vpop.permute.xlu0 %1308
      %1310 = vrot.lane.b32.xlu0 %v1237, 12
      %v1311 = vpop.permute.xlu0 %1310
      %1312 = vrot.lane.b32.xlu0 %v1238, 12
      %v1313 = vpop.permute.xlu0 %1312
      %1314 = vrot.lane.b32.xlu0 %v1239, 12
      %v1315 = vpop.permute.xlu0 %1314
      %1316 = vrot.lane.b32.xlu0 %v1240, 12
      %v1317 = vpop.permute.xlu0 %1316
      %1318 = vrot.lane.b32.xlu0 %v1241, 12
      %v1319 = vpop.permute.xlu0 %1318
      %1320 = vrot.lane.b32.xlu0 %v1242, 12
      %v1321 = vpop.permute.xlu0 %1320
      %1322 = vrot.lane.b32.xlu0 %v1243, 12
      %v1323 = vpop.permute.xlu0 %1322
      %1324 = vrot.lane.b32.xlu0 %v1244, 12
      %v1325 = vpop.permute.xlu0 %1324
      %1326 = vrot.lane.b32.xlu0 %v1245, 12
      %v1327 = vpop.permute.xlu0 %1326
      %1328 = vrot.lane.b32.xlu0 %v1246, 12
      %v1329 = vpop.permute.xlu0 %1328
      %1330 = vrot.lane.b32.xlu0 %v1247, 12
      %v1331 = vpop.permute.xlu0 %1330
      %1332 = vrot.lane.b32.xlu0 %v1248, 12
      %v1333 = vpop.permute.xlu0 %1332
      %1334 = vrot.lane.b32.xlu0 %v1249, 12
      %v1335 = vpop.permute.xlu0 %1334
      %1336 = vrot.lane.b32.xlu0 %v1250, 12
      %v1337 = vpop.permute.xlu0 %1336
      %1338 = vrot.lane.b32.xlu0 %v1251, 12
      %v1339 = vpop.permute.xlu0 %1338
      %1340 = vrot.lane.b32.xlu0 %v1252, 12
      %v1341 = vpop.permute.xlu0 %1340
      %1342 = vrot.lane.b32.xlu0 %v1253, 12
      %v1343 = vpop.permute.xlu0 %1342
      %1344 = vrot.lane.b32.xlu0 %v1254, 12
      %v1345 = vpop.permute.xlu0 %1344
      %1346 = vrot.lane.b32.xlu0 %v1255, 12
      %v1347 = vpop.permute.xlu0 %1346
      %1348 = vrot.lane.b32.xlu0 %v1256, 12
      %v1349 = vpop.permute.xlu0 %1348
      %1350 = vrot.lane.b32.xlu0 %v1257, 12
      %v1351 = vpop.permute.xlu0 %1350
      %1352 = vrot.lane.b32.xlu0 %v1258, 12
      %v1353 = vpop.permute.xlu0 %1352
      %1354 = vrot.lane.b32.xlu0 %v1259, 12
      %v1355 = vpop.permute.xlu0 %1354
      %vm1388 = vcmask 126048
      %1389 = vst.msk [vmem:[#allocation2] sm:$0xf] %vm1388, %v1293
      %1390 = vst.msk [vmem:[#allocation2 + $0x4] sm:$0xf] %vm1388, %v1295
      %1391 = vst.msk [vmem:[#allocation2 + $0x8] sm:$0xf] %vm1388, %v1297
      %1392 = vst.msk [vmem:[#allocation2 + $0xc] sm:$0xf] %vm1388, %v1299
      %1393 = vst.msk [vmem:[#allocation2 + $0x10] sm:$0xf] %vm1388, %v1301
      %1394 = vst.msk [vmem:[#allocation2 + $0x14] sm:$0xf] %vm1388, %v1303
      %1395 = vst.msk [vmem:[#allocation2 + $0x18] sm:$0xf] %vm1388, %v1305
      %1396 = vst.msk [vmem:[#allocation2 + $0x1c] sm:$0xf] %vm1388, %v1307
      %1397 = vst.msk [vmem:[#allocation2 + $0x20] sm:$0xf] %vm1388, %v1309
      %1398 = vst.msk [vmem:[#allocation2 + $0x24] sm:$0xf] %vm1388, %v1311
      %1399 = vst.msk [vmem:[#allocation2 + $0x28] sm:$0xf] %vm1388, %v1313
      %1400 = vst.msk [vmem:[#allocation2 + $0x2c] sm:$0xf] %vm1388, %v1315
      %1401 = vst.msk [vmem:[#allocation2 + $0x30] sm:$0xf] %vm1388, %v1317
      %1402 = vst.msk [vmem:[#allocation2 + $0x34] sm:$0xf] %vm1388, %v1319
      %1403 = vst.msk [vmem:[#allocation2 + $0x38] sm:$0xf] %vm1388, %v1321
      %1404 = vst.msk [vmem:[#allocation2 + $0x3c] sm:$0xf] %vm1388, %v1323
      %1405 = vst.msk [vmem:[#allocation2 + $0x40] sm:$0xf] %vm1388, %v1325
      %1406 = vst.msk [vmem:[#allocation2 + $0x44] sm:$0xf] %vm1388, %v1327
      %1407 = vst.msk [vmem:[#allocation2 + $0x48] sm:$0xf] %vm1388, %v1329
      %1408 = vst.msk [vmem:[#allocation2 + $0x4c] sm:$0xf] %vm1388, %v1331
      %1409 = vst.msk [vmem:[#allocation2 + $0x50] sm:$0xf] %vm1388, %v1333
      %1410 = vst.msk [vmem:[#allocation2 + $0x54] sm:$0xf] %vm1388, %v1335
      %1411 = vst.msk [vmem:[#allocation2 + $0x58] sm:$0xf] %vm1388, %v1337
      %1412 = vst.msk [vmem:[#allocation2 + $0x5c] sm:$0xf] %vm1388, %v1339
      %1413 = vst.msk [vmem:[#allocation2 + $0x60] sm:$0xf] %vm1388, %v1341
      %1414 = vst.msk [vmem:[#allocation2 + $0x64] sm:$0xf] %vm1388, %v1343
      %1415 = vst.msk [vmem:[#allocation2 + $0x68] sm:$0xf] %vm1388, %v1345
      %1416 = vst.msk [vmem:[#allocation2 + $0x6c] sm:$0xf] %vm1388, %v1347
      %1417 = vst.msk [vmem:[#allocation2 + $0x70] sm:$0xf] %vm1388, %v1349
      %1418 = vst.msk [vmem:[#allocation2 + $0x74] sm:$0xf] %vm1388, %v1351
      %1419 = vst.msk [vmem:[#allocation2 + $0x78] sm:$0xf] %vm1388, %v1353
      %1420 = vst.msk [vmem:[#allocation2 + $0x7c] sm:$0xf] %vm1388, %v1355
      %v1421 = vld [vmem:[%s1227] sm:$0xf]
      %v1422 = vld [vmem:[%s1227 + $0x4] sm:$0xf]
      %v1423 = vld [vmem:[%s1227 + $0x8] sm:$0x1]
      %v1424 = vld [vmem:[%s1227 + $0xc] sm:$0xf]
      %v1425 = vld [vmem:[%s1227 + $0x10] sm:$0xf]
      %v1426 = vld [vmem:[%s1227 + $0x14] sm:$0x1]
      %v1427 = vld [vmem:[%s1227 + $0x18] sm:$0xf]
      %v1428 = vld [vmem:[%s1227 + $0x1c] sm:$0xf]
      %v1429 = vld [vmem:[%s1227 + $0x20] sm:$0x1]
      %v1430 = vld [vmem:[%s1227 + $0x24] sm:$0xf]
      %v1431 = vld [vmem:[%s1227 + $0x28] sm:$0xf]
      %v1432 = vld [vmem:[%s1227 + $0x2c] sm:$0x1]
      %v1433 = vld [vmem:[%s1227 + $0x30] sm:$0xf]
      %v1434 = vld [vmem:[%s1227 + $0x34] sm:$0xf]
      %v1435 = vld [vmem:[%s1227 + $0x38] sm:$0x1]
      %v1436 = vld [vmem:[%s1227 + $0x3c] sm:$0xf]
      %v1437 = vld [vmem:[%s1227 + $0x40] sm:$0xf]
      %v1438 = vld [vmem:[%s1227 + $0x44] sm:$0x1]
      %v1439 = vld [vmem:[%s1227 + $0x48] sm:$0xf]
      %v1440 = vld [vmem:[%s1227 + $0x4c] sm:$0xf]
      %v1441 = vld [vmem:[%s1227 + $0x50] sm:$0x1]
      %v1442 = vld [vmem:[%s1227 + $0x54] sm:$0xf]
      %v1443 = vld [vmem:[%s1227 + $0x58] sm:$0xf]
      %v1444 = vld [vmem:[%s1227 + $0x5c] sm:$0x1]
      %v1445 = vld [vmem:[%s1227 + $0x60] sm:$0xf]
      %v1446 = vld [vmem:[%s1227 + $0x64] sm:$0xf]
      %v1447 = vld [vmem:[%s1227 + $0x68] sm:$0x1]
      %v1448 = vld [vmem:[%s1227 + $0x6c] sm:$0xf]
      %v1449 = vld [vmem:[%s1227 + $0x70] sm:$0xf]
      %v1450 = vld [vmem:[%s1227 + $0x74] sm:$0x1]
      %v1451 = vld [vmem:[%s1227 + $0x78] sm:$0xf]
      %v1452 = vld [vmem:[%s1227 + $0x7c] sm:$0xf]
      %v1453 = vld [vmem:[%s1227 + $0x80] sm:$0x1]
      %v1454 = vld [vmem:[%s1227 + $0x84] sm:$0xf]
      %v1455 = vld [vmem:[%s1227 + $0x88] sm:$0xf]
      %v1456 = vld [vmem:[%s1227 + $0x8c] sm:$0x1]
      %v1457 = vld [vmem:[%s1227 + $0x90] sm:$0xf]
      %v1458 = vld [vmem:[%s1227 + $0x94] sm:$0xf]
      %v1459 = vld [vmem:[%s1227 + $0x98] sm:$0x1]
      %v1460 = vld [vmem:[%s1227 + $0x9c] sm:$0xf]
      %v1461 = vld [vmem:[%s1227 + $0xa0] sm:$0xf]
      %v1462 = vld [vmem:[%s1227 + $0xa4] sm:$0x1]
      %v1463 = vld [vmem:[%s1227 + $0xa8] sm:$0xf]
      %v1464 = vld [vmem:[%s1227 + $0xac] sm:$0xf]
      %v1465 = vld [vmem:[%s1227 + $0xb0] sm:$0x1]
      %v1466 = vld [vmem:[%s1227 + $0xb4] sm:$0xf]
      %v1467 = vld [vmem:[%s1227 + $0xb8] sm:$0xf]
      %v1468 = vld [vmem:[%s1227 + $0xbc] sm:$0x1]
      %v1470 = vshrl.u32 %v1421, 16
      %v1472 = vrot.slane %v1470, 4
      %v1473 = vshll.u32 %v1421, 16
      %v1475 = vrot.slane %v1473, 5
      %v1476 = vor.u32 %v1472, %v1475
      %v1477 = vrot.slane %v1476, 4
      %v1479 = vshll.u32 %v1422, 16
      %v1481 = vrot.slane %v1479, 5
      %v1482 = vsel %vm370, %v1477, %v1481
      %v1483 = vshrl.u32 %v1422, 16
      %v1485 = vrot.slane %v1483, 4
      %v1486 = vor.u32 %v1485, %v1481
      %v1487 = vrot.slane %v1486, 4
      %v1489 = vshll.u32 %v1423, 16
      %v1491 = vrot.slane %v1489, 5
      %v1492 = vsel %vm370, %v1487, %v1491
      %v1494 = vshrl.u32 %v1424, 16
      %v1496 = vrot.slane %v1494, 4
      %v1497 = vshll.u32 %v1424, 16
      %v1499 = vrot.slane %v1497, 5
      %v1500 = vor.u32 %v1496, %v1499
      %v1501 = vrot.slane %v1500, 4
      %v1503 = vshll.u32 %v1425, 16
      %v1505 = vrot.slane %v1503, 5
      %v1506 = vsel %vm370, %v1501, %v1505
      %v1507 = vshrl.u32 %v1425, 16
      %v1509 = vrot.slane %v1507, 4
      %v1510 = vor.u32 %v1509, %v1505
      %v1511 = vrot.slane %v1510, 4
      %v1513 = vshll.u32 %v1426, 16
      %v1515 = vrot.slane %v1513, 5
      %v1516 = vsel %vm370, %v1511, %v1515
      %v1518 = vshrl.u32 %v1427, 16
      %v1520 = vrot.slane %v1518, 4
      %v1521 = vshll.u32 %v1427, 16
      %v1523 = vrot.slane %v1521, 5
      %v1524 = vor.u32 %v1520, %v1523
      %v1525 = vrot.slane %v1524, 4
      %v1527 = vshll.u32 %v1428, 16
      %v1529 = vrot.slane %v1527, 5
      %v1530 = vsel %vm370, %v1525, %v1529
      %v1531 = vshrl.u32 %v1428, 16
      %v1533 = vrot.slane %v1531, 4
      %v1534 = vor.u32 %v1533, %v1529
      %v1535 = vrot.slane %v1534, 4
      %v1537 = vshll.u32 %v1429, 16
      %v1539 = vrot.slane %v1537, 5
      %v1540 = vsel %vm370, %v1535, %v1539
      %v1542 = vshrl.u32 %v1430, 16
      %v1544 = vrot.slane %v1542, 4
      %v1545 = vshll.u32 %v1430, 16
      %v1547 = vrot.slane %v1545, 5
      %v1548 = vor.u32 %v1544, %v1547
      %v1549 = vrot.slane %v1548, 4
      %v1551 = vshll.u32 %v1431, 16
      %v1553 = vrot.slane %v1551, 5
      %v1554 = vsel %vm370, %v1549, %v1553
      %v1555 = vshrl.u32 %v1431, 16
      %v1557 = vrot.slane %v1555, 4
      %v1558 = vor.u32 %v1557, %v1553
      %v1559 = vrot.slane %v1558, 4
      %v1561 = vshll.u32 %v1432, 16
      %v1563 = vrot.slane %v1561, 5
      %v1564 = vsel %vm370, %v1559, %v1563
      %v1566 = vshrl.u32 %v1433, 16
      %v1568 = vrot.slane %v1566, 4
      %v1569 = vshll.u32 %v1433, 16
      %v1571 = vrot.slane %v1569, 5
      %v1572 = vor.u32 %v1568, %v1571
      %v1573 = vrot.slane %v1572, 4
      %v1575 = vshll.u32 %v1434, 16
      %v1577 = vrot.slane %v1575, 5
      %v1578 = vsel %vm370, %v1573, %v1577
      %v1579 = vshrl.u32 %v1434, 16
      %v1581 = vrot.slane %v1579, 4
      %v1582 = vor.u32 %v1581, %v1577
      %v1583 = vrot.slane %v1582, 4
      %v1585 = vshll.u32 %v1435, 16
      %v1587 = vrot.slane %v1585, 5
      %v1588 = vsel %vm370, %v1583, %v1587
      %v1590 = vshrl.u32 %v1436, 16
      %v1592 = vrot.slane %v1590, 4
      %v1593 = vshll.u32 %v1436, 16
      %v1595 = vrot.slane %v1593, 5
      %v1596 = vor.u32 %v1592, %v1595
      %v1597 = vrot.slane %v1596, 4
      %v1599 = vshll.u32 %v1437, 16
      %v1601 = vrot.slane %v1599, 5
      %v1602 = vsel %vm370, %v1597, %v1601
      %v1603 = vshrl.u32 %v1437, 16
      %v1605 = vrot.slane %v1603, 4
      %v1606 = vor.u32 %v1605, %v1601
      %v1607 = vrot.slane %v1606, 4
      %v1609 = vshll.u32 %v1438, 16
      %v1611 = vrot.slane %v1609, 5
      %v1612 = vsel %vm370, %v1607, %v1611
      %v1614 = vshrl.u32 %v1439, 16
      %v1616 = vrot.slane %v1614, 4
      %v1617 = vshll.u32 %v1439, 16
      %v1619 = vrot.slane %v1617, 5
      %v1620 = vor.u32 %v1616, %v1619
      %v1621 = vrot.slane %v1620, 4
      %v1623 = vshll.u32 %v1440, 16
      %v1625 = vrot.slane %v1623, 5
      %v1626 = vsel %vm370, %v1621, %v1625
      %v1627 = vshrl.u32 %v1440, 16
      %v1629 = vrot.slane %v1627, 4
      %v1630 = vor.u32 %v1629, %v1625
      %v1631 = vrot.slane %v1630, 4
      %v1633 = vshll.u32 %v1441, 16
      %v1635 = vrot.slane %v1633, 5
      %v1636 = vsel %vm370, %v1631, %v1635
      %v1638 = vshrl.u32 %v1442, 16
      %v1640 = vrot.slane %v1638, 4
      %v1641 = vshll.u32 %v1442, 16
      %v1643 = vrot.slane %v1641, 5
      %v1644 = vor.u32 %v1640, %v1643
      %v1645 = vrot.slane %v1644, 4
      %v1647 = vshll.u32 %v1443, 16
      %v1649 = vrot.slane %v1647, 5
      %v1650 = vsel %vm370, %v1645, %v1649
      %v1651 = vshrl.u32 %v1443, 16
      %v1653 = vrot.slane %v1651, 4
      %v1654 = vor.u32 %v1653, %v1649
      %v1655 = vrot.slane %v1654, 4
      %v1657 = vshll.u32 %v1444, 16
      %v1659 = vrot.slane %v1657, 5
      %v1660 = vsel %vm370, %v1655, %v1659
      %v1662 = vshrl.u32 %v1445, 16
      %v1664 = vrot.slane %v1662, 4
      %v1665 = vshll.u32 %v1445, 16
      %v1667 = vrot.slane %v1665, 5
      %v1668 = vor.u32 %v1664, %v1667
      %v1669 = vrot.slane %v1668, 4
      %v1671 = vshll.u32 %v1446, 16
      %v1673 = vrot.slane %v1671, 5
      %v1674 = vsel %vm370, %v1669, %v1673
      %v1675 = vshrl.u32 %v1446, 16
      %v1677 = vrot.slane %v1675, 4
      %v1678 = vor.u32 %v1677, %v1673
      %v1679 = vrot.slane %v1678, 4
      %v1681 = vshll.u32 %v1447, 16
      %v1683 = vrot.slane %v1681, 5
      %v1684 = vsel %vm370, %v1679, %v1683
      %v1686 = vshrl.u32 %v1448, 16
      %v1688 = vrot.slane %v1686, 4
      %v1689 = vshll.u32 %v1448, 16
      %v1691 = vrot.slane %v1689, 5
      %v1692 = vor.u32 %v1688, %v1691
      %v1693 = vrot.slane %v1692, 4
      %v1695 = vshll.u32 %v1449, 16
      %v1697 = vrot.slane %v1695, 5
      %v1698 = vsel %vm370, %v1693, %v1697
      %v1699 = vshrl.u32 %v1449, 16
      %v1701 = vrot.slane %v1699, 4
      %v1702 = vor.u32 %v1701, %v1697
      %v1703 = vrot.slane %v1702, 4
      %v1705 = vshll.u32 %v1450, 16
      %v1707 = vrot.slane %v1705, 5
      %v1708 = vsel %vm370, %v1703, %v1707
      %v1710 = vshrl.u32 %v1451, 16
      %v1712 = vrot.slane %v1710, 4
      %v1713 = vshll.u32 %v1451, 16
      %v1715 = vrot.slane %v1713, 5
      %v1716 = vor.u32 %v1712, %v1715
      %v1717 = vrot.slane %v1716, 4
      %v1719 = vshll.u32 %v1452, 16
      %v1721 = vrot.slane %v1719, 5
      %v1722 = vsel %vm370, %v1717, %v1721
      %v1723 = vshrl.u32 %v1452, 16
      %v1725 = vrot.slane %v1723, 4
      %v1726 = vor.u32 %v1725, %v1721
      %v1727 = vrot.slane %v1726, 4
      %v1729 = vshll.u32 %v1453, 16
      %v1731 = vrot.slane %v1729, 5
      %v1732 = vsel %vm370, %v1727, %v1731
      %v1734 = vshrl.u32 %v1454, 16
      %v1736 = vrot.slane %v1734, 4
      %v1737 = vshll.u32 %v1454, 16
      %v1739 = vrot.slane %v1737, 5
      %v1740 = vor.u32 %v1736, %v1739
      %v1741 = vrot.slane %v1740, 4
      %v1743 = vshll.u32 %v1455, 16
      %v1745 = vrot.slane %v1743, 5
      %v1746 = vsel %vm370, %v1741, %v1745
      %v1747 = vshrl.u32 %v1455, 16
      %v1749 = vrot.slane %v1747, 4
      %v1750 = vor.u32 %v1749, %v1745
      %v1751 = vrot.slane %v1750, 4
      %v1753 = vshll.u32 %v1456, 16
      %v1755 = vrot.slane %v1753, 5
      %v1756 = vsel %vm370, %v1751, %v1755
      %v1758 = vshrl.u32 %v1457, 16
      %v1760 = vrot.slane %v1758, 4
      %v1761 = vshll.u32 %v1457, 16
      %v1763 = vrot.slane %v1761, 5
      %v1764 = vor.u32 %v1760, %v1763
      %v1765 = vrot.slane %v1764, 4
      %v1767 = vshll.u32 %v1458, 16
      %v1769 = vrot.slane %v1767, 5
      %v1770 = vsel %vm370, %v1765, %v1769
      %v1771 = vshrl.u32 %v1458, 16
      %v1773 = vrot.slane %v1771, 4
      %v1774 = vor.u32 %v1773, %v1769
      %v1775 = vrot.slane %v1774, 4
      %v1777 = vshll.u32 %v1459, 16
      %v1779 = vrot.slane %v1777, 5
      %v1780 = vsel %vm370, %v1775, %v1779
      %v1782 = vshrl.u32 %v1460, 16
      %v1784 = vrot.slane %v1782, 4
      %v1785 = vshll.u32 %v1460, 16
      %v1787 = vrot.slane %v1785, 5
      %v1788 = vor.u32 %v1784, %v1787
      %v1789 = vrot.slane %v1788, 4
      %v1791 = vshll.u32 %v1461, 16
      %v1793 = vrot.slane %v1791, 5
      %v1794 = vsel %vm370, %v1789, %v1793
      %v1795 = vshrl.u32 %v1461, 16
      %v1797 = vrot.slane %v1795, 4
      %v1798 = vor.u32 %v1797, %v1793
      %v1799 = vrot.slane %v1798, 4
      %v1801 = vshll.u32 %v1462, 16
      %v1803 = vrot.slane %v1801, 5
      %v1804 = vsel %vm370, %v1799, %v1803
      %v1806 = vshrl.u32 %v1463, 16
      %v1808 = vrot.slane %v1806, 4
      %v1809 = vshll.u32 %v1463, 16
      %v1811 = vrot.slane %v1809, 5
      %v1812 = vor.u32 %v1808, %v1811
      %v1813 = vrot.slane %v1812, 4
      %v1815 = vshll.u32 %v1464, 16
      %v1817 = vrot.slane %v1815, 5
      %v1818 = vsel %vm370, %v1813, %v1817
      %v1819 = vshrl.u32 %v1464, 16
      %v1821 = vrot.slane %v1819, 4
      %v1822 = vor.u32 %v1821, %v1817
      %v1823 = vrot.slane %v1822, 4
      %v1825 = vshll.u32 %v1465, 16
      %v1827 = vrot.slane %v1825, 5
      %v1828 = vsel %vm370, %v1823, %v1827
      %v1830 = vshrl.u32 %v1466, 16
      %v1832 = vrot.slane %v1830, 4
      %v1833 = vshll.u32 %v1466, 16
      %v1835 = vrot.slane %v1833, 5
      %v1836 = vor.u32 %v1832, %v1835
      %v1837 = vrot.slane %v1836, 4
      %v1839 = vshll.u32 %v1467, 16
      %v1841 = vrot.slane %v1839, 5
      %v1842 = vsel %vm370, %v1837, %v1841
      %v1843 = vshrl.u32 %v1467, 16
      %v1845 = vrot.slane %v1843, 4
      %v1846 = vor.u32 %v1845, %v1841
      %v1847 = vrot.slane %v1846, 4
      %v1849 = vshll.u32 %v1468, 16
      %v1851 = vrot.slane %v1849, 5
      %v1852 = vsel %vm370, %v1847, %v1851
      %1853 = vrot.lane.b32.xlu0 %v1482, 16
      %v1854 = vpop.permute.xlu0 %1853
      %1855 = vrot.lane.b32.xlu0 %v1492, 16
      %v1856 = vpop.permute.xlu0 %1855
      %1857 = vrot.lane.b32.xlu0 %v1506, 16
      %v1858 = vpop.permute.xlu0 %1857
      %1859 = vrot.lane.b32.xlu0 %v1516, 16
      %v1860 = vpop.permute.xlu0 %1859
      %1861 = vrot.lane.b32.xlu0 %v1530, 16
      %v1862 = vpop.permute.xlu0 %1861
      %1863 = vrot.lane.b32.xlu0 %v1540, 16
      %v1864 = vpop.permute.xlu0 %1863
      %1865 = vrot.lane.b32.xlu0 %v1554, 16
      %v1866 = vpop.permute.xlu0 %1865
      %1867 = vrot.lane.b32.xlu0 %v1564, 16
      %v1868 = vpop.permute.xlu0 %1867
      %1869 = vrot.lane.b32.xlu0 %v1578, 16
      %v1870 = vpop.permute.xlu0 %1869
      %1871 = vrot.lane.b32.xlu0 %v1588, 16
      %v1872 = vpop.permute.xlu0 %1871
      %1873 = vrot.lane.b32.xlu0 %v1602, 16
      %v1874 = vpop.permute.xlu0 %1873
      %1875 = vrot.lane.b32.xlu0 %v1612, 16
      %v1876 = vpop.permute.xlu0 %1875
      %1877 = vrot.lane.b32.xlu0 %v1626, 16
      %v1878 = vpop.permute.xlu0 %1877
      %1879 = vrot.lane.b32.xlu0 %v1636, 16
      %v1880 = vpop.permute.xlu0 %1879
      %1881 = vrot.lane.b32.xlu0 %v1650, 16
      %v1882 = vpop.permute.xlu0 %1881
      %1883 = vrot.lane.b32.xlu0 %v1660, 16
      %v1884 = vpop.permute.xlu0 %1883
      %1885 = vrot.lane.b32.xlu0 %v1674, 16
      %v1886 = vpop.permute.xlu0 %1885
      %1887 = vrot.lane.b32.xlu0 %v1684, 16
      %v1888 = vpop.permute.xlu0 %1887
      %1889 = vrot.lane.b32.xlu0 %v1698, 16
      %v1890 = vpop.permute.xlu0 %1889
      %1891 = vrot.lane.b32.xlu0 %v1708, 16
      %v1892 = vpop.permute.xlu0 %1891
      %1893 = vrot.lane.b32.xlu0 %v1722, 16
      %v1894 = vpop.permute.xlu0 %1893
      %1895 = vrot.lane.b32.xlu0 %v1732, 16
      %v1896 = vpop.permute.xlu0 %1895
      %1897 = vrot.lane.b32.xlu0 %v1746, 16
      %v1898 = vpop.permute.xlu0 %1897
      %1899 = vrot.lane.b32.xlu0 %v1756, 16
      %v1900 = vpop.permute.xlu0 %1899
      %1901 = vrot.lane.b32.xlu0 %v1770, 16
      %v1902 = vpop.permute.xlu0 %1901
      %1903 = vrot.lane.b32.xlu0 %v1780, 16
      %v1904 = vpop.permute.xlu0 %1903
      %1905 = vrot.lane.b32.xlu0 %v1794, 16
      %v1906 = vpop.permute.xlu0 %1905
      %1907 = vrot.lane.b32.xlu0 %v1804, 16
      %v1908 = vpop.permute.xlu0 %1907
      %1909 = vrot.lane.b32.xlu0 %v1818, 16
      %v1910 = vpop.permute.xlu0 %1909
      %1911 = vrot.lane.b32.xlu0 %v1828, 16
      %v1912 = vpop.permute.xlu0 %1911
      %1913 = vrot.lane.b32.xlu0 %v1842, 16
      %v1914 = vpop.permute.xlu0 %1913
      %1915 = vrot.lane.b32.xlu0 %v1852, 16
      %v1916 = vpop.permute.xlu0 %1915
      %vm1949 = vcmask 158848
      %1950 = vst.msk [vmem:[#allocation2] sm:$0xf] %vm1949, %v1854
      %1951 = vst.msk [vmem:[#allocation2 + $0x4] sm:$0xf] %vm1949, %v1856
      %1952 = vst.msk [vmem:[#allocation2 + $0x8] sm:$0xf] %vm1949, %v1858
      %1953 = vst.msk [vmem:[#allocation2 + $0xc] sm:$0xf] %vm1949, %v1860
      %1954 = vst.msk [vmem:[#allocation2 + $0x10] sm:$0xf] %vm1949, %v1862
      %1955 = vst.msk [vmem:[#allocation2 + $0x14] sm:$0xf] %vm1949, %v1864
      %1956 = vst.msk [vmem:[#allocation2 + $0x18] sm:$0xf] %vm1949, %v1866
      %1957 = vst.msk [vmem:[#allocation2 + $0x1c] sm:$0xf] %vm1949, %v1868
      %1958 = vst.msk [vmem:[#allocation2 + $0x20] sm:$0xf] %vm1949, %v1870
      %1959 = vst.msk [vmem:[#allocation2 + $0x24] sm:$0xf] %vm1949, %v1872
      %1960 = vst.msk [vmem:[#allocation2 + $0x28] sm:$0xf] %vm1949, %v1874
      %1961 = vst.msk [vmem:[#allocation2 + $0x2c] sm:$0xf] %vm1949, %v1876
      %1962 = vst.msk [vmem:[#allocation2 + $0x30] sm:$0xf] %vm1949, %v1878
      %1963 = vst.msk [vmem:[#allocation2 + $0x34] sm:$0xf] %vm1949, %v1880
      %1964 = vst.msk [vmem:[#allocation2 + $0x38] sm:$0xf] %vm1949, %v1882
      %1965 = vst.msk [vmem:[#allocation2 + $0x3c] sm:$0xf] %vm1949, %v1884
      %1966 = vst.msk [vmem:[#allocation2 + $0x40] sm:$0xf] %vm1949, %v1886
      %1967 = vst.msk [vmem:[#allocation2 + $0x44] sm:$0xf] %vm1949, %v1888
      %1968 = vst.msk [vmem:[#allocation2 + $0x48] sm:$0xf] %vm1949, %v1890
      %1969 = vst.msk [vmem:[#allocation2 + $0x4c] sm:$0xf] %vm1949, %v1892
      %1970 = vst.msk [vmem:[#allocation2 + $0x50] sm:$0xf] %vm1949, %v1894
      %1971 = vst.msk [vmem:[#allocation2 + $0x54] sm:$0xf] %vm1949, %v1896
      %1972 = vst.msk [vmem:[#allocation2 + $0x58] sm:$0xf] %vm1949, %v1898
      %1973 = vst.msk [vmem:[#allocation2 + $0x5c] sm:$0xf] %vm1949, %v1900
      %1974 = vst.msk [vmem:[#allocation2 + $0x60] sm:$0xf] %vm1949, %v1902
      %1975 = vst.msk [vmem:[#allocation2 + $0x64] sm:$0xf] %vm1949, %v1904
      %1976 = vst.msk [vmem:[#allocation2 + $0x68] sm:$0xf] %vm1949, %v1906
      %1977 = vst.msk [vmem:[#allocation2 + $0x6c] sm:$0xf] %vm1949, %v1908
      %1978 = vst.msk [vmem:[#allocation2 + $0x70] sm:$0xf] %vm1949, %v1910
      %1979 = vst.msk [vmem:[#allocation2 + $0x74] sm:$0xf] %vm1949, %v1912
      %1980 = vst.msk [vmem:[#allocation2 + $0x78] sm:$0xf] %vm1949, %v1914
      %1981 = vst.msk [vmem:[#allocation2 + $0x7c] sm:$0xf] %vm1949, %v1916
      %v1982 = vld [vmem:[%s1227] sm:$0xe]
      %v1983 = vld [vmem:[%s1227 + $0x4] sm:$0xf]
      %v1984 = vld [vmem:[%s1227 + $0x8] sm:$0x1]
      %v1985 = vld [vmem:[%s1227 + $0xc] sm:$0xe]
      %v1986 = vld [vmem:[%s1227 + $0x10] sm:$0xf]
      %v1987 = vld [vmem:[%s1227 + $0x14] sm:$0x1]
      %v1988 = vld [vmem:[%s1227 + $0x18] sm:$0xe]
      %v1989 = vld [vmem:[%s1227 + $0x1c] sm:$0xf]
      %v1990 = vld [vmem:[%s1227 + $0x20] sm:$0x1]
      %v1991 = vld [vmem:[%s1227 + $0x24] sm:$0xe]
      %v1992 = vld [vmem:[%s1227 + $0x28] sm:$0xf]
      %v1993 = vld [vmem:[%s1227 + $0x2c] sm:$0x1]
      %v1994 = vld [vmem:[%s1227 + $0x30] sm:$0xe]
      %v1995 = vld [vmem:[%s1227 + $0x34] sm:$0xf]
      %v1996 = vld [vmem:[%s1227 + $0x38] sm:$0x1]
      %v1997 = vld [vmem:[%s1227 + $0x3c] sm:$0xe]
      %v1998 = vld [vmem:[%s1227 + $0x40] sm:$0xf]
      %v1999 = vld [vmem:[%s1227 + $0x44] sm:$0x1]
      %v2000 = vld [vmem:[%s1227 + $0x48] sm:$0xe]
      %v2001 = vld [vmem:[%s1227 + $0x4c] sm:$0xf]
      %v2002 = vld [vmem:[%s1227 + $0x50] sm:$0x1]
      %v2003 = vld [vmem:[%s1227 + $0x54] sm:$0xe]
      %v2004 = vld [vmem:[%s1227 + $0x58] sm:$0xf]
      %v2005 = vld [vmem:[%s1227 + $0x5c] sm:$0x1]
      %v2006 = vld [vmem:[%s1227 + $0x60] sm:$0xe]
      %v2007 = vld [vmem:[%s1227 + $0x64] sm:$0xf]
      %v2008 = vld [vmem:[%s1227 + $0x68] sm:$0x1]
      %v2009 = vld [vmem:[%s1227 + $0x6c] sm:$0xe]
      %v2010 = vld [vmem:[%s1227 + $0x70] sm:$0xf]
      %v2011 = vld [vmem:[%s1227 + $0x74] sm:$0x1]
      %v2012 = vld [vmem:[%s1227 + $0x78] sm:$0xe]
      %v2013 = vld [vmem:[%s1227 + $0x7c] sm:$0xf]
      %v2014 = vld [vmem:[%s1227 + $0x80] sm:$0x1]
      %v2015 = vld [vmem:[%s1227 + $0x84] sm:$0xe]
      %v2016 = vld [vmem:[%s1227 + $0x88] sm:$0xf]
      %v2017 = vld [vmem:[%s1227 + $0x8c] sm:$0x1]
      %v2018 = vld [vmem:[%s1227 + $0x90] sm:$0xe]
      %v2019 = vld [vmem:[%s1227 + $0x94] sm:$0xf]
      %v2020 = vld [vmem:[%s1227 + $0x98] sm:$0x1]
      %v2021 = vld [vmem:[%s1227 + $0x9c] sm:$0xe]
      %v2022 = vld [vmem:[%s1227 + $0xa0] sm:$0xf]
      %v2023 = vld [vmem:[%s1227 + $0xa4] sm:$0x1]
      %v2024 = vld [vmem:[%s1227 + $0xa8] sm:$0xe]
      %v2025 = vld [vmem:[%s1227 + $0xac] sm:$0xf]
      %v2026 = vld [vmem:[%s1227 + $0xb0] sm:$0x1]
      %v2027 = vld [vmem:[%s1227 + $0xb4] sm:$0xe]
      %v2028 = vld [vmem:[%s1227 + $0xb8] sm:$0xf]
      %v2029 = vld [vmem:[%s1227 + $0xbc] sm:$0x1]
      %v2078 = vrot.slane %v1982, 5
      %v2079 = vrot.slane %v2078, 4
      %v2080 = vrot.slane %v1983, 5
      %v2081 = vsel %vm982, %v2079, %v2080
      %v2082 = vrot.slane %v2080, 4
      %v2083 = vrot.slane %v1984, 5
      %v2084 = vsel %vm982, %v2082, %v2083
      %v2085 = vrot.slane %v1985, 5
      %v2086 = vrot.slane %v2085, 4
      %v2087 = vrot.slane %v1986, 5
      %v2088 = vsel %vm982, %v2086, %v2087
      %v2089 = vrot.slane %v2087, 4
      %v2090 = vrot.slane %v1987, 5
      %v2091 = vsel %vm982, %v2089, %v2090
      %v2092 = vrot.slane %v1988, 5
      %v2093 = vrot.slane %v2092, 4
      %v2094 = vrot.slane %v1989, 5
      %v2095 = vsel %vm982, %v2093, %v2094
      %v2096 = vrot.slane %v2094, 4
      %v2097 = vrot.slane %v1990, 5
      %v2098 = vsel %vm982, %v2096, %v2097
      %v2099 = vrot.slane %v1991, 5
      %v2100 = vrot.slane %v2099, 4
      %v2101 = vrot.slane %v1992, 5
      %v2102 = vsel %vm982, %v2100, %v2101
      %v2103 = vrot.slane %v2101, 4
      %v2104 = vrot.slane %v1993, 5
      %v2105 = vsel %vm982, %v2103, %v2104
      %v2106 = vrot.slane %v1994, 5
      %v2107 = vrot.slane %v2106, 4
      %v2108 = vrot.slane %v1995, 5
      %v2109 = vsel %vm982, %v2107, %v2108
      %v2110 = vrot.slane %v2108, 4
      %v2111 = vrot.slane %v1996, 5
      %v2112 = vsel %vm982, %v2110, %v2111
      %v2113 = vrot.slane %v1997, 5
      %v2114 = vrot.slane %v2113, 4
      %v2115 = vrot.slane %v1998, 5
      %v2116 = vsel %vm982, %v2114, %v2115
      %v2117 = vrot.slane %v2115, 4
      %v2118 = vrot.slane %v1999, 5
      %v2119 = vsel %vm982, %v2117, %v2118
      %v2120 = vrot.slane %v2000, 5
      %v2121 = vrot.slane %v2120, 4
      %v2122 = vrot.slane %v2001, 5
      %v2123 = vsel %vm982, %v2121, %v2122
      %v2124 = vrot.slane %v2122, 4
      %v2125 = vrot.slane %v2002, 5
      %v2126 = vsel %vm982, %v2124, %v2125
      %v2127 = vrot.slane %v2003, 5
      %v2128 = vrot.slane %v2127, 4
      %v2129 = vrot.slane %v2004, 5
      %v2130 = vsel %vm982, %v2128, %v2129
      %v2131 = vrot.slane %v2129, 4
      %v2132 = vrot.slane %v2005, 5
      %v2133 = vsel %vm982, %v2131, %v2132
      %v2134 = vrot.slane %v2006, 5
      %v2135 = vrot.slane %v2134, 4
      %v2136 = vrot.slane %v2007, 5
      %v2137 = vsel %vm982, %v2135, %v2136
      %v2138 = vrot.slane %v2136, 4
      %v2139 = vrot.slane %v2008, 5
      %v2140 = vsel %vm982, %v2138, %v2139
      %v2141 = vrot.slane %v2009, 5
      %v2142 = vrot.slane %v2141, 4
      %v2143 = vrot.slane %v2010, 5
      %v2144 = vsel %vm982, %v2142, %v2143
      %v2145 = vrot.slane %v2143, 4
      %v2146 = vrot.slane %v2011, 5
      %v2147 = vsel %vm982, %v2145, %v2146
      %v2148 = vrot.slane %v2012, 5
      %v2149 = vrot.slane %v2148, 4
      %v2150 = vrot.slane %v2013, 5
      %v2151 = vsel %vm982, %v2149, %v2150
      %v2152 = vrot.slane %v2150, 4
      %v2153 = vrot.slane %v2014, 5
      %v2154 = vsel %vm982, %v2152, %v2153
      %v2155 = vrot.slane %v2015, 5
      %v2156 = vrot.slane %v2155, 4
      %v2157 = vrot.slane %v2016, 5
      %v2158 = vsel %vm982, %v2156, %v2157
      %v2159 = vrot.slane %v2157, 4
      %v2160 = vrot.slane %v2017, 5
      %v2161 = vsel %vm982, %v2159, %v2160
      %v2162 = vrot.slane %v2018, 5
      %v2163 = vrot.slane %v2162, 4
      %v2164 = vrot.slane %v2019, 5
      %v2165 = vsel %vm982, %v2163, %v2164
      %v2166 = vrot.slane %v2164, 4
      %v2167 = vrot.slane %v2020, 5
      %v2168 = vsel %vm982, %v2166, %v2167
      %v2169 = vrot.slane %v2021, 5
      %v2170 = vrot.slane %v2169, 4
      %v2171 = vrot.slane %v2022, 5
      %v2172 = vsel %vm982, %v2170, %v2171
      %v2173 = vrot.slane %v2171, 4
      %v2174 = vrot.slane %v2023, 5
      %v2175 = vsel %vm982, %v2173, %v2174
      %v2176 = vrot.slane %v2024, 5
      %v2177 = vrot.slane %v2176, 4
      %v2178 = vrot.slane %v2025, 5
      %v2179 = vsel %vm982, %v2177, %v2178
      %v2180 = vrot.slane %v2178, 4
      %v2181 = vrot.slane %v2026, 5
      %v2182 = vsel %vm982, %v2180, %v2181
      %v2183 = vrot.slane %v2027, 5
      %v2184 = vrot.slane %v2183, 4
      %v2185 = vrot.slane %v2028, 5
      %v2186 = vsel %vm982, %v2184, %v2185
      %v2187 = vrot.slane %v2185, 4
      %v2188 = vrot.slane %v2029, 5
      %v2189 = vsel %vm982, %v2187, %v2188
      %2190 = vrot.lane.b32.xlu0 %v2081, 20
      %v2191 = vpop.permute.xlu0 %2190
      %2192 = vrot.lane.b32.xlu0 %v2084, 20
      %v2193 = vpop.permute.xlu0 %2192
      %2194 = vrot.lane.b32.xlu0 %v2088, 20
      %v2195 = vpop.permute.xlu0 %2194
      %2196 = vrot.lane.b32.xlu0 %v2091, 20
      %v2197 = vpop.permute.xlu0 %2196
      %2198 = vrot.lane.b32.xlu0 %v2095, 20
      %v2199 = vpop.permute.xlu0 %2198
      %2200 = vrot.lane.b32.xlu0 %v2098, 20
      %v2201 = vpop.permute.xlu0 %2200
      %2202 = vrot.lane.b32.xlu0 %v2102, 20
      %v2203 = vpop.permute.xlu0 %2202
      %2204 = vrot.lane.b32.xlu0 %v2105, 20
      %v2205 = vpop.permute.xlu0 %2204
      %2206 = vrot.lane.b32.xlu0 %v2109, 20
      %v2207 = vpop.permute.xlu0 %2206
      %2208 = vrot.lane.b32.xlu0 %v2112, 20
      %v2209 = vpop.permute.xlu0 %2208
      %2210 = vrot.lane.b32.xlu0 %v2116, 20
      %v2211 = vpop.permute.xlu0 %2210
      %2212 = vrot.lane.b32.xlu0 %v2119, 20
      %v2213 = vpop.permute.xlu0 %2212
      %2214 = vrot.lane.b32.xlu0 %v2123, 20
      %v2215 = vpop.permute.xlu0 %2214
      %2216 = vrot.lane.b32.xlu0 %v2126, 20
      %v2217 = vpop.permute.xlu0 %2216
      %2218 = vrot.lane.b32.xlu0 %v2130, 20
      %v2219 = vpop.permute.xlu0 %2218
      %2220 = vrot.lane.b32.xlu0 %v2133, 20
      %v2221 = vpop.permute.xlu0 %2220
      %2222 = vrot.lane.b32.xlu0 %v2137, 20
      %v2223 = vpop.permute.xlu0 %2222
      %2224 = vrot.lane.b32.xlu0 %v2140, 20
      %v2225 = vpop.permute.xlu0 %2224
      %2226 = vrot.lane.b32.xlu0 %v2144, 20
      %v2227 = vpop.permute.xlu0 %2226
      %2228 = vrot.lane.b32.xlu0 %v2147, 20
      %v2229 = vpop.permute.xlu0 %2228
      %2230 = vrot.lane.b32.xlu0 %v2151, 20
      %v2231 = vpop.permute.xlu0 %2230
      %2232 = vrot.lane.b32.xlu0 %v2154, 20
      %v2233 = vpop.permute.xlu0 %2232
      %2234 = vrot.lane.b32.xlu0 %v2158, 20
      %v2235 = vpop.permute.xlu0 %2234
      %2236 = vrot.lane.b32.xlu0 %v2161, 20
      %v2237 = vpop.permute.xlu0 %2236
      %2238 = vrot.lane.b32.xlu0 %v2165, 20
      %v2239 = vpop.permute.xlu0 %2238
      %2240 = vrot.lane.b32.xlu0 %v2168, 20
      %v2241 = vpop.permute.xlu0 %2240
      %2242 = vrot.lane.b32.xlu0 %v2172, 20
      %v2243 = vpop.permute.xlu0 %2242
      %2244 = vrot.lane.b32.xlu0 %v2175, 20
      %v2245 = vpop.permute.xlu0 %2244
      %2246 = vrot.lane.b32.xlu0 %v2179, 20
      %v2247 = vpop.permute.xlu0 %2246
      %2248 = vrot.lane.b32.xlu0 %v2182, 20
      %v2249 = vpop.permute.xlu0 %2248
      %2250 = vrot.lane.b32.xlu0 %v2186, 20
      %v2251 = vpop.permute.xlu0 %2250
      %2252 = vrot.lane.b32.xlu0 %v2189, 20
      %v2253 = vpop.permute.xlu0 %2252
      %vm2286 = vcmask 191648
      %2287 = vst.msk [vmem:[#allocation2] sm:$0xf] %vm2286, %v2191
      %2288 = vst.msk [vmem:[#allocation2 + $0x4] sm:$0xf] %vm2286, %v2193
      %2289 = vst.msk [vmem:[#allocation2 + $0x8] sm:$0xf] %vm2286, %v2195
      %2290 = vst.msk [vmem:[#allocation2 + $0xc] sm:$0xf] %vm2286, %v2197
      %2291 = vst.msk [vmem:[#allocation2 + $0x10] sm:$0xf] %vm2286, %v2199
      %2292 = vst.msk [vmem:[#allocation2 + $0x14] sm:$0xf] %vm2286, %v2201
      %2293 = vst.msk [vmem:[#allocation2 + $0x18] sm:$0xf] %vm2286, %v2203
      %2294 = vst.msk [vmem:[#allocation2 + $0x1c] sm:$0xf] %vm2286, %v2205
      %2295 = vst.msk [vmem:[#allocation2 + $0x20] sm:$0xf] %vm2286, %v2207
      %2296 = vst.msk [vmem:[#allocation2 + $0x24] sm:$0xf] %vm2286, %v2209
      %2297 = vst.msk [vmem:[#allocation2 + $0x28] sm:$0xf] %vm2286, %v2211
      %2298 = vst.msk [vmem:[#allocation2 + $0x2c] sm:$0xf] %vm2286, %v2213
      %2299 = vst.msk [vmem:[#allocation2 + $0x30] sm:$0xf] %vm2286, %v2215
      %2300 = vst.msk [vmem:[#allocation2 + $0x34] sm:$0xf] %vm2286, %v2217
      %2301 = vst.msk [vmem:[#allocation2 + $0x38] sm:$0xf] %vm2286, %v2219
      %2302 = vst.msk [vmem:[#allocation2 + $0x3c] sm:$0xf] %vm2286, %v2221
      %2303 = vst.msk [vmem:[#allocation2 + $0x40] sm:$0xf] %vm2286, %v2223
      %2304 = vst.msk [vmem:[#allocation2 + $0x44] sm:$0xf] %vm2286, %v2225
      %2305 = vst.msk [vmem:[#allocation2 + $0x48] sm:$0xf] %vm2286, %v2227
      %2306 = vst.msk [vmem:[#allocation2 + $0x4c] sm:$0xf] %vm2286, %v2229
      %2307 = vst.msk [vmem:[#allocation2 + $0x50] sm:$0xf] %vm2286, %v2231
      %2308 = vst.msk [vmem:[#allocation2 + $0x54] sm:$0xf] %vm2286, %v2233
      %2309 = vst.msk [vmem:[#allocation2 + $0x58] sm:$0xf] %vm2286, %v2235
      %2310 = vst.msk [vmem:[#allocation2 + $0x5c] sm:$0xf] %vm2286, %v2237
      %2311 = vst.msk [vmem:[#allocation2 + $0x60] sm:$0xf] %vm2286, %v2239
      %2312 = vst.msk [vmem:[#allocation2 + $0x64] sm:$0xf] %vm2286, %v2241
      %2313 = vst.msk [vmem:[#allocation2 + $0x68] sm:$0xf] %vm2286, %v2243
      %2314 = vst.msk [vmem:[#allocation2 + $0x6c] sm:$0xf] %vm2286, %v2245
      %2315 = vst.msk [vmem:[#allocation2 + $0x70] sm:$0xf] %vm2286, %v2247
      %2316 = vst.msk [vmem:[#allocation2 + $0x74] sm:$0xf] %vm2286, %v2249
      %2317 = vst.msk [vmem:[#allocation2 + $0x78] sm:$0xf] %vm2286, %v2251
      %2318 = vst.msk [vmem:[#allocation2 + $0x7c] sm:$0xf] %vm2286, %v2253
      %s2319 = sadd.s32 %s251, 2
      %s2320 = smul.u32 %s2319, 3
      %s2321 = smul.addr %s2320, 4
      %s2322 = scalar_lea.vmem %s238, %s2321
      %v2323 = vld [vmem:[%s2322] sm:$0xf]
      %v2324 = vld [vmem:[%s2322 + $0x4] sm:$0xf]
      %v2325 = vld [vmem:[%s2322 + $0xc] sm:$0xf]
      %v2326 = vld [vmem:[%s2322 + $0x10] sm:$0xf]
      %v2327 = vld [vmem:[%s2322 + $0x18] sm:$0xf]
      %v2328 = vld [vmem:[%s2322 + $0x1c] sm:$0xf]
      %v2329 = vld [vmem:[%s2322 + $0x24] sm:$0xf]
      %v2330 = vld [vmem:[%s2322 + $0x28] sm:$0xf]
      %v2331 = vld [vmem:[%s2322 + $0x30] sm:$0xf]
      %v2332 = vld [vmem:[%s2322 + $0x34] sm:$0xf]
      %v2333 = vld [vmem:[%s2322 + $0x3c] sm:$0xf]
      %v2334 = vld [vmem:[%s2322 + $0x40] sm:$0xf]
      %v2335 = vld [vmem:[%s2322 + $0x48] sm:$0xf]
      %v2336 = vld [vmem:[%s2322 + $0x4c] sm:$0xf]
      %v2337 = vld [vmem:[%s2322 + $0x54] sm:$0xf]
      %v2338 = vld [vmem:[%s2322 + $0x58] sm:$0xf]
      %v2339 = vld [vmem:[%s2322 + $0x60] sm:$0xf]
      %v2340 = vld [vmem:[%s2322 + $0x64] sm:$0xf]
      %v2341 = vld [vmem:[%s2322 + $0x6c] sm:$0xf]
      %v2342 = vld [vmem:[%s2322 + $0x70] sm:$0xf]
      %v2343 = vld [vmem:[%s2322 + $0x78] sm:$0xf]
      %v2344 = vld [vmem:[%s2322 + $0x7c] sm:$0xf]
      %v2345 = vld [vmem:[%s2322 + $0x84] sm:$0xf]
      %v2346 = vld [vmem:[%s2322 + $0x88] sm:$0xf]
      %v2347 = vld [vmem:[%s2322 + $0x90] sm:$0xf]
      %v2348 = vld [vmem:[%s2322 + $0x94] sm:$0xf]
      %v2349 = vld [vmem:[%s2322 + $0x9c] sm:$0xf]
      %v2350 = vld [vmem:[%s2322 + $0xa0] sm:$0xf]
      %v2351 = vld [vmem:[%s2322 + $0xa8] sm:$0xf]
      %v2352 = vld [vmem:[%s2322 + $0xac] sm:$0xf]
      %v2353 = vld [vmem:[%s2322 + $0xb4] sm:$0xf]
      %v2354 = vld [vmem:[%s2322 + $0xb8] sm:$0xf]
      %2387 = vrot.lane.b32.xlu0 %v2323, 24
      %v2388 = vpop.permute.xlu0 %2387
      %2389 = vrot.lane.b32.xlu0 %v2324, 24
      %v2390 = vpop.permute.xlu0 %2389
      %2391 = vrot.lane.b32.xlu0 %v2325, 24
      %v2392 = vpop.permute.xlu0 %2391
      %2393 = vrot.lane.b32.xlu0 %v2326, 24
      %v2394 = vpop.permute.xlu0 %2393
      %2395 = vrot.lane.b32.xlu0 %v2327, 24
      %v2396 = vpop.permute.xlu0 %2395
      %2397 = vrot.lane.b32.xlu0 %v2328, 24
      %v2398 = vpop.permute.xlu0 %2397
      %2399 = vrot.lane.b32.xlu0 %v2329, 24
      %v2400 = vpop.permute.xlu0 %2399
      %2401 = vrot.lane.b32.xlu0 %v2330, 24
      %v2402 = vpop.permute.xlu0 %2401
      %2403 = vrot.lane.b32.xlu0 %v2331, 24
      %v2404 = vpop.permute.xlu0 %2403
      %2405 = vrot.lane.b32.xlu0 %v2332, 24
      %v2406 = vpop.permute.xlu0 %2405
      %2407 = vrot.lane.b32.xlu0 %v2333, 24
      %v2408 = vpop.permute.xlu0 %2407
      %2409 = vrot.lane.b32.xlu0 %v2334, 24
      %v2410 = vpop.permute.xlu0 %2409
      %2411 = vrot.lane.b32.xlu0 %v2335, 24
      %v2412 = vpop.permute.xlu0 %2411
      %2413 = vrot.lane.b32.xlu0 %v2336, 24
      %v2414 = vpop.permute.xlu0 %2413
      %2415 = vrot.lane.b32.xlu0 %v2337, 24
      %v2416 = vpop.permute.xlu0 %2415
      %2417 = vrot.lane.b32.xlu0 %v2338, 24
      %v2418 = vpop.permute.xlu0 %2417
      %2419 = vrot.lane.b32.xlu0 %v2339, 24
      %v2420 = vpop.permute.xlu0 %2419
      %2421 = vrot.lane.b32.xlu0 %v2340, 24
      %v2422 = vpop.permute.xlu0 %2421
      %2423 = vrot.lane.b32.xlu0 %v2341, 24
      %v2424 = vpop.permute.xlu0 %2423
      %2425 = vrot.lane.b32.xlu0 %v2342, 24
      %v2426 = vpop.permute.xlu0 %2425
      %2427 = vrot.lane.b32.xlu0 %v2343, 24
      %v2428 = vpop.permute.xlu0 %2427
      %2429 = vrot.lane.b32.xlu0 %v2344, 24
      %v2430 = vpop.permute.xlu0 %2429
      %2431 = vrot.lane.b32.xlu0 %v2345, 24
      %v2432 = vpop.permute.xlu0 %2431
      %2433 = vrot.lane.b32.xlu0 %v2346, 24
      %v2434 = vpop.permute.xlu0 %2433
      %2435 = vrot.lane.b32.xlu0 %v2347, 24
      %v2436 = vpop.permute.xlu0 %2435
      %2437 = vrot.lane.b32.xlu0 %v2348, 24
      %v2438 = vpop.permute.xlu0 %2437
      %2439 = vrot.lane.b32.xlu0 %v2349, 24
      %v2440 = vpop.permute.xlu0 %2439
      %2441 = vrot.lane.b32.xlu0 %v2350, 24
      %v2442 = vpop.permute.xlu0 %2441
      %2443 = vrot.lane.b32.xlu0 %v2351, 24
      %v2444 = vpop.permute.xlu0 %2443
      %2445 = vrot.lane.b32.xlu0 %v2352, 24
      %v2446 = vpop.permute.xlu0 %2445
      %2447 = vrot.lane.b32.xlu0 %v2353, 24
      %v2448 = vpop.permute.xlu0 %2447
      %2449 = vrot.lane.b32.xlu0 %v2354, 24
      %v2450 = vpop.permute.xlu0 %2449
      %vm2483 = vcmask 224448
      %2484 = vst.msk [vmem:[#allocation2] sm:$0xf] %vm2483, %v2388
      %2485 = vst.msk [vmem:[#allocation2 + $0x4] sm:$0xf] %vm2483, %v2390
      %2486 = vst.msk [vmem:[#allocation2 + $0x8] sm:$0xf] %vm2483, %v2392
      %2487 = vst.msk [vmem:[#allocation2 + $0xc] sm:$0xf] %vm2483, %v2394
      %2488 = vst.msk [vmem:[#allocation2 + $0x10] sm:$0xf] %vm2483, %v2396
      %2489 = vst.msk [vmem:[#allocation2 + $0x14] sm:$0xf] %vm2483, %v2398
      %2490 = vst.msk [vmem:[#allocation2 + $0x18] sm:$0xf] %vm2483, %v2400
      %2491 = vst.msk [vmem:[#allocation2 + $0x1c] sm:$0xf] %vm2483, %v2402
      %2492 = vst.msk [vmem:[#allocation2 + $0x20] sm:$0xf] %vm2483, %v2404
      %2493 = vst.msk [vmem:[#allocation2 + $0x24] sm:$0xf] %vm2483, %v2406
      %2494 = vst.msk [vmem:[#allocation2 + $0x28] sm:$0xf] %vm2483, %v2408
      %2495 = vst.msk [vmem:[#allocation2 + $0x2c] sm:$0xf] %vm2483, %v2410
      %2496 = vst.msk [vmem:[#allocation2 + $0x30] sm:$0xf] %vm2483, %v2412
      %2497 = vst.msk [vmem:[#allocation2 + $0x34] sm:$0xf] %vm2483, %v2414
      %2498 = vst.msk [vmem:[#allocation2 + $0x38] sm:$0xf] %vm2483, %v2416
      %2499 = vst.msk [vmem:[#allocation2 + $0x3c] sm:$0xf] %vm2483, %v2418
      %2500 = vst.msk [vmem:[#allocation2 + $0x40] sm:$0xf] %vm2483, %v2420
      %2501 = vst.msk [vmem:[#allocation2 + $0x44] sm:$0xf] %vm2483, %v2422
      %2502 = vst.msk [vmem:[#allocation2 + $0x48] sm:$0xf] %vm2483, %v2424
      %2503 = vst.msk [vmem:[#allocation2 + $0x4c] sm:$0xf] %vm2483, %v2426
      %2504 = vst.msk [vmem:[#allocation2 + $0x50] sm:$0xf] %vm2483, %v2428
      %2505 = vst.msk [vmem:[#allocation2 + $0x54] sm:$0xf] %vm2483, %v2430
      %2506 = vst.msk [vmem:[#allocation2 + $0x58] sm:$0xf] %vm2483, %v2432
      %2507 = vst.msk [vmem:[#allocation2 + $0x5c] sm:$0xf] %vm2483, %v2434
      %2508 = vst.msk [vmem:[#allocation2 + $0x60] sm:$0xf] %vm2483, %v2436
      %2509 = vst.msk [vmem:[#allocation2 + $0x64] sm:$0xf] %vm2483, %v2438
      %2510 = vst.msk [vmem:[#allocation2 + $0x68] sm:$0xf] %vm2483, %v2440
      %2511 = vst.msk [vmem:[#allocation2 + $0x6c] sm:$0xf] %vm2483, %v2442
      %2512 = vst.msk [vmem:[#allocation2 + $0x70] sm:$0xf] %vm2483, %v2444
      %2513 = vst.msk [vmem:[#allocation2 + $0x74] sm:$0xf] %vm2483, %v2446
      %2514 = vst.msk [vmem:[#allocation2 + $0x78] sm:$0xf] %vm2483, %v2448
      %2515 = vst.msk [vmem:[#allocation2 + $0x7c] sm:$0xf] %vm2483, %v2450
      %v2516 = vld [vmem:[%s2322] sm:$0xf]
      %v2517 = vld [vmem:[%s2322 + $0x4] sm:$0xf]
      %v2518 = vld [vmem:[%s2322 + $0x8] sm:$0x1]
      %v2519 = vld [vmem:[%s2322 + $0xc] sm:$0xf]
      %v2520 = vld [vmem:[%s2322 + $0x10] sm:$0xf]
      %v2521 = vld [vmem:[%s2322 + $0x14] sm:$0x1]
      %v2522 = vld [vmem:[%s2322 + $0x18] sm:$0xf]
      %v2523 = vld [vmem:[%s2322 + $0x1c] sm:$0xf]
      %v2524 = vld [vmem:[%s2322 + $0x20] sm:$0x1]
      %v2525 = vld [vmem:[%s2322 + $0x24] sm:$0xf]
      %v2526 = vld [vmem:[%s2322 + $0x28] sm:$0xf]
      %v2527 = vld [vmem:[%s2322 + $0x2c] sm:$0x1]
      %v2528 = vld [vmem:[%s2322 + $0x30] sm:$0xf]
      %v2529 = vld [vmem:[%s2322 + $0x34] sm:$0xf]
      %v2530 = vld [vmem:[%s2322 + $0x38] sm:$0x1]
      %v2531 = vld [vmem:[%s2322 + $0x3c] sm:$0xf]
      %v2532 = vld [vmem:[%s2322 + $0x40] sm:$0xf]
      %v2533 = vld [vmem:[%s2322 + $0x44] sm:$0x1]
      %v2534 = vld [vmem:[%s2322 + $0x48] sm:$0xf]
      %v2535 = vld [vmem:[%s2322 + $0x4c] sm:$0xf]
      %v2536 = vld [vmem:[%s2322 + $0x50] sm:$0x1]
      %v2537 = vld [vmem:[%s2322 + $0x54] sm:$0xf]
      %v2538 = vld [vmem:[%s2322 + $0x58] sm:$0xf]
      %v2539 = vld [vmem:[%s2322 + $0x5c] sm:$0x1]
      %v2540 = vld [vmem:[%s2322 + $0x60] sm:$0xf]
      %v2541 = vld [vmem:[%s2322 + $0x64] sm:$0xf]
      %v2542 = vld [vmem:[%s2322 + $0x68] sm:$0x1]
      %v2543 = vld [vmem:[%s2322 + $0x6c] sm:$0xf]
      %v2544 = vld [vmem:[%s2322 + $0x70] sm:$0xf]
      %v2545 = vld [vmem:[%s2322 + $0x74] sm:$0x1]
      %v2546 = vld [vmem:[%s2322 + $0x78] sm:$0xf]
      %v2547 = vld [vmem:[%s2322 + $0x7c] sm:$0xf]
      %v2548 = vld [vmem:[%s2322 + $0x80] sm:$0x1]
      %v2549 = vld [vmem:[%s2322 + $0x84] sm:$0xf]
      %v2550 = vld [vmem:[%s2322 + $0x88] sm:$0xf]
      %v2551 = vld [vmem:[%s2322 + $0x8c] sm:$0x1]
      %v2552 = vld [vmem:[%s2322 + $0x90] sm:$0xf]
      %v2553 = vld [vmem:[%s2322 + $0x94] sm:$0xf]
      %v2554 = vld [vmem:[%s2322 + $0x98] sm:$0x1]
      %v2555 = vld [vmem:[%s2322 + $0x9c] sm:$0xf]
      %v2556 = vld [vmem:[%s2322 + $0xa0] sm:$0xf]
      %v2557 = vld [vmem:[%s2322 + $0xa4] sm:$0x1]
      %v2558 = vld [vmem:[%s2322 + $0xa8] sm:$0xf]
      %v2559 = vld [vmem:[%s2322 + $0xac] sm:$0xf]
      %v2560 = vld [vmem:[%s2322 + $0xb0] sm:$0x1]
      %v2561 = vld [vmem:[%s2322 + $0xb4] sm:$0xf]
      %v2562 = vld [vmem:[%s2322 + $0xb8] sm:$0xf]
      %v2563 = vld [vmem:[%s2322 + $0xbc] sm:$0x1]
      %v2565 = vshrl.u32 %v2516, 16
      %v2567 = vrot.slane %v2565, 4
      %v2568 = vshll.u32 %v2516, 16
      %v2570 = vrot.slane %v2568, 5
      %v2571 = vor.u32 %v2567, %v2570
      %v2572 = vrot.slane %v2571, 4
      %v2574 = vshll.u32 %v2517, 16
      %v2576 = vrot.slane %v2574, 5
      %v2577 = vsel %vm370, %v2572, %v2576
      %v2578 = vshrl.u32 %v2517, 16
      %v2580 = vrot.slane %v2578, 4
      %v2581 = vor.u32 %v2580, %v2576
      %v2582 = vrot.slane %v2581, 4
      %v2584 = vshll.u32 %v2518, 16
      %v2586 = vrot.slane %v2584, 5
      %v2587 = vsel %vm370, %v2582, %v2586
      %v2589 = vshrl.u32 %v2519, 16
      %v2591 = vrot.slane %v2589, 4
      %v2592 = vshll.u32 %v2519, 16
      %v2594 = vrot.slane %v2592, 5
      %v2595 = vor.u32 %v2591, %v2594
      %v2596 = vrot.slane %v2595, 4
      %v2598 = vshll.u32 %v2520, 16
      %v2600 = vrot.slane %v2598, 5
      %v2601 = vsel %vm370, %v2596, %v2600
      %v2602 = vshrl.u32 %v2520, 16
      %v2604 = vrot.slane %v2602, 4
      %v2605 = vor.u32 %v2604, %v2600
      %v2606 = vrot.slane %v2605, 4
      %v2608 = vshll.u32 %v2521, 16
      %v2610 = vrot.slane %v2608, 5
      %v2611 = vsel %vm370, %v2606, %v2610
      %v2613 = vshrl.u32 %v2522, 16
      %v2615 = vrot.slane %v2613, 4
      %v2616 = vshll.u32 %v2522, 16
      %v2618 = vrot.slane %v2616, 5
      %v2619 = vor.u32 %v2615, %v2618
      %v2620 = vrot.slane %v2619, 4
      %v2622 = vshll.u32 %v2523, 16
      %v2624 = vrot.slane %v2622, 5
      %v2625 = vsel %vm370, %v2620, %v2624
      %v2626 = vshrl.u32 %v2523, 16
      %v2628 = vrot.slane %v2626, 4
      %v2629 = vor.u32 %v2628, %v2624
      %v2630 = vrot.slane %v2629, 4
      %v2632 = vshll.u32 %v2524, 16
      %v2634 = vrot.slane %v2632, 5
      %v2635 = vsel %vm370, %v2630, %v2634
      %v2637 = vshrl.u32 %v2525, 16
      %v2639 = vrot.slane %v2637, 4
      %v2640 = vshll.u32 %v2525, 16
      %v2642 = vrot.slane %v2640, 5
      %v2643 = vor.u32 %v2639, %v2642
      %v2644 = vrot.slane %v2643, 4
      %v2646 = vshll.u32 %v2526, 16
      %v2648 = vrot.slane %v2646, 5
      %v2649 = vsel %vm370, %v2644, %v2648
      %v2650 = vshrl.u32 %v2526, 16
      %v2652 = vrot.slane %v2650, 4
      %v2653 = vor.u32 %v2652, %v2648
      %v2654 = vrot.slane %v2653, 4
      %v2656 = vshll.u32 %v2527, 16
      %v2658 = vrot.slane %v2656, 5
      %v2659 = vsel %vm370, %v2654, %v2658
      %v2661 = vshrl.u32 %v2528, 16
      %v2663 = vrot.slane %v2661, 4
      %v2664 = vshll.u32 %v2528, 16
      %v2666 = vrot.slane %v2664, 5
      %v2667 = vor.u32 %v2663, %v2666
      %v2668 = vrot.slane %v2667, 4
      %v2670 = vshll.u32 %v2529, 16
      %v2672 = vrot.slane %v2670, 5
      %v2673 = vsel %vm370, %v2668, %v2672
      %v2674 = vshrl.u32 %v2529, 16
      %v2676 = vrot.slane %v2674, 4
      %v2677 = vor.u32 %v2676, %v2672
      %v2678 = vrot.slane %v2677, 4
      %v2680 = vshll.u32 %v2530, 16
      %v2682 = vrot.slane %v2680, 5
      %v2683 = vsel %vm370, %v2678, %v2682
      %v2685 = vshrl.u32 %v2531, 16
      %v2687 = vrot.slane %v2685, 4
      %v2688 = vshll.u32 %v2531, 16
      %v2690 = vrot.slane %v2688, 5
      %v2691 = vor.u32 %v2687, %v2690
      %v2692 = vrot.slane %v2691, 4
      %v2694 = vshll.u32 %v2532, 16
      %v2696 = vrot.slane %v2694, 5
      %v2697 = vsel %vm370, %v2692, %v2696
      %v2698 = vshrl.u32 %v2532, 16
      %v2700 = vrot.slane %v2698, 4
      %v2701 = vor.u32 %v2700, %v2696
      %v2702 = vrot.slane %v2701, 4
      %v2704 = vshll.u32 %v2533, 16
      %v2706 = vrot.slane %v2704, 5
      %v2707 = vsel %vm370, %v2702, %v2706
      %v2709 = vshrl.u32 %v2534, 16
      %v2711 = vrot.slane %v2709, 4
      %v2712 = vshll.u32 %v2534, 16
      %v2714 = vrot.slane %v2712, 5
      %v2715 = vor.u32 %v2711, %v2714
      %v2716 = vrot.slane %v2715, 4
      %v2718 = vshll.u32 %v2535, 16
      %v2720 = vrot.slane %v2718, 5
      %v2721 = vsel %vm370, %v2716, %v2720
      %v2722 = vshrl.u32 %v2535, 16
      %v2724 = vrot.slane %v2722, 4
      %v2725 = vor.u32 %v2724, %v2720
      %v2726 = vrot.slane %v2725, 4
      %v2728 = vshll.u32 %v2536, 16
      %v2730 = vrot.slane %v2728, 5
      %v2731 = vsel %vm370, %v2726, %v2730
      %v2733 = vshrl.u32 %v2537, 16
      %v2735 = vrot.slane %v2733, 4
      %v2736 = vshll.u32 %v2537, 16
      %v2738 = vrot.slane %v2736, 5
      %v2739 = vor.u32 %v2735, %v2738
      %v2740 = vrot.slane %v2739, 4
      %v2742 = vshll.u32 %v2538, 16
      %v2744 = vrot.slane %v2742, 5
      %v2745 = vsel %vm370, %v2740, %v2744
      %v2746 = vshrl.u32 %v2538, 16
      %v2748 = vrot.slane %v2746, 4
      %v2749 = vor.u32 %v2748, %v2744
      %v2750 = vrot.slane %v2749, 4
      %v2752 = vshll.u32 %v2539, 16
      %v2754 = vrot.slane %v2752, 5
      %v2755 = vsel %vm370, %v2750, %v2754
      %v2757 = vshrl.u32 %v2540, 16
      %v2759 = vrot.slane %v2757, 4
      %v2760 = vshll.u32 %v2540, 16
      %v2762 = vrot.slane %v2760, 5
      %v2763 = vor.u32 %v2759, %v2762
      %v2764 = vrot.slane %v2763, 4
      %v2766 = vshll.u32 %v2541, 16
      %v2768 = vrot.slane %v2766, 5
      %v2769 = vsel %vm370, %v2764, %v2768
      %v2770 = vshrl.u32 %v2541, 16
      %v2772 = vrot.slane %v2770, 4
      %v2773 = vor.u32 %v2772, %v2768
      %v2774 = vrot.slane %v2773, 4
      %v2776 = vshll.u32 %v2542, 16
      %v2778 = vrot.slane %v2776, 5
      %v2779 = vsel %vm370, %v2774, %v2778
      %v2781 = vshrl.u32 %v2543, 16
      %v2783 = vrot.slane %v2781, 4
      %v2784 = vshll.u32 %v2543, 16
      %v2786 = vrot.slane %v2784, 5
      %v2787 = vor.u32 %v2783, %v2786
      %v2788 = vrot.slane %v2787, 4
      %v2790 = vshll.u32 %v2544, 16
      %v2792 = vrot.slane %v2790, 5
      %v2793 = vsel %vm370, %v2788, %v2792
      %v2794 = vshrl.u32 %v2544, 16
      %v2796 = vrot.slane %v2794, 4
      %v2797 = vor.u32 %v2796, %v2792
      %v2798 = vrot.slane %v2797, 4
      %v2800 = vshll.u32 %v2545, 16
      %v2802 = vrot.slane %v2800, 5
      %v2803 = vsel %vm370, %v2798, %v2802
      %v2805 = vshrl.u32 %v2546, 16
      %v2807 = vrot.slane %v2805, 4
      %v2808 = vshll.u32 %v2546, 16
      %v2810 = vrot.slane %v2808, 5
      %v2811 = vor.u32 %v2807, %v2810
      %v2812 = vrot.slane %v2811, 4
      %v2814 = vshll.u32 %v2547, 16
      %v2816 = vrot.slane %v2814, 5
      %v2817 = vsel %vm370, %v2812, %v2816
      %v2818 = vshrl.u32 %v2547, 16
      %v2820 = vrot.slane %v2818, 4
      %v2821 = vor.u32 %v2820, %v2816
      %v2822 = vrot.slane %v2821, 4
      %v2824 = vshll.u32 %v2548, 16
      %v2826 = vrot.slane %v2824, 5
      %v2827 = vsel %vm370, %v2822, %v2826
      %v2829 = vshrl.u32 %v2549, 16
      %v2831 = vrot.slane %v2829, 4
      %v2832 = vshll.u32 %v2549, 16
      %v2834 = vrot.slane %v2832, 5
      %v2835 = vor.u32 %v2831, %v2834
      %v2836 = vrot.slane %v2835, 4
      %v2838 = vshll.u32 %v2550, 16
      %v2840 = vrot.slane %v2838, 5
      %v2841 = vsel %vm370, %v2836, %v2840
      %v2842 = vshrl.u32 %v2550, 16
      %v2844 = vrot.slane %v2842, 4
      %v2845 = vor.u32 %v2844, %v2840
      %v2846 = vrot.slane %v2845, 4
      %v2848 = vshll.u32 %v2551, 16
      %v2850 = vrot.slane %v2848, 5
      %v2851 = vsel %vm370, %v2846, %v2850
      %v2853 = vshrl.u32 %v2552, 16
      %v2855 = vrot.slane %v2853, 4
      %v2856 = vshll.u32 %v2552, 16
      %v2858 = vrot.slane %v2856, 5
      %v2859 = vor.u32 %v2855, %v2858
      %v2860 = vrot.slane %v2859, 4
      %v2862 = vshll.u32 %v2553, 16
      %v2864 = vrot.slane %v2862, 5
      %v2865 = vsel %vm370, %v2860, %v2864
      %v2866 = vshrl.u32 %v2553, 16
      %v2868 = vrot.slane %v2866, 4
      %v2869 = vor.u32 %v2868, %v2864
      %v2870 = vrot.slane %v2869, 4
      %v2872 = vshll.u32 %v2554, 16
      %v2874 = vrot.slane %v2872, 5
      %v2875 = vsel %vm370, %v2870, %v2874
      %v2877 = vshrl.u32 %v2555, 16
      %v2879 = vrot.slane %v2877, 4
      %v2880 = vshll.u32 %v2555, 16
      %v2882 = vrot.slane %v2880, 5
      %v2883 = vor.u32 %v2879, %v2882
      %v2884 = vrot.slane %v2883, 4
      %v2886 = vshll.u32 %v2556, 16
      %v2888 = vrot.slane %v2886, 5
      %v2889 = vsel %vm370, %v2884, %v2888
      %v2890 = vshrl.u32 %v2556, 16
      %v2892 = vrot.slane %v2890, 4
      %v2893 = vor.u32 %v2892, %v2888
      %v2894 = vrot.slane %v2893, 4
      %v2896 = vshll.u32 %v2557, 16
      %v2898 = vrot.slane %v2896, 5
      %v2899 = vsel %vm370, %v2894, %v2898
      %v2901 = vshrl.u32 %v2558, 16
      %v2903 = vrot.slane %v2901, 4
      %v2904 = vshll.u32 %v2558, 16
      %v2906 = vrot.slane %v2904, 5
      %v2907 = vor.u32 %v2903, %v2906
      %v2908 = vrot.slane %v2907, 4
      %v2910 = vshll.u32 %v2559, 16
      %v2912 = vrot.slane %v2910, 5
      %v2913 = vsel %vm370, %v2908, %v2912
      %v2914 = vshrl.u32 %v2559, 16
      %v2916 = vrot.slane %v2914, 4
      %v2917 = vor.u32 %v2916, %v2912
      %v2918 = vrot.slane %v2917, 4
      %v2920 = vshll.u32 %v2560, 16
      %v2922 = vrot.slane %v2920, 5
      %v2923 = vsel %vm370, %v2918, %v2922
      %v2925 = vshrl.u32 %v2561, 16
      %v2927 = vrot.slane %v2925, 4
      %v2928 = vshll.u32 %v2561, 16
      %v2930 = vrot.slane %v2928, 5
      %v2931 = vor.u32 %v2927, %v2930
      %v2932 = vrot.slane %v2931, 4
      %v2934 = vshll.u32 %v2562, 16
      %v2936 = vrot.slane %v2934, 5
      %v2937 = vsel %vm370, %v2932, %v2936
      %v2938 = vshrl.u32 %v2562, 16
      %v2940 = vrot.slane %v2938, 4
      %v2941 = vor.u32 %v2940, %v2936
      %v2942 = vrot.slane %v2941, 4
      %v2944 = vshll.u32 %v2563, 16
      %v2946 = vrot.slane %v2944, 5
      %v2947 = vsel %vm370, %v2942, %v2946
      %2948 = vrot.lane.b32.xlu0 %v2577, 28
      %v2949 = vpop.permute.xlu0 %2948
      %2950 = vrot.lane.b32.xlu0 %v2587, 28
      %v2951 = vpop.permute.xlu0 %2950
      %2952 = vrot.lane.b32.xlu0 %v2601, 28
      %v2953 = vpop.permute.xlu0 %2952
      %2954 = vrot.lane.b32.xlu0 %v2611, 28
      %v2955 = vpop.permute.xlu0 %2954
      %2956 = vrot.lane.b32.xlu0 %v2625, 28
      %v2957 = vpop.permute.xlu0 %2956
      %2958 = vrot.lane.b32.xlu0 %v2635, 28
      %v2959 = vpop.permute.xlu0 %2958
      %2960 = vrot.lane.b32.xlu0 %v2649, 28
      %v2961 = vpop.permute.xlu0 %2960
      %2962 = vrot.lane.b32.xlu0 %v2659, 28
      %v2963 = vpop.permute.xlu0 %2962
      %2964 = vrot.lane.b32.xlu0 %v2673, 28
      %v2965 = vpop.permute.xlu0 %2964
      %2966 = vrot.lane.b32.xlu0 %v2683, 28
      %v2967 = vpop.permute.xlu0 %2966
      %2968 = vrot.lane.b32.xlu0 %v2697, 28
      %v2969 = vpop.permute.xlu0 %2968
      %2970 = vrot.lane.b32.xlu0 %v2707, 28
      %v2971 = vpop.permute.xlu0 %2970
      %2972 = vrot.lane.b32.xlu0 %v2721, 28
      %v2973 = vpop.permute.xlu0 %2972
      %2974 = vrot.lane.b32.xlu0 %v2731, 28
      %v2975 = vpop.permute.xlu0 %2974
      %2976 = vrot.lane.b32.xlu0 %v2745, 28
      %v2977 = vpop.permute.xlu0 %2976
      %2978 = vrot.lane.b32.xlu0 %v2755, 28
      %v2979 = vpop.permute.xlu0 %2978
      %2980 = vrot.lane.b32.xlu0 %v2769, 28
      %v2981 = vpop.permute.xlu0 %2980
      %2982 = vrot.lane.b32.xlu0 %v2779, 28
      %v2983 = vpop.permute.xlu0 %2982
      %2984 = vrot.lane.b32.xlu0 %v2793, 28
      %v2985 = vpop.permute.xlu0 %2984
      %2986 = vrot.lane.b32.xlu0 %v2803, 28
      %v2987 = vpop.permute.xlu0 %2986
      %2988 = vrot.lane.b32.xlu0 %v2817, 28
      %v2989 = vpop.permute.xlu0 %2988
      %2990 = vrot.lane.b32.xlu0 %v2827, 28
      %v2991 = vpop.permute.xlu0 %2990
      %2992 = vrot.lane.b32.xlu0 %v2841, 28
      %v2993 = vpop.permute.xlu0 %2992
      %2994 = vrot.lane.b32.xlu0 %v2851, 28
      %v2995 = vpop.permute.xlu0 %2994
      %2996 = vrot.lane.b32.xlu0 %v2865, 28
      %v2997 = vpop.permute.xlu0 %2996
      %2998 = vrot.lane.b32.xlu0 %v2875, 28
      %v2999 = vpop.permute.xlu0 %2998
      %3000 = vrot.lane.b32.xlu0 %v2889, 28
      %v3001 = vpop.permute.xlu0 %3000
      %3002 = vrot.lane.b32.xlu0 %v2899, 28
      %v3003 = vpop.permute.xlu0 %3002
      %3004 = vrot.lane.b32.xlu0 %v2913, 28
      %v3005 = vpop.permute.xlu0 %3004
      %3006 = vrot.lane.b32.xlu0 %v2923, 28
      %v3007 = vpop.permute.xlu0 %3006
      %3008 = vrot.lane.b32.xlu0 %v2937, 28
      %v3009 = vpop.permute.xlu0 %3008
      %3010 = vrot.lane.b32.xlu0 %v2947, 28
      %v3011 = vpop.permute.xlu0 %3010
      %vm3044 = vcmask 257248
      %3045 = vst.msk [vmem:[#allocation2] sm:$0xf] %vm3044, %v2949
      %3046 = vst.msk [vmem:[#allocation2 + $0x4] sm:$0xf] %vm3044, %v2951
      %3047 = vst.msk [vmem:[#allocation2 + $0x8] sm:$0xf] %vm3044, %v2953
      %3048 = vst.msk [vmem:[#allocation2 + $0xc] sm:$0xf] %vm3044, %v2955
      %3049 = vst.msk [vmem:[#allocation2 + $0x10] sm:$0xf] %vm3044, %v2957
      %3050 = vst.msk [vmem:[#allocation2 + $0x14] sm:$0xf] %vm3044, %v2959
      %3051 = vst.msk [vmem:[#allocation2 + $0x18] sm:$0xf] %vm3044, %v2961
      %3052 = vst.msk [vmem:[#allocation2 + $0x1c] sm:$0xf] %vm3044, %v2963
      %3053 = vst.msk [vmem:[#allocation2 + $0x20] sm:$0xf] %vm3044, %v2965
      %3054 = vst.msk [vmem:[#allocation2 + $0x24] sm:$0xf] %vm3044, %v2967
      %3055 = vst.msk [vmem:[#allocation2 + $0x28] sm:$0xf] %vm3044, %v2969
      %3056 = vst.msk [vmem:[#allocation2 + $0x2c] sm:$0xf] %vm3044, %v2971
      %3057 = vst.msk [vmem:[#allocation2 + $0x30] sm:$0xf] %vm3044, %v2973
      %3058 = vst.msk [vmem:[#allocation2 + $0x34] sm:$0xf] %vm3044, %v2975
      %3059 = vst.msk [vmem:[#allocation2 + $0x38] sm:$0xf] %vm3044, %v2977
      %3060 = vst.msk [vmem:[#allocation2 + $0x3c] sm:$0xf] %vm3044, %v2979
      %3061 = vst.msk [vmem:[#allocation2 + $0x40] sm:$0xf] %vm3044, %v2981
      %3062 = vst.msk [vmem:[#allocation2 + $0x44] sm:$0xf] %vm3044, %v2983
      %3063 = vst.msk [vmem:[#allocation2 + $0x48] sm:$0xf] %vm3044, %v2985
      %3064 = vst.msk [vmem:[#allocation2 + $0x4c] sm:$0xf] %vm3044, %v2987
      %3065 = vst.msk [vmem:[#allocation2 + $0x50] sm:$0xf] %vm3044, %v2989
      %3066 = vst.msk [vmem:[#allocation2 + $0x54] sm:$0xf] %vm3044, %v2991
      %3067 = vst.msk [vmem:[#allocation2 + $0x58] sm:$0xf] %vm3044, %v2993
      %3068 = vst.msk [vmem:[#allocation2 + $0x5c] sm:$0xf] %vm3044, %v2995
      %3069 = vst.msk [vmem:[#allocation2 + $0x60] sm:$0xf] %vm3044, %v2997
      %3070 = vst.msk [vmem:[#allocation2 + $0x64] sm:$0xf] %vm3044, %v2999
      %3071 = vst.msk [vmem:[#allocation2 + $0x68] sm:$0xf] %vm3044, %v3001
      %3072 = vst.msk [vmem:[#allocation2 + $0x6c] sm:$0xf] %vm3044, %v3003
      %3073 = vst.msk [vmem:[#allocation2 + $0x70] sm:$0xf] %vm3044, %v3005
      %3074 = vst.msk [vmem:[#allocation2 + $0x74] sm:$0xf] %vm3044, %v3007
      %3075 = vst.msk [vmem:[#allocation2 + $0x78] sm:$0xf] %vm3044, %v3009
      %3076 = vst.msk [vmem:[#allocation2 + $0x7c] sm:$0xf] %vm3044, %v3011
      %v3077 = vld [vmem:[%s2322] sm:$0xe]
      %v3078 = vld [vmem:[%s2322 + $0x4] sm:$0xf]
      %v3079 = vld [vmem:[%s2322 + $0x8] sm:$0x1]
      %v3080 = vld [vmem:[%s2322 + $0xc] sm:$0xe]
      %v3081 = vld [vmem:[%s2322 + $0x10] sm:$0xf]
      %v3082 = vld [vmem:[%s2322 + $0x14] sm:$0x1]
      %v3083 = vld [vmem:[%s2322 + $0x18] sm:$0xe]
      %v3084 = vld [vmem:[%s2322 + $0x1c] sm:$0xf]
      %v3085 = vld [vmem:[%s2322 + $0x20] sm:$0x1]
      %v3086 = vld [vmem:[%s2322 + $0x24] sm:$0xe]
      %v3087 = vld [vmem:[%s2322 + $0x28] sm:$0xf]
      %v3088 = vld [vmem:[%s2322 + $0x2c] sm:$0x1]
      %v3089 = vld [vmem:[%s2322 + $0x30] sm:$0xe]
      %v3090 = vld [vmem:[%s2322 + $0x34] sm:$0xf]
      %v3091 = vld [vmem:[%s2322 + $0x38] sm:$0x1]
      %v3092 = vld [vmem:[%s2322 + $0x3c] sm:$0xe]
      %v3093 = vld [vmem:[%s2322 + $0x40] sm:$0xf]
      %v3094 = vld [vmem:[%s2322 + $0x44] sm:$0x1]
      %v3095 = vld [vmem:[%s2322 + $0x48] sm:$0xe]
      %v3096 = vld [vmem:[%s2322 + $0x4c] sm:$0xf]
      %v3097 = vld [vmem:[%s2322 + $0x50] sm:$0x1]
      %v3098 = vld [vmem:[%s2322 + $0x54] sm:$0xe]
      %v3099 = vld [vmem:[%s2322 + $0x58] sm:$0xf]
      %v3100 = vld [vmem:[%s2322 + $0x5c] sm:$0x1]
      %v3101 = vld [vmem:[%s2322 + $0x60] sm:$0xe]
      %v3102 = vld [vmem:[%s2322 + $0x64] sm:$0xf]
      %v3103 = vld [vmem:[%s2322 + $0x68] sm:$0x1]
      %v3104 = vld [vmem:[%s2322 + $0x6c] sm:$0xe]
      %v3105 = vld [vmem:[%s2322 + $0x70] sm:$0xf]
      %v3106 = vld [vmem:[%s2322 + $0x74] sm:$0x1]
      %v3107 = vld [vmem:[%s2322 + $0x78] sm:$0xe]
      %v3108 = vld [vmem:[%s2322 + $0x7c] sm:$0xf]
      %v3109 = vld [vmem:[%s2322 + $0x80] sm:$0x1]
      %v3110 = vld [vmem:[%s2322 + $0x84] sm:$0xe]
      %v3111 = vld [vmem:[%s2322 + $0x88] sm:$0xf]
      %v3112 = vld [vmem:[%s2322 + $0x8c] sm:$0x1]
      %v3113 = vld [vmem:[%s2322 + $0x90] sm:$0xe]
      %v3114 = vld [vmem:[%s2322 + $0x94] sm:$0xf]
      %v3115 = vld [vmem:[%s2322 + $0x98] sm:$0x1]
      %v3116 = vld [vmem:[%s2322 + $0x9c] sm:$0xe]
      %v3117 = vld [vmem:[%s2322 + $0xa0] sm:$0xf]
      %v3118 = vld [vmem:[%s2322 + $0xa4] sm:$0x1]
      %v3119 = vld [vmem:[%s2322 + $0xa8] sm:$0xe]
      %v3120 = vld [vmem:[%s2322 + $0xac] sm:$0xf]
      %v3121 = vld [vmem:[%s2322 + $0xb0] sm:$0x1]
      %v3122 = vld [vmem:[%s2322 + $0xb4] sm:$0xe]
      %v3123 = vld [vmem:[%s2322 + $0xb8] sm:$0xf]
      %v3124 = vld [vmem:[%s2322 + $0xbc] sm:$0x1]
      %v3173 = vrot.slane %v3077, 5
      %v3174 = vrot.slane %v3173, 4
      %v3175 = vrot.slane %v3078, 5
      %v3176 = vsel %vm982, %v3174, %v3175
      %v3177 = vrot.slane %v3175, 4
      %v3178 = vrot.slane %v3079, 5
      %v3179 = vsel %vm982, %v3177, %v3178
      %v3180 = vrot.slane %v3080, 5
      %v3181 = vrot.slane %v3180, 4
      %v3182 = vrot.slane %v3081, 5
      %v3183 = vsel %vm982, %v3181, %v3182
      %v3184 = vrot.slane %v3182, 4
      %v3185 = vrot.slane %v3082, 5
      %v3186 = vsel %vm982, %v3184, %v3185
      %v3187 = vrot.slane %v3083, 5
      %v3188 = vrot.slane %v3187, 4
      %v3189 = vrot.slane %v3084, 5
      %v3190 = vsel %vm982, %v3188, %v3189
      %v3191 = vrot.slane %v3189, 4
      %v3192 = vrot.slane %v3085, 5
      %v3193 = vsel %vm982, %v3191, %v3192
      %v3194 = vrot.slane %v3086, 5
      %v3195 = vrot.slane %v3194, 4
      %v3196 = vrot.slane %v3087, 5
      %v3197 = vsel %vm982, %v3195, %v3196
      %v3198 = vrot.slane %v3196, 4
      %v3199 = vrot.slane %v3088, 5
      %v3200 = vsel %vm982, %v3198, %v3199
      %v3201 = vrot.slane %v3089, 5
      %v3202 = vrot.slane %v3201, 4
      %v3203 = vrot.slane %v3090, 5
      %v3204 = vsel %vm982, %v3202, %v3203
      %v3205 = vrot.slane %v3203, 4
      %v3206 = vrot.slane %v3091, 5
      %v3207 = vsel %vm982, %v3205, %v3206
      %v3208 = vrot.slane %v3092, 5
      %v3209 = vrot.slane %v3208, 4
      %v3210 = vrot.slane %v3093, 5
      %v3211 = vsel %vm982, %v3209, %v3210
      %v3212 = vrot.slane %v3210, 4
      %v3213 = vrot.slane %v3094, 5
      %v3214 = vsel %vm982, %v3212, %v3213
      %v3215 = vrot.slane %v3095, 5
      %v3216 = vrot.slane %v3215, 4
      %v3217 = vrot.slane %v3096, 5
      %v3218 = vsel %vm982, %v3216, %v3217
      %v3219 = vrot.slane %v3217, 4
      %v3220 = vrot.slane %v3097, 5
      %v3221 = vsel %vm982, %v3219, %v3220
      %v3222 = vrot.slane %v3098, 5
      %v3223 = vrot.slane %v3222, 4
      %v3224 = vrot.slane %v3099, 5
      %v3225 = vsel %vm982, %v3223, %v3224
      %v3226 = vrot.slane %v3224, 4
      %v3227 = vrot.slane %v3100, 5
      %v3228 = vsel %vm982, %v3226, %v3227
      %v3229 = vrot.slane %v3101, 5
      %v3230 = vrot.slane %v3229, 4
      %v3231 = vrot.slane %v3102, 5
      %v3232 = vsel %vm982, %v3230, %v3231
      %v3233 = vrot.slane %v3231, 4
      %v3234 = vrot.slane %v3103, 5
      %v3235 = vsel %vm982, %v3233, %v3234
      %v3236 = vrot.slane %v3104, 5
      %v3237 = vrot.slane %v3236, 4
      %v3238 = vrot.slane %v3105, 5
      %v3239 = vsel %vm982, %v3237, %v3238
      %v3240 = vrot.slane %v3238, 4
      %v3241 = vrot.slane %v3106, 5
      %v3242 = vsel %vm982, %v3240, %v3241
      %v3243 = vrot.slane %v3107, 5
      %v3244 = vrot.slane %v3243, 4
      %v3245 = vrot.slane %v3108, 5
      %v3246 = vsel %vm982, %v3244, %v3245
      %v3247 = vrot.slane %v3245, 4
      %v3248 = vrot.slane %v3109, 5
      %v3249 = vsel %vm982, %v3247, %v3248
      %v3250 = vrot.slane %v3110, 5
      %v3251 = vrot.slane %v3250, 4
      %v3252 = vrot.slane %v3111, 5
      %v3253 = vsel %vm982, %v3251, %v3252
      %v3254 = vrot.slane %v3252, 4
      %v3255 = vrot.slane %v3112, 5
      %v3256 = vsel %vm982, %v3254, %v3255
      %v3257 = vrot.slane %v3113, 5
      %v3258 = vrot.slane %v3257, 4
      %v3259 = vrot.slane %v3114, 5
      %v3260 = vsel %vm982, %v3258, %v3259
      %v3261 = vrot.slane %v3259, 4
      %v3262 = vrot.slane %v3115, 5
      %v3263 = vsel %vm982, %v3261, %v3262
      %v3264 = vrot.slane %v3116, 5
      %v3265 = vrot.slane %v3264, 4
      %v3266 = vrot.slane %v3117, 5
      %v3267 = vsel %vm982, %v3265, %v3266
      %v3268 = vrot.slane %v3266, 4
      %v3269 = vrot.slane %v3118, 5
      %v3270 = vsel %vm982, %v3268, %v3269
      %v3271 = vrot.slane %v3119, 5
      %v3272 = vrot.slane %v3271, 4
      %v3273 = vrot.slane %v3120, 5
      %v3274 = vsel %vm982, %v3272, %v3273
      %v3275 = vrot.slane %v3273, 4
      %v3276 = vrot.slane %v3121, 5
      %v3277 = vsel %vm982, %v3275, %v3276
      %v3278 = vrot.slane %v3122, 5
      %v3279 = vrot.slane %v3278, 4
      %v3280 = vrot.slane %v3123, 5
      %v3281 = vsel %vm982, %v3279, %v3280
      %v3282 = vrot.slane %v3280, 4
      %v3283 = vrot.slane %v3124, 5
      %v3284 = vsel %vm982, %v3282, %v3283
      %3285 = vrot.lane.b32.xlu0 %v3176, 32
      %v3286 = vpop.permute.xlu0 %3285
      %3287 = vrot.lane.b32.xlu0 %v3179, 32
      %v3288 = vpop.permute.xlu0 %3287
      %3289 = vrot.lane.b32.xlu0 %v3183, 32
      %v3290 = vpop.permute.xlu0 %3289
      %3291 = vrot.lane.b32.xlu0 %v3186, 32
      %v3292 = vpop.permute.xlu0 %3291
      %3293 = vrot.lane.b32.xlu0 %v3190, 32
      %v3294 = vpop.permute.xlu0 %3293
      %3295 = vrot.lane.b32.xlu0 %v3193, 32
      %v3296 = vpop.permute.xlu0 %3295
      %3297 = vrot.lane.b32.xlu0 %v3197, 32
      %v3298 = vpop.permute.xlu0 %3297
      %3299 = vrot.lane.b32.xlu0 %v3200, 32
      %v3300 = vpop.permute.xlu0 %3299
      %3301 = vrot.lane.b32.xlu0 %v3204, 32
      %v3302 = vpop.permute.xlu0 %3301
      %3303 = vrot.lane.b32.xlu0 %v3207, 32
      %v3304 = vpop.permute.xlu0 %3303
      %3305 = vrot.lane.b32.xlu0 %v3211, 32
      %v3306 = vpop.permute.xlu0 %3305
      %3307 = vrot.lane.b32.xlu0 %v3214, 32
      %v3308 = vpop.permute.xlu0 %3307
      %3309 = vrot.lane.b32.xlu0 %v3218, 32
      %v3310 = vpop.permute.xlu0 %3309
      %3311 = vrot.lane.b32.xlu0 %v3221, 32
      %v3312 = vpop.permute.xlu0 %3311
      %3313 = vrot.lane.b32.xlu0 %v3225, 32
      %v3314 = vpop.permute.xlu0 %3313
      %3315 = vrot.lane.b32.xlu0 %v3228, 32
      %v3316 = vpop.permute.xlu0 %3315
      %3317 = vrot.lane.b32.xlu0 %v3232, 32
      %v3318 = vpop.permute.xlu0 %3317
      %3319 = vrot.lane.b32.xlu0 %v3235, 32
      %v3320 = vpop.permute.xlu0 %3319
      %3321 = vrot.lane.b32.xlu0 %v3239, 32
      %v3322 = vpop.permute.xlu0 %3321
      %3323 = vrot.lane.b32.xlu0 %v3242, 32
      %v3324 = vpop.permute.xlu0 %3323
      %3325 = vrot.lane.b32.xlu0 %v3246, 32
      %v3326 = vpop.permute.xlu0 %3325
      %3327 = vrot.lane.b32.xlu0 %v3249, 32
      %v3328 = vpop.permute.xlu0 %3327
      %3329 = vrot.lane.b32.xlu0 %v3253, 32
      %v3330 = vpop.permute.xlu0 %3329
      %3331 = vrot.lane.b32.xlu0 %v3256, 32
      %v3332 = vpop.permute.xlu0 %3331
      %3333 = vrot.lane.b32.xlu0 %v3260, 32
      %v3334 = vpop.permute.xlu0 %3333
      %3335 = vrot.lane.b32.xlu0 %v3263, 32
      %v3336 = vpop.permute.xlu0 %3335
      %3337 = vrot.lane.b32.xlu0 %v3267, 32
      %v3338 = vpop.permute.xlu0 %3337
      %3339 = vrot.lane.b32.xlu0 %v3270, 32
      %v3340 = vpop.permute.xlu0 %3339
      %3341 = vrot.lane.b32.xlu0 %v3274, 32
      %v3342 = vpop.permute.xlu0 %3341
      %3343 = vrot.lane.b32.xlu0 %v3277, 32
      %v3344 = vpop.permute.xlu0 %3343
      %3345 = vrot.lane.b32.xlu0 %v3281, 32
      %v3346 = vpop.permute.xlu0 %3345
      %3347 = vrot.lane.b32.xlu0 %v3284, 32
      %v3348 = vpop.permute.xlu0 %3347
      %vm3381 = vcmask 290048
      %3382 = vst.msk [vmem:[#allocation2] sm:$0xf] %vm3381, %v3286
      %3383 = vst.msk [vmem:[#allocation2 + $0x4] sm:$0xf] %vm3381, %v3288
      %3384 = vst.msk [vmem:[#allocation2 + $0x8] sm:$0xf] %vm3381, %v3290
      %3385 = vst.msk [vmem:[#allocation2 + $0xc] sm:$0xf] %vm3381, %v3292
      %3386 = vst.msk [vmem:[#allocation2 + $0x10] sm:$0xf] %vm3381, %v3294
      %3387 = vst.msk [vmem:[#allocation2 + $0x14] sm:$0xf] %vm3381, %v3296
      %3388 = vst.msk [vmem:[#allocation2 + $0x18] sm:$0xf] %vm3381, %v3298
      %3389 = vst.msk [vmem:[#allocation2 + $0x1c] sm:$0xf] %vm3381, %v3300
      %3390 = vst.msk [vmem:[#allocation2 + $0x20] sm:$0xf] %vm3381, %v3302
      %3391 = vst.msk [vmem:[#allocation2 + $0x24] sm:$0xf] %vm3381, %v3304
      %3392 = vst.msk [vmem:[#allocation2 + $0x28] sm:$0xf] %vm3381, %v3306
      %3393 = vst.msk [vmem:[#allocation2 + $0x2c] sm:$0xf] %vm3381, %v3308
      %3394 = vst.msk [vmem:[#allocation2 + $0x30] sm:$0xf] %vm3381, %v3310
      %3395 = vst.msk [vmem:[#allocation2 + $0x34] sm:$0xf] %vm3381, %v3312
      %3396 = vst.msk [vmem:[#allocation2 + $0x38] sm:$0xf] %vm3381, %v3314
      %3397 = vst.msk [vmem:[#allocation2 + $0x3c] sm:$0xf] %vm3381, %v3316
      %3398 = vst.msk [vmem:[#allocation2 + $0x40] sm:$0xf] %vm3381, %v3318
      %3399 = vst.msk [vmem:[#allocation2 + $0x44] sm:$0xf] %vm3381, %v3320
      %3400 = vst.msk [vmem:[#allocation2 + $0x48] sm:$0xf] %vm3381, %v3322
      %3401 = vst.msk [vmem:[#allocation2 + $0x4c] sm:$0xf] %vm3381, %v3324
      %3402 = vst.msk [vmem:[#allocation2 + $0x50] sm:$0xf] %vm3381, %v3326
      %3403 = vst.msk [vmem:[#allocation2 + $0x54] sm:$0xf] %vm3381, %v3328
      %3404 = vst.msk [vmem:[#allocation2 + $0x58] sm:$0xf] %vm3381, %v3330
      %3405 = vst.msk [vmem:[#allocation2 + $0x5c] sm:$0xf] %vm3381, %v3332
      %3406 = vst.msk [vmem:[#allocation2 + $0x60] sm:$0xf] %vm3381, %v3334
      %3407 = vst.msk [vmem:[#allocation2 + $0x64] sm:$0xf] %vm3381, %v3336
      %3408 = vst.msk [vmem:[#allocation2 + $0x68] sm:$0xf] %vm3381, %v3338
      %3409 = vst.msk [vmem:[#allocation2 + $0x6c] sm:$0xf] %vm3381, %v3340
      %3410 = vst.msk [vmem:[#allocation2 + $0x70] sm:$0xf] %vm3381, %v3342
      %3411 = vst.msk [vmem:[#allocation2 + $0x74] sm:$0xf] %vm3381, %v3344
      %3412 = vst.msk [vmem:[#allocation2 + $0x78] sm:$0xf] %vm3381, %v3346
      %3413 = vst.msk [vmem:[#allocation2 + $0x7c] sm:$0xf] %vm3381, %v3348
      %vm3414 = vcmask 1043744
      %3415 = vst.msk [vmem:[#allocation2] sm:$0xf] %vm3414, 0
      %3416 = vst.msk [vmem:[#allocation2 + $0x4] sm:$0xf] %vm3414, 0
      %3417 = vst.msk [vmem:[#allocation2 + $0x8] sm:$0xf] %vm3414, 0
      %3418 = vst.msk [vmem:[#allocation2 + $0xc] sm:$0xf] %vm3414, 0
      %3419 = vst.msk [vmem:[#allocation2 + $0x10] sm:$0xf] %vm3414, 0
      %3420 = vst.msk [vmem:[#allocation2 + $0x14] sm:$0xf] %vm3414, 0
      %3421 = vst.msk [vmem:[#allocation2 + $0x18] sm:$0xf] %vm3414, 0
      %3422 = vst.msk [vmem:[#allocation2 + $0x1c] sm:$0xf] %vm3414, 0
      %3423 = vst.msk [vmem:[#allocation2 + $0x20] sm:$0xf] %vm3414, 0
      %3424 = vst.msk [vmem:[#allocation2 + $0x24] sm:$0xf] %vm3414, 0
      %3425 = vst.msk [vmem:[#allocation2 + $0x28] sm:$0xf] %vm3414, 0
      %3426 = vst.msk [vmem:[#allocation2 + $0x2c] sm:$0xf] %vm3414, 0
      %3427 = vst.msk [vmem:[#allocation2 + $0x30] sm:$0xf] %vm3414, 0
      %3428 = vst.msk [vmem:[#allocation2 + $0x34] sm:$0xf] %vm3414, 0
      %3429 = vst.msk [vmem:[#allocation2 + $0x38] sm:$0xf] %vm3414, 0
      %3430 = vst.msk [vmem:[#allocation2 + $0x3c] sm:$0xf] %vm3414, 0
      %3431 = vst.msk [vmem:[#allocation2 + $0x40] sm:$0xf] %vm3414, 0
      %3432 = vst.msk [vmem:[#allocation2 + $0x44] sm:$0xf] %vm3414, 0
      %3433 = vst.msk [vmem:[#allocation2 + $0x48] sm:$0xf] %vm3414, 0
      %3434 = vst.msk [vmem:[#allocation2 + $0x4c] sm:$0xf] %vm3414, 0
      %3435 = vst.msk [vmem:[#allocation2 + $0x50] sm:$0xf] %vm3414, 0
      %3436 = vst.msk [vmem:[#allocation2 + $0x54] sm:$0xf] %vm3414, 0
      %3437 = vst.msk [vmem:[#allocation2 + $0x58] sm:$0xf] %vm3414, 0
      %3438 = vst.msk [vmem:[#allocation2 + $0x5c] sm:$0xf] %vm3414, 0
      %3439 = vst.msk [vmem:[#allocation2 + $0x60] sm:$0xf] %vm3414, 0
      %3440 = vst.msk [vmem:[#allocation2 + $0x64] sm:$0xf] %vm3414, 0
      %3441 = vst.msk [vmem:[#allocation2 + $0x68] sm:$0xf] %vm3414, 0
      %3442 = vst.msk [vmem:[#allocation2 + $0x6c] sm:$0xf] %vm3414, 0
      %3443 = vst.msk [vmem:[#allocation2 + $0x70] sm:$0xf] %vm3414, 0
      %3444 = vst.msk [vmem:[#allocation2 + $0x74] sm:$0xf] %vm3414, 0
      %3445 = vst.msk [vmem:[#allocation2 + $0x78] sm:$0xf] %vm3414, 0
      %3446 = vst.msk [vmem:[#allocation2 + $0x7c] sm:$0xf] %vm3414, 0
      %v3447 = vld [vmem:[#allocation2] sm:$0xf]
      %v3448 = vld [vmem:[#allocation2 + $0x4] sm:$0xf]
      %v3449 = vld [vmem:[#allocation2 + $0x8] sm:$0xf]
      %v3450 = vld [vmem:[#allocation2 + $0xc] sm:$0xf]
      %v3451 = vld [vmem:[#allocation2 + $0x10] sm:$0xf]
      %v3452 = vld [vmem:[#allocation2 + $0x14] sm:$0xf]
      %v3453 = vld [vmem:[#allocation2 + $0x18] sm:$0xf]
      %v3454 = vld [vmem:[#allocation2 + $0x1c] sm:$0xf]
      %v3455 = vld [vmem:[#allocation2 + $0x20] sm:$0xf]
      %v3456 = vld [vmem:[#allocation2 + $0x24] sm:$0xf]
      %v3457 = vld [vmem:[#allocation2 + $0x28] sm:$0xf]
      %v3458 = vld [vmem:[#allocation2 + $0x2c] sm:$0xf]
      %v3459 = vld [vmem:[#allocation2 + $0x30] sm:$0xf]
      %v3460 = vld [vmem:[#allocation2 + $0x34] sm:$0xf]
      %v3461 = vld [vmem:[#allocation2 + $0x38] sm:$0xf]
      %v3462 = vld [vmem:[#allocation2 + $0x3c] sm:$0xf]
      %v3463 = vld [vmem:[#allocation2 + $0x40] sm:$0xf]
      %v3464 = vld [vmem:[#allocation2 + $0x44] sm:$0xf]
      %v3465 = vld [vmem:[#allocation2 + $0x48] sm:$0xf]
      %v3466 = vld [vmem:[#allocation2 + $0x4c] sm:$0xf]
      %v3467 = vld [vmem:[#allocation2 + $0x50] sm:$0xf]
      %v3468 = vld [vmem:[#allocation2 + $0x54] sm:$0xf]
      %v3469 = vld [vmem:[#allocation2 + $0x58] sm:$0xf]
      %v3470 = vld [vmem:[#allocation2 + $0x5c] sm:$0xf]
      %v3471 = vld [vmem:[#allocation2 + $0x60] sm:$0xf]
      %v3472 = vld [vmem:[#allocation2 + $0x64] sm:$0xf]
      %v3473 = vld [vmem:[#allocation2 + $0x68] sm:$0xf]
      %v3474 = vld [vmem:[#allocation2 + $0x6c] sm:$0xf]
      %v3475 = vld [vmem:[#allocation2 + $0x70] sm:$0xf]
      %v3476 = vld [vmem:[#allocation2 + $0x74] sm:$0xf]
      %v3477 = vld [vmem:[#allocation2 + $0x78] sm:$0xf]
      %v3478 = vld [vmem:[#allocation2 + $0x7c] sm:$0xf]
      %v3479 = vld [vmem:[%s1] sm:$0xf]
      %v3480 = vld [vmem:[%s1 + $0x4] sm:$0xf]
      %v3481 = vld [vmem:[%s1 + $0x8] sm:$0xf]
      %v3482 = vld [vmem:[%s1 + $0xc] sm:$0xf]
      %v3483 = vld [vmem:[%s1 + $0x10] sm:$0xf]
      %v3484 = vld [vmem:[%s1 + $0x14] sm:$0xf]
      %v3485 = vld [vmem:[%s1 + $0x18] sm:$0xf]
      %v3486 = vld [vmem:[%s1 + $0x1c] sm:$0xf]
      %v3487 = vld [vmem:[%s1 + $0x20] sm:$0xf]
      %v3488 = vld [vmem:[%s1 + $0x24] sm:$0xf]
      %v3489 = vld [vmem:[%s1 + $0x28] sm:$0xf]
      %v3490 = vld [vmem:[%s1 + $0x2c] sm:$0xf]
      %v3491 = vld [vmem:[%s1 + $0x30] sm:$0xf]
      %v3492 = vld [vmem:[%s1 + $0x34] sm:$0xf]
      %v3493 = vld [vmem:[%s1 + $0x38] sm:$0xf]
      %v3494 = vld [vmem:[%s1 + $0x3c] sm:$0xf]
      %v3495 = vld [vmem:[%s2] sm:$0x1]
      %v3497 = vlaneseq
      %v3498 = vshrl.u32 %v3497, 7
      %v3499 = vsub.s32 0, %v3498
      %v3500 = vrot.slane %v3495, %v3499
      %v3534 = vunpack.c.l.b16 %v3447
      %v3535 = vunpack.c.l.b16 %v3448
      %v3536 = vunpack.c.l.b16 %v3449
      %v3537 = vunpack.c.l.b16 %v3450
      %v3538 = vunpack.c.l.b16 %v3451
      %v3539 = vunpack.c.l.b16 %v3452
      %v3540 = vunpack.c.l.b16 %v3453
      %v3541 = vunpack.c.l.b16 %v3454
      %v3542 = vunpack.c.l.b16 %v3455
      %v3543 = vunpack.c.l.b16 %v3456
      %v3544 = vunpack.c.l.b16 %v3457
      %v3545 = vunpack.c.l.b16 %v3458
      %v3546 = vunpack.c.l.b16 %v3459
      %v3547 = vunpack.c.l.b16 %v3460
      %v3548 = vunpack.c.l.b16 %v3461
      %v3549 = vunpack.c.l.b16 %v3462
      %v3550 = vunpack.c.l.b16 %v3463
      %v3551 = vunpack.c.l.b16 %v3464
      %v3552 = vunpack.c.l.b16 %v3465
      %v3553 = vunpack.c.l.b16 %v3466
      %v3554 = vunpack.c.l.b16 %v3467
      %v3555 = vunpack.c.l.b16 %v3468
      %v3556 = vunpack.c.l.b16 %v3469
      %v3557 = vunpack.c.l.b16 %v3470
      %v3558 = vunpack.c.l.b16 %v3471
      %v3559 = vunpack.c.l.b16 %v3472
      %v3560 = vunpack.c.l.b16 %v3473
      %v3561 = vunpack.c.l.b16 %v3474
      %v3562 = vunpack.c.l.b16 %v3475
      %v3563 = vunpack.c.l.b16 %v3476
      %v3564 = vunpack.c.l.b16 %v3477
      %v3565 = vunpack.c.l.b16 %v3478
      %v3566 = vpack.c.b16 %v3535, %v3534
      %v3567 = vpack.c.b16 %v3537, %v3536
      %v3568 = vpack.c.b16 %v3539, %v3538
      %v3569 = vpack.c.b16 %v3541, %v3540
      %v3570 = vpack.c.b16 %v3543, %v3542
      %v3571 = vpack.c.b16 %v3545, %v3544
      %v3572 = vpack.c.b16 %v3547, %v3546
      %v3573 = vpack.c.b16 %v3549, %v3548
      %v3574 = vpack.c.b16 %v3551, %v3550
      %v3575 = vpack.c.b16 %v3553, %v3552
      %v3576 = vpack.c.b16 %v3555, %v3554
      %v3577 = vpack.c.b16 %v3557, %v3556
      %v3578 = vpack.c.b16 %v3559, %v3558
      %v3579 = vpack.c.b16 %v3561, %v3560
      %v3580 = vpack.c.b16 %v3563, %v3562
      %v3581 = vpack.c.b16 %v3565, %v3564
      %v3614 = vunpack.c.l.b16 %v3479
      %v3615 = vunpack.c.l.b16 %v3480
      %v3616 = vunpack.c.l.b16 %v3481
      %v3617 = vunpack.c.l.b16 %v3482
      %v3618 = vunpack.c.l.b16 %v3483
      %v3619 = vunpack.c.l.b16 %v3484
      %v3620 = vunpack.c.l.b16 %v3485
      %v3621 = vunpack.c.l.b16 %v3486
      %v3622 = vunpack.c.l.b16 %v3487
      %v3623 = vunpack.c.l.b16 %v3488
      %v3624 = vunpack.c.l.b16 %v3489
      %v3625 = vunpack.c.l.b16 %v3490
      %v3626 = vunpack.c.l.b16 %v3491
      %v3627 = vunpack.c.l.b16 %v3492
      %v3628 = vunpack.c.l.b16 %v3493
      %v3629 = vunpack.c.l.b16 %v3494
      %v3630 = vpack.c.b16 %v3615, %v3614
      %v3631 = vpack.c.b16 %v3617, %v3616
      %v3632 = vpack.c.b16 %v3619, %v3618
      %v3633 = vpack.c.b16 %v3621, %v3620
      %v3634 = vpack.c.b16 %v3623, %v3622
      %v3635 = vpack.c.b16 %v3625, %v3624
      %v3636 = vpack.c.b16 %v3627, %v3626
      %v3637 = vpack.c.b16 %v3629, %v3628
      %3646 = vmatprep.subr.bf16.mxu0 0
      %3647 = vmatpush1.bf16.msra.mxu0 %v3637
      %3648 = vmatprep.subr.bf16.mxu0 0
      %3649 = vmatpush1.bf16.msra.mxu0 %v3636
      %3650 = vmatprep.subr.bf16.mxu0 0
      %3651 = vmatpush1.bf16.msra.mxu0 %v3635
      %3652 = vmatprep.subr.bf16.mxu0 0
      %3653 = vmatpush1.bf16.msra.mxu0 %v3634
      %3654 = vmatprep.subr.bf16.mxu0 0
      %3655 = vmatpush1.bf16.msra.mxu0 %v3633
      %3656 = vmatprep.subr.bf16.mxu0 0
      %3657 = vmatpush1.bf16.msra.mxu0 %v3632
      %3658 = vmatprep.subr.bf16.mxu0 0
      %3659 = vmatpush1.bf16.msra.mxu0 %v3631
      %3660 = vmatprep.subr.bf16.mxu0 0
      %3661 = vmatpush1.bf16.msra.mxu0 %v3630
      %3662 = vmatprep.subr.bf16.mxu0 0
      %3663 = vmatpush2.bf16.msra.mxu0 0
      %3664 = vmatprep.subr.bf16.mxu0 0
      %3665 = vmatpush2.bf16.msra.mxu0 0
      %3666 = vmatprep.subr.bf16.mxu0 0
      %3667 = vmatpush2.bf16.msra.mxu0 0
      %3668 = vmatprep.subr.bf16.mxu0 0
      %3669 = vmatpush2.bf16.msra.mxu0 0
      %3670 = vmatprep.subr.bf16.mxu0 0
      %3671 = vmatpush2.bf16.msra.mxu0 0
      %3672 = vmatprep.subr.bf16.mxu0 0
      %3673 = vmatpush2.bf16.msra.mxu0 0
      %3674 = vmatprep.subr.bf16.mxu0 0
      %3675 = vmatpush2.bf16.msra.mxu0 0
      %3676 = vmatprep.subr.bf16.mxu0 0
      %3677 = vmatpush2.bf16.msra.mxu0 0
      %3678 = vmatprep.mubr.bf16.mxu0 0
      %3679 = vmatmul.mubr.bf16.gmra.mxu0 %v3566
      %v3680 = vpop.f32.mrf.mxu0
      %v3681 = vadd.f32 %v3500, %v3680
      %v3682 = vpop.f32.mrf.mxu0
      %v3683 = vpop.f32.mrf.mxu0
      %v3684 = vadd.f32 %v3500, %v3683
      %v3685 = vpop.f32.mrf.mxu0
      %3686 = vmatprep.mubr.bf16.mxu0 0
      %3687 = vmatmul.mubr.bf16.gmra.mxu0 %v3567
      %v3688 = vpop.f32.mrf.mxu0
      %v3689 = vadd.f32 %v3500, %v3688
      %v3690 = vpop.f32.mrf.mxu0
      %v3691 = vpop.f32.mrf.mxu0
      %v3692 = vadd.f32 %v3500, %v3691
      %v3693 = vpop.f32.mrf.mxu0
      %3694 = vmatprep.mubr.bf16.mxu0 0
      %3695 = vmatmul.mubr.bf16.gmra.mxu0 %v3568
      %v3696 = vpop.f32.mrf.mxu0
      %v3697 = vadd.f32 %v3500, %v3696
      %v3698 = vpop.f32.mrf.mxu0
      %v3699 = vpop.f32.mrf.mxu0
      %v3700 = vadd.f32 %v3500, %v3699
      %v3701 = vpop.f32.mrf.mxu0
      %3702 = vmatprep.mubr.bf16.mxu0 0
      %3703 = vmatmul.mubr.bf16.gmra.mxu0 %v3569
      %v3704 = vpop.f32.mrf.mxu0
      %v3705 = vadd.f32 %v3500, %v3704
      %v3706 = vpop.f32.mrf.mxu0
      %v3707 = vpop.f32.mrf.mxu0
      %v3708 = vadd.f32 %v3500, %v3707
      %v3709 = vpop.f32.mrf.mxu0
      %3710 = vmatprep.mubr.bf16.mxu0 0
      %3711 = vmatmul.mubr.bf16.gmra.mxu0 %v3570
      %v3712 = vpop.f32.mrf.mxu0
      %v3713 = vadd.f32 %v3500, %v3712
      %v3714 = vpop.f32.mrf.mxu0
      %v3715 = vpop.f32.mrf.mxu0
      %v3716 = vadd.f32 %v3500, %v3715
      %v3717 = vpop.f32.mrf.mxu0
      %3718 = vmatprep.mubr.bf16.mxu0 0
      %3719 = vmatmul.mubr.bf16.gmra.mxu0 %v3571
      %v3720 = vpop.f32.mrf.mxu0
      %v3721 = vadd.f32 %v3500, %v3720
      %v3722 = vpop.f32.mrf.mxu0
      %v3723 = vpop.f32.mrf.mxu0
      %v3724 = vadd.f32 %v3500, %v3723
      %v3725 = vpop.f32.mrf.mxu0
      %3726 = vmatprep.mubr.bf16.mxu0 0
      %3727 = vmatmul.mubr.bf16.gmra.mxu0 %v3572
      %v3728 = vpop.f32.mrf.mxu0
      %v3729 = vadd.f32 %v3500, %v3728
      %v3730 = vpop.f32.mrf.mxu0
      %v3731 = vpop.f32.mrf.mxu0
      %v3732 = vadd.f32 %v3500, %v3731
      %v3733 = vpop.f32.mrf.mxu0
      %3734 = vmatprep.mubr.bf16.mxu0 0
      %3735 = vmatmul.mubr.bf16.gmra.mxu0 %v3573
      %v3736 = vpop.f32.mrf.mxu0
      %v3737 = vadd.f32 %v3500, %v3736
      %v3738 = vpop.f32.mrf.mxu0
      %v3739 = vpop.f32.mrf.mxu0
      %v3740 = vadd.f32 %v3500, %v3739
      %v3741 = vpop.f32.mrf.mxu0
      %3742 = vmatprep.mubr.bf16.mxu0 0
      %3743 = vmatmul.mubr.bf16.gmra.mxu0 %v3574
      %v3744 = vpop.f32.mrf.mxu0
      %v3745 = vadd.f32 %v3500, %v3744
      %v3746 = vpop.f32.mrf.mxu0
      %v3747 = vpop.f32.mrf.mxu0
      %v3748 = vadd.f32 %v3500, %v3747
      %v3749 = vpop.f32.mrf.mxu0
      %3750 = vmatprep.mubr.bf16.mxu0 0
      %3751 = vmatmul.mubr.bf16.gmra.mxu0 %v3575
      %v3752 = vpop.f32.mrf.mxu0
      %v3753 = vadd.f32 %v3500, %v3752
      %v3754 = vpop.f32.mrf.mxu0
      %v3755 = vpop.f32.mrf.mxu0
      %v3756 = vadd.f32 %v3500, %v3755
      %v3757 = vpop.f32.mrf.mxu0
      %3758 = vmatprep.mubr.bf16.mxu0 0
      %3759 = vmatmul.mubr.bf16.gmra.mxu0 %v3576
      %v3760 = vpop.f32.mrf.mxu0
      %v3761 = vadd.f32 %v3500, %v3760
      %v3762 = vpop.f32.mrf.mxu0
      %v3763 = vpop.f32.mrf.mxu0
      %v3764 = vadd.f32 %v3500, %v3763
      %v3765 = vpop.f32.mrf.mxu0
      %3766 = vmatprep.mubr.bf16.mxu0 0
      %3767 = vmatmul.mubr.bf16.gmra.mxu0 %v3577
      %v3768 = vpop.f32.mrf.mxu0
      %v3769 = vadd.f32 %v3500, %v3768
      %v3770 = vpop.f32.mrf.mxu0
      %v3771 = vpop.f32.mrf.mxu0
      %v3772 = vadd.f32 %v3500, %v3771
      %v3773 = vpop.f32.mrf.mxu0
      %3774 = vmatprep.mubr.bf16.mxu0 0
      %3775 = vmatmul.mubr.bf16.gmra.mxu0 %v3578
      %v3776 = vpop.f32.mrf.mxu0
      %v3777 = vadd.f32 %v3500, %v3776
      %v3778 = vpop.f32.mrf.mxu0
      %v3779 = vpop.f32.mrf.mxu0
      %v3780 = vadd.f32 %v3500, %v3779
      %v3781 = vpop.f32.mrf.mxu0
      %3782 = vmatprep.mubr.bf16.mxu0 0
      %3783 = vmatmul.mubr.bf16.gmra.mxu0 %v3579
      %v3784 = vpop.f32.mrf.mxu0
      %v3785 = vadd.f32 %v3500, %v3784
      %v3786 = vpop.f32.mrf.mxu0
      %v3787 = vpop.f32.mrf.mxu0
      %v3788 = vadd.f32 %v3500, %v3787
      %v3789 = vpop.f32.mrf.mxu0
      %3790 = vmatprep.mubr.bf16.mxu0 0
      %3791 = vmatmul.mubr.bf16.gmra.mxu0 %v3580
      %v3792 = vpop.f32.mrf.mxu0
      %v3793 = vadd.f32 %v3500, %v3792
      %v3794 = vpop.f32.mrf.mxu0
      %v3795 = vpop.f32.mrf.mxu0
      %v3796 = vadd.f32 %v3500, %v3795
      %v3797 = vpop.f32.mrf.mxu0
      %3798 = vmatprep.mubr.bf16.mxu0 0
      %3799 = vmatmul.mubr.bf16.gmra.mxu0 %v3581
      %v3800 = vpop.f32.mrf.mxu0
      %v3801 = vadd.f32 %v3500, %v3800
      %v3802 = vpop.f32.mrf.mxu0
      %v3803 = vpop.f32.mrf.mxu0
      %v3804 = vadd.f32 %v3500, %v3803
      %v3805 = vpop.f32.mrf.mxu0
      %3806 = vdwg.mxu0
      %v3807 = vmul.f32 %v3681, 0.1
      %v3808 = vmul.f32 %v3684, 0.1
      %v3809 = vmul.f32 %v3689, 0.1
      %v3810 = vmul.f32 %v3692, 0.1
      %v3811 = vmul.f32 %v3697, 0.1
      %v3812 = vmul.f32 %v3700, 0.1
      %v3813 = vmul.f32 %v3705, 0.1
      %v3814 = vmul.f32 %v3708, 0.1
      %v3815 = vmul.f32 %v3713, 0.1
      %v3816 = vmul.f32 %v3716, 0.1
      %v3817 = vmul.f32 %v3721, 0.1
      %v3818 = vmul.f32 %v3724, 0.1
      %v3819 = vmul.f32 %v3729, 0.1
      %v3820 = vmul.f32 %v3732, 0.1
      %v3821 = vmul.f32 %v3737, 0.1
      %v3822 = vmul.f32 %v3740, 0.1
      %v3823 = vmul.f32 %v3745, 0.1
      %v3824 = vmul.f32 %v3748, 0.1
      %v3825 = vmul.f32 %v3753, 0.1
      %v3826 = vmul.f32 %v3756, 0.1
      %v3827 = vmul.f32 %v3761, 0.1
      %v3828 = vmul.f32 %v3764, 0.1
      %v3829 = vmul.f32 %v3769, 0.1
      %v3830 = vmul.f32 %v3772, 0.1
      %v3831 = vmul.f32 %v3777, 0.1
      %v3832 = vmul.f32 %v3780, 0.1
      %v3833 = vmul.f32 %v3785, 0.1
      %v3834 = vmul.f32 %v3788, 0.1
      %v3835 = vmul.f32 %v3793, 0.1
      %v3836 = vmul.f32 %v3796, 0.1
      %v3837 = vmul.f32 %v3801, 0.1
      %v3838 = vmul.f32 %v3804, 0.1
      %v3839 = vmax.f32 %v3681, %v3807
      %v3840 = vmax.f32 %v3684, %v3808
      %v3841 = vmax.f32 %v3689, %v3809
      %v3842 = vmax.f32 %v3692, %v3810
      %v3843 = vmax.f32 %v3697, %v3811
      %v3844 = vmax.f32 %v3700, %v3812
      %v3845 = vmax.f32 %v3705, %v3813
      %v3846 = vmax.f32 %v3708, %v3814
      %v3847 = vmax.f32 %v3713, %v3815
      %v3848 = vmax.f32 %v3716, %v3816
      %v3849 = vmax.f32 %v3721, %v3817
      %v3850 = vmax.f32 %v3724, %v3818
      %v3851 = vmax.f32 %v3729, %v3819
      %v3852 = vmax.f32 %v3732, %v3820
      %v3853 = vmax.f32 %v3737, %v3821
      %v3854 = vmax.f32 %v3740, %v3822
      %v3855 = vmax.f32 %v3745, %v3823
      %v3856 = vmax.f32 %v3748, %v3824
      %v3857 = vmax.f32 %v3753, %v3825
      %v3858 = vmax.f32 %v3756, %v3826
      %v3859 = vmax.f32 %v3761, %v3827
      %v3860 = vmax.f32 %v3764, %v3828
      %v3861 = vmax.f32 %v3769, %v3829
      %v3862 = vmax.f32 %v3772, %v3830
      %v3863 = vmax.f32 %v3777, %v3831
      %v3864 = vmax.f32 %v3780, %v3832
      %v3865 = vmax.f32 %v3785, %v3833
      %v3866 = vmax.f32 %v3788, %v3834
      %v3867 = vmax.f32 %v3793, %v3835
      %v3868 = vmax.f32 %v3796, %v3836
      %v3869 = vmax.f32 %v3801, %v3837
      %v3870 = vmax.f32 %v3804, %v3838
      %v3871 = vpack.c.bf16 %v3840, %v3839
      %v3872 = vpack.c.bf16 %v3842, %v3841
      %v3873 = vpack.c.bf16 %v3844, %v3843
      %v3874 = vpack.c.bf16 %v3846, %v3845
      %v3875 = vpack.c.bf16 %v3848, %v3847
      %v3876 = vpack.c.bf16 %v3850, %v3849
      %v3877 = vpack.c.bf16 %v3852, %v3851
      %v3878 = vpack.c.bf16 %v3854, %v3853
      %v3879 = vpack.c.bf16 %v3856, %v3855
      %v3880 = vpack.c.bf16 %v3858, %v3857
      %v3881 = vpack.c.bf16 %v3860, %v3859
      %v3882 = vpack.c.bf16 %v3862, %v3861
      %v3883 = vpack.c.bf16 %v3864, %v3863
      %v3884 = vpack.c.bf16 %v3866, %v3865
      %v3885 = vpack.c.bf16 %v3868, %v3867
      %v3886 = vpack.c.bf16 %v3870, %v3869
      %v3887 = vld [vmem:[%s3] sm:$0xf]
      %v3888 = vld [vmem:[%s3 + $0x4] sm:$0xf]
      %v3889 = vld [vmem:[%s3 + $0x8] sm:$0xf]
      %v3890 = vld [vmem:[%s3 + $0xc] sm:$0xf]
      %v3891 = vld [vmem:[%s3 + $0x10] sm:$0xf]
      %v3892 = vld [vmem:[%s3 + $0x14] sm:$0xf]
      %v3893 = vld [vmem:[%s3 + $0x18] sm:$0xf]
      %v3894 = vld [vmem:[%s3 + $0x1c] sm:$0xf]
      %v3895 = vld [vmem:[%s3 + $0x20] sm:$0xf]
      %v3896 = vld [vmem:[%s3 + $0x24] sm:$0xf]
      %v3897 = vld [vmem:[%s3 + $0x28] sm:$0xf]
      %v3898 = vld [vmem:[%s3 + $0x2c] sm:$0xf]
      %v3899 = vld [vmem:[%s3 + $0x30] sm:$0xf]
      %v3900 = vld [vmem:[%s3 + $0x34] sm:$0xf]
      %v3901 = vld [vmem:[%s3 + $0x38] sm:$0xf]
      %v3902 = vld [vmem:[%s3 + $0x3c] sm:$0xf]
      %v3903 = vld [vmem:[%s4] sm:$0x1]
      %v3905 = vlaneseq
      %v3906 = vshrl.u32 %v3905, 7
      %v3907 = vsub.s32 0, %v3906
      %v3908 = vrot.slane %v3903, %v3907
      %v3926 = vunpack.c.l.b16 %v3887
      %v3927 = vunpack.c.l.b16 %v3888
      %v3928 = vunpack.c.l.b16 %v3889
      %v3929 = vunpack.c.l.b16 %v3890
      %v3930 = vunpack.c.l.b16 %v3891
      %v3931 = vunpack.c.l.b16 %v3892
      %v3932 = vunpack.c.l.b16 %v3893
      %v3933 = vunpack.c.l.b16 %v3894
      %v3934 = vunpack.c.l.b16 %v3895
      %v3935 = vunpack.c.l.b16 %v3896
      %v3936 = vunpack.c.l.b16 %v3897
      %v3937 = vunpack.c.l.b16 %v3898
      %v3938 = vunpack.c.l.b16 %v3899
      %v3939 = vunpack.c.l.b16 %v3900
      %v3940 = vunpack.c.l.b16 %v3901
      %v3941 = vunpack.c.l.b16 %v3902
      %v3942 = vpack.c.b16 %v3927, %v3926
      %v3943 = vpack.c.b16 %v3929, %v3928
      %v3944 = vpack.c.b16 %v3931, %v3930
      %v3945 = vpack.c.b16 %v3933, %v3932
      %v3946 = vpack.c.b16 %v3935, %v3934
      %v3947 = vpack.c.b16 %v3937, %v3936
      %v3948 = vpack.c.b16 %v3939, %v3938
      %v3949 = vpack.c.b16 %v3941, %v3940
      %3958 = vmatprep.subr.bf16.mxu0 0
      %3959 = vmatpush1.bf16.msra.mxu0 %v3949
      %3960 = vmatprep.subr.bf16.mxu0 0
      %3961 = vmatpush1.bf16.msra.mxu0 %v3948
      %3962 = vmatprep.subr.bf16.mxu0 0
      %3963 = vmatpush1.bf16.msra.mxu0 %v3947
      %3964 = vmatprep.subr.bf16.mxu0 0
      %3965 = vmatpush1.bf16.msra.mxu0 %v3946
      %3966 = vmatprep.subr.bf16.mxu0 0
      %3967 = vmatpush1.bf16.msra.mxu0 %v3945
      %3968 = vmatprep.subr.bf16.mxu0 0
      %3969 = vmatpush1.bf16.msra.mxu0 %v3944
      %3970 = vmatprep.subr.bf16.mxu0 0
      %3971 = vmatpush1.bf16.msra.mxu0 %v3943
      %3972 = vmatprep.subr.bf16.mxu0 0
      %3973 = vmatpush1.bf16.msra.mxu0 %v3942
      %3974 = vmatprep.subr.bf16.mxu0 0
      %3975 = vmatpush2.bf16.msra.mxu0 0
      %3976 = vmatprep.subr.bf16.mxu0 0
      %3977 = vmatpush2.bf16.msra.mxu0 0
      %3978 = vmatprep.subr.bf16.mxu0 0
      %3979 = vmatpush2.bf16.msra.mxu0 0
      %3980 = vmatprep.subr.bf16.mxu0 0
      %3981 = vmatpush2.bf16.msra.mxu0 0
      %3982 = vmatprep.subr.bf16.mxu0 0
      %3983 = vmatpush2.bf16.msra.mxu0 0
      %3984 = vmatprep.subr.bf16.mxu0 0
      %3985 = vmatpush2.bf16.msra.mxu0 0
      %3986 = vmatprep.subr.bf16.mxu0 0
      %3987 = vmatpush2.bf16.msra.mxu0 0
      %3988 = vmatprep.subr.bf16.mxu0 0
      %3989 = vmatpush2.bf16.msra.mxu0 0
      %3990 = vmatprep.mubr.bf16.mxu0 0
      %3991 = vmatmul.mubr.bf16.gmra.mxu0 %v3871
      %v3992 = vpop.f32.mrf.mxu0
      %v3993 = vadd.f32 %v3908, %v3992
      %v3994 = vpop.f32.mrf.mxu0
      %v3995 = vpop.f32.mrf.mxu0
      %v3996 = vadd.f32 %v3908, %v3995
      %v3997 = vpop.f32.mrf.mxu0
      %3998 = vmatprep.mubr.bf16.mxu0 0
      %3999 = vmatmul.mubr.bf16.gmra.mxu0 %v3872
      %v4000 = vpop.f32.mrf.mxu0
      %v4001 = vadd.f32 %v3908, %v4000
      %v4002 = vpop.f32.mrf.mxu0
      %v4003 = vpop.f32.mrf.mxu0
      %v4004 = vadd.f32 %v3908, %v4003
      %v4005 = vpop.f32.mrf.mxu0
      %4006 = vmatprep.mubr.bf16.mxu0 0
      %4007 = vmatmul.mubr.bf16.gmra.mxu0 %v3873
      %v4008 = vpop.f32.mrf.mxu0
      %v4009 = vadd.f32 %v3908, %v4008
      %v4010 = vpop.f32.mrf.mxu0
      %v4011 = vpop.f32.mrf.mxu0
      %v4012 = vadd.f32 %v3908, %v4011
      %v4013 = vpop.f32.mrf.mxu0
      %4014 = vmatprep.mubr.bf16.mxu0 0
      %4015 = vmatmul.mubr.bf16.gmra.mxu0 %v3874
      %v4016 = vpop.f32.mrf.mxu0
      %v4017 = vadd.f32 %v3908, %v4016
      %v4018 = vpop.f32.mrf.mxu0
      %v4019 = vpop.f32.mrf.mxu0
      %v4020 = vadd.f32 %v3908, %v4019
      %v4021 = vpop.f32.mrf.mxu0
      %4022 = vmatprep.mubr.bf16.mxu0 0
      %4023 = vmatmul.mubr.bf16.gmra.mxu0 %v3875
      %v4024 = vpop.f32.mrf.mxu0
      %v4025 = vadd.f32 %v3908, %v4024
      %v4026 = vpop.f32.mrf.mxu0
      %v4027 = vpop.f32.mrf.mxu0
      %v4028 = vadd.f32 %v3908, %v4027
      %v4029 = vpop.f32.mrf.mxu0
      %4030 = vmatprep.mubr.bf16.mxu0 0
      %4031 = vmatmul.mubr.bf16.gmra.mxu0 %v3876
      %v4032 = vpop.f32.mrf.mxu0
      %v4033 = vadd.f32 %v3908, %v4032
      %v4034 = vpop.f32.mrf.mxu0
      %v4035 = vpop.f32.mrf.mxu0
      %v4036 = vadd.f32 %v3908, %v4035
      %v4037 = vpop.f32.mrf.mxu0
      %4038 = vmatprep.mubr.bf16.mxu0 0
      %4039 = vmatmul.mubr.bf16.gmra.mxu0 %v3877
      %v4040 = vpop.f32.mrf.mxu0
      %v4041 = vadd.f32 %v3908, %v4040
      %v4042 = vpop.f32.mrf.mxu0
      %v4043 = vpop.f32.mrf.mxu0
      %v4044 = vadd.f32 %v3908, %v4043
      %v4045 = vpop.f32.mrf.mxu0
      %4046 = vmatprep.mubr.bf16.mxu0 0
      %4047 = vmatmul.mubr.bf16.gmra.mxu0 %v3878
      %v4048 = vpop.f32.mrf.mxu0
      %v4049 = vadd.f32 %v3908, %v4048
      %v4050 = vpop.f32.mrf.mxu0
      %v4051 = vpop.f32.mrf.mxu0
      %v4052 = vadd.f32 %v3908, %v4051
      %v4053 = vpop.f32.mrf.mxu0
      %4054 = vmatprep.mubr.bf16.mxu0 0
      %4055 = vmatmul.mubr.bf16.gmra.mxu0 %v3879
      %v4056 = vpop.f32.mrf.mxu0
      %v4057 = vadd.f32 %v3908, %v4056
      %v4058 = vpop.f32.mrf.mxu0
      %v4059 = vpop.f32.mrf.mxu0
      %v4060 = vadd.f32 %v3908, %v4059
      %v4061 = vpop.f32.mrf.mxu0
      %4062 = vmatprep.mubr.bf16.mxu0 0
      %4063 = vmatmul.mubr.bf16.gmra.mxu0 %v3880
      %v4064 = vpop.f32.mrf.mxu0
      %v4065 = vadd.f32 %v3908, %v4064
      %v4066 = vpop.f32.mrf.mxu0
      %v4067 = vpop.f32.mrf.mxu0
      %v4068 = vadd.f32 %v3908, %v4067
      %v4069 = vpop.f32.mrf.mxu0
      %4070 = vmatprep.mubr.bf16.mxu0 0
      %4071 = vmatmul.mubr.bf16.gmra.mxu0 %v3881
      %v4072 = vpop.f32.mrf.mxu0
      %v4073 = vadd.f32 %v3908, %v4072
      %v4074 = vpop.f32.mrf.mxu0
      %v4075 = vpop.f32.mrf.mxu0
      %v4076 = vadd.f32 %v3908, %v4075
      %v4077 = vpop.f32.mrf.mxu0
      %4078 = vmatprep.mubr.bf16.mxu0 0
      %4079 = vmatmul.mubr.bf16.gmra.mxu0 %v3882
      %v4080 = vpop.f32.mrf.mxu0
      %v4081 = vadd.f32 %v3908, %v4080
      %v4082 = vpop.f32.mrf.mxu0
      %v4083 = vpop.f32.mrf.mxu0
      %v4084 = vadd.f32 %v3908, %v4083
      %v4085 = vpop.f32.mrf.mxu0
      %4086 = vmatprep.mubr.bf16.mxu0 0
      %4087 = vmatmul.mubr.bf16.gmra.mxu0 %v3883
      %v4088 = vpop.f32.mrf.mxu0
      %v4089 = vadd.f32 %v3908, %v4088
      %v4090 = vpop.f32.mrf.mxu0
      %v4091 = vpop.f32.mrf.mxu0
      %v4092 = vadd.f32 %v3908, %v4091
      %v4093 = vpop.f32.mrf.mxu0
      %4094 = vmatprep.mubr.bf16.mxu0 0
      %4095 = vmatmul.mubr.bf16.gmra.mxu0 %v3884
      %v4096 = vpop.f32.mrf.mxu0
      %v4097 = vadd.f32 %v3908, %v4096
      %v4098 = vpop.f32.mrf.mxu0
      %v4099 = vpop.f32.mrf.mxu0
      %v4100 = vadd.f32 %v3908, %v4099
      %v4101 = vpop.f32.mrf.mxu0
      %4102 = vmatprep.mubr.bf16.mxu0 0
      %4103 = vmatmul.mubr.bf16.gmra.mxu0 %v3885
      %v4104 = vpop.f32.mrf.mxu0
      %v4105 = vadd.f32 %v3908, %v4104
      %v4106 = vpop.f32.mrf.mxu0
      %v4107 = vpop.f32.mrf.mxu0
      %v4108 = vadd.f32 %v3908, %v4107
      %v4109 = vpop.f32.mrf.mxu0
      %4110 = vmatprep.mubr.bf16.mxu0 0
      %4111 = vmatmul.mubr.bf16.gmra.mxu0 %v3886
      %v4112 = vpop.f32.mrf.mxu0
      %v4113 = vadd.f32 %v3908, %v4112
      %v4114 = vpop.f32.mrf.mxu0
      %v4115 = vpop.f32.mrf.mxu0
      %v4116 = vadd.f32 %v3908, %v4115
      %v4117 = vpop.f32.mrf.mxu0
      %4118 = vdwg.mxu0
      %4119 = vst [vmem:[%s248] sm:$0xff] %v3993
      %4120 = vst [vmem:[%s248 + $0x8] sm:$0xff] %v3996
      %4121 = vst [vmem:[%s248 + $0x10] sm:$0xff] %v4001
      %4122 = vst [vmem:[%s248 + $0x18] sm:$0xff] %v4004
      %4123 = vst [vmem:[%s248 + $0x20] sm:$0xff] %v4009
      %4124 = vst [vmem:[%s248 + $0x28] sm:$0xff] %v4012
      %4125 = vst [vmem:[%s248 + $0x30] sm:$0xff] %v4017
      %4126 = vst [vmem:[%s248 + $0x38] sm:$0xff] %v4020
      %4127 = vst [vmem:[%s248 + $0x40] sm:$0xff] %v4025
      %4128 = vst [vmem:[%s248 + $0x48] sm:$0xff] %v4028
      %4129 = vst [vmem:[%s248 + $0x50] sm:$0xff] %v4033
      %4130 = vst [vmem:[%s248 + $0x58] sm:$0xff] %v4036
      %4131 = vst [vmem:[%s248 + $0x60] sm:$0xff] %v4041
      %4132 = vst [vmem:[%s248 + $0x68] sm:$0xff] %v4044
      %4133 = vst [vmem:[%s248 + $0x70] sm:$0xff] %v4049
      %4134 = vst [vmem:[%s248 + $0x78] sm:$0xff] %v4052
      %4135 = vst [vmem:[%s248 + $0x80] sm:$0xff] %v4057
      %4136 = vst [vmem:[%s248 + $0x88] sm:$0xff] %v4060
      %4137 = vst [vmem:[%s248 + $0x90] sm:$0xff] %v4065
      %4138 = vst [vmem:[%s248 + $0x98] sm:$0xff] %v4068
      %4139 = vst [vmem:[%s248 + $0xa0] sm:$0xff] %v4073
      %4140 = vst [vmem:[%s248 + $0xa8] sm:$0xff] %v4076
      %4141 = vst [vmem:[%s248 + $0xb0] sm:$0xff] %v4081
      %4142 = vst [vmem:[%s248 + $0xb8] sm:$0xff] %v4084
      %4143 = vst [vmem:[%s248 + $0xc0] sm:$0xff] %v4089
      %4144 = vst [vmem:[%s248 + $0xc8] sm:$0xff] %v4092
      %4145 = vst [vmem:[%s248 + $0xd0] sm:$0xff] %v4097
      %4146 = vst [vmem:[%s248 + $0xd8] sm:$0xff] %v4100
      %4147 = vst [vmem:[%s248 + $0xe0] sm:$0xff] %v4105
      %4148 = vst [vmem:[%s248 + $0xe8] sm:$0xff] %v4108
      %4149 = vst [vmem:[%s248 + $0xf0] sm:$0xff] %v4113
      %4150 = vst [vmem:[%s248 + $0xf8] sm:$0xff] %v4116
      %s4151 = smul.u32 16, %s21
      %p4152 = scmp.lt.s32.totalorder %s20, 1
      %s4153 = scalar_select %p4152, %s20, 1
      %p4154 = scmp.lt.s32.totalorder %s4151, 15
      %s4155 = scalar_select %p4154, %s4151, 15
      %s4156 = smul.addr %s4155, 2
      %s4157 = smul.addr %s4153, 32
      %s4158 = sadd.s32 %s4156, %s4157
      %s4159 = smul.addr %s4158, 8
      %s4160 = scalar_lea.vmem %s5, %s4159
      // Predicated region
      $region41: #{scale_prediction_forward.1} parent=39 // pred_check
        %p4161 = pneg %p158
      $region42: #{scale_prediction_forward.1} parent=39 // pred_check_branch
        %4163 = sbr.rel (%p4161) target = $region44
      $region43: #{scale_prediction_forward.1} parent=39 // pred_region
        %s4164 = smul.u32 16, %s21
      $region44: #{scale_prediction_forward.1} parent=39 // pred_fallthru
        _
    $region40: #{scale_prediction_forward.1} parent=5 // pred_fallthru
      _
    %p4165 = scmp.le.s32.totalorder 2, %s11
    // Predicated region
    $region45: #{scale_prediction_forward.1} parent=5 // pred_check
      %p4166 = pneg %p4165
    $region46: #{scale_prediction_forward.1} parent=5 // pred_check_branch
      %4168 = sbr.rel (%p4166) target = $region48
    $region47: #{scale_prediction_forward.1} parent=5 // pred_region
      %s4169 = ssub.s32 %s11, 2
      // Predicated region
      $region49: #{scale_prediction_forward.1} parent=47 // pred_check
        %p4170 = pneg %p164
      $region50: #{scale_prediction_forward.1} parent=47 // pred_check_branch
        %4172 = sbr.rel (%p4170) target = $region52
      $region51: #{scale_prediction_forward.1} parent=47 // pred_region
        %s4173 = smul.u32 16, %s23
        %p4174 = scmp.lt.s32.totalorder %s22, 1
        %s4175 = scalar_select %p4174, %s22, 1
        %p4176 = scmp.lt.s32.totalorder %s4173, 15
        %s4177 = scalar_select %p4176, %s4173, 15
        %s4178 = smul.addr %s4177, 2
        %s4179 = smul.addr %s4175, 32
        %s4180 = sadd.s32 %s4178, %s4179
        %s4181 = smul.addr %s4180, 8
        %s4182 = scalar_lea.vmem %s5, %s4181
      $region52: #{scale_prediction_forward.1} parent=47 // pred_fallthru
        _
    $region48: #{scale_prediction_forward.1} parent=5 // pred_fallthru
      _
  $region6: #{scale_prediction_forward.1} parent=0 // loop_footer
    %s15 = sadd.s32 1, %s11
  $region7: #{scale_prediction_forward.1} parent=0 // loop_footer_branch
    %10 = sbr.rel target = $region3
  $region8: #{scale_prediction_forward.1} parent=0 // loop_exit
    _

</llo_original>
